<compile_context>
chip_gen: v5e
topology: v5e:2x2
jax: 0.10.0
libtpu: 0.0.40
codegen_flags: <defaults>
</compile_context>

<pallas_src>
import functools

import numpy as np
import jax
import jax.numpy as jnp
from jax import lax
from jax.experimental import pallas as pl
from jax.experimental.pallas import tpu as pltpu

# ---- STOI constants (10 kHz operating point) --------------------------------
EPS = 1e-8
SR = 10000
WIN_LEN = 256
NFFT = 512
HOP = 128                       # 50% overlap of the 256-sample analysis window
NBINS = 256                     # truncated one-sided bins (bin 256.. never in OBM)
N_BANDS = 15
N_BANDS_PAD = 16                # sublane-friendly band count (last band = zeros)
MIN_FREQ = 150.0
SEG = 30                        # intelligibility frames per segment
BETA = -15.0
CLIP = 1.0 + 10.0 ** (-BETA / 20.0)
N_SLABS = NFFT // HOP           # 4
SEG_CHUNK = 128                 # segment-axis (lane) chunk -> bounded vreg pressure


# ---- deterministic "parameters" (OBM matrix, windowed DFT matrix) ------------
def _thirdoct_full(fs, nfft, num_bands, min_freq):
    f = np.linspace(0, fs, nfft + 1)[: nfft // 2 + 1]
    k = np.arange(num_bands, dtype=np.float64)
    freq_low = min_freq * 2.0 ** ((2.0 * k - 1.0) / 6.0)
    freq_high = min_freq * 2.0 ** ((2.0 * k + 1.0) / 6.0)
    obm = np.zeros((num_bands, len(f)), dtype=np.float32)
    for i in range(num_bands):
        fl = int(np.argmin((f - freq_low[i]) ** 2))
        fh = int(np.argmin((f - freq_high[i]) ** 2))
        obm[i, fl:fh] = 1.0
    return obm                                    # (15, 257)


def _obm_padded():
    obm = _thirdoct_full(SR, NFFT, N_BANDS, MIN_FREQ)
    assert float(obm[:, NBINS:].sum()) == 0.0     # bins >= 256 never selected
    out = np.zeros((N_BANDS_PAD, NBINS), np.float32)
    out[:N_BANDS] = obm[:, :NBINS]
    return out                                    # (16, 256)


def _dft_mat():
    # matlab-style hanning(256), centered inside the NFFT-long frame
    # (torch.stft behaviour when win_length < n_fft).
    w = np.hanning(WIN_LEN + 2)[1:-1]
    pad = (NFFT - WIN_LEN) // 2
    wpad = np.zeros(NFFT, dtype=np.float64)
    wpad[pad:pad + WIN_LEN] = w
    n = np.arange(NFFT)[:, None]
    kk = np.arange(NBINS)[None, :]
    ang = 2.0 * np.pi * n * kk / NFFT
    dr = wpad[:, None] * np.cos(ang)              # (512, 256)
    di = -wpad[:, None] * np.sin(ang)             # (512, 256)
    return np.concatenate([dr, di], axis=1).astype(np.float32)   # (512, 512)


# ---- segment correlation (in-kernel helper, fully static) ---------------------
def _segment_corr_sum(x_t, y_t, n_seg):
    """Sum of clipped, normalized correlations over all bands and segments.

    x_t / y_t : (16, T_pad) third-octave magnitudes (clean / estimate), frames
    on lanes.  Only lanes [0, n_seg + SEG - 1) are ever read, so frame padding
    past the true T is never touched.  The segment (lane) axis is processed in
    SEG_CHUNK-wide chunks so the two unrolled SEG=30 loops keep a bounded
    number of (16, chunk) accumulators live (well under the 64-vreg file).
    """
    total = jnp.float32(0.0)
    for c0 in range(0, n_seg, SEG_CHUNK):
        cw = min(SEG_CHUNK, n_seg - c0)
        shp = (N_BANDS_PAD, cw)

        # ---- pass 1: segment energies (scale alpha) and clean-segment mean --
        sum_x = jnp.zeros(shp, jnp.float32)
        sum_x2 = jnp.zeros(shp, jnp.float32)
        sum_y2 = jnp.zeros(shp, jnp.float32)
        for off in range(SEG):
            xs = lax.slice(x_t, (0, c0 + off), (N_BANDS_PAD, c0 + off + cw))
            ys = lax.slice(y_t, (0, c0 + off), (N_BANDS_PAD, c0 + off + cw))
            sum_x = sum_x + xs
            sum_x2 = sum_x2 + xs * xs
            sum_y2 = sum_y2 + ys * ys
        # reference form nx / (ny + EPS); note sum_y2 >= SEG*EPS > 0 anyway
        # because the TOB values are sqrt(energy + EPS).
        alpha = jnp.sqrt(sum_x2) / (jnp.sqrt(sum_y2) + EPS)
        mean_x = sum_x * (1.0 / SEG)

        # ---- pass 2: clipped, scale-matched estimate; clean side centered ----
        # sxx / sxy use exactly-centered clean values (no raw-moment
        # cancellation); only syy keeps the clamped raw-moment form.
        sxx = jnp.zeros(shp, jnp.float32)
        sxy = jnp.zeros(shp, jnp.float32)
        sum_yp = jnp.zeros(shp, jnp.float32)
        sum_yp2 = jnp.zeros(shp, jnp.float32)
        for off in range(SEG):
            xs = lax.slice(x_t, (0, c0 + off), (N_BANDS_PAD, c0 + off + cw))
            ys = lax.slice(y_t, (0, c0 + off), (N_BANDS_PAD, c0 + off + cw))
            xc = xs - mean_x
            yp = jnp.minimum(ys * alpha, xs * CLIP)     # clip at -beta dB
            sxx = sxx + xc * xc
            sxy = sxy + xc * yp       # == sum(xc*(yp-mean_yp)) since sum(xc) ~ 0
            sum_yp = sum_yp + yp
            sum_yp2 = sum_yp2 + yp * yp
        mean_yp = sum_yp * (1.0 / SEG)
        syy = jnp.maximum(sum_yp2 - SEG * mean_yp * mean_yp, 0.0)

        corr = sxy / ((jnp.sqrt(sxx) + EPS) * (jnp.sqrt(syy) + EPS))
        # the zero-padded 16th band yields a 0/0-style correlation -> mask it
        band_mask = lax.broadcasted_iota(jnp.int32, shp, 0) < N_BANDS
        corr = jnp.where(band_mask, corr, 0.0)
        total = total + jnp.sum(corr)
    return total


# ---- Pallas kernel ------------------------------------------------------------
def _stoi_kernel(x_ref, s_ref, d_ref, obm_ref, out_ref, *, bb, t_pad, n_seg):
    # x_ref / s_ref : (bb, R_pad, 128) f32   estimate / clean, 128 samples per row
    # d_ref         : (512, 512) bf16        window-folded DFT, cols = [real | imag]
    # obm_ref       : (16, 256) f32          padded one-third-octave band matrix
    # out_ref       : (bb, 8, 128) f32       per-item (-STOI), lane-dense broadcast
    d = d_ref[...]
    obm = obm_ref[...]

    # ---- fused windowed DFT --------------------------------------------------
    # Build one (2*bb*t_pad, 512) frame slab in VMEM via lane-concats of
    # sublane-shifted signal rows (NFFT = 4*HOP, HOP = lane width), then run a
    # single bf16 K=512 matmul against the DFT constant: fills the MXU
    # contraction depth on v6e/v7x, loads the weights once, accumulates in f32.
    slabs = []
    for item in range(bb):
        for sig_ref in (s_ref, x_ref):            # clean first, estimate second
            rows = sig_ref[item]                  # (R_pad, 128) f32
            slabs.append(jnp.concatenate(
                [lax.slice(rows, (j, 0), (j + t_pad, HOP)) for j in range(N_SLABS)],
                axis=1))                           # (t_pad, 512)
    frames = jnp.concatenate(slabs, axis=0).astype(jnp.bfloat16)    # (M, 512)
    spec = jnp.dot(frames, d, preferred_element_type=jnp.float32)   # (M, 512) f32

    re = spec[:, :NBINS]
    im = spec[:, NBINS:]
    power = re * re + im * im                                        # (M, 256) f32

    # One-third-octave band magnitudes, bands on sublanes / frames on lanes.
    # Contract-last einsum -> (16, M) directly (proven lowering).  If profiling
    # ever shows a vxpose of the 16x-larger `power`, switch to a pre-transposed
    # (256,16) OBM constant and transpose only the small (M,16) result.
    bands = jnp.einsum("bf,mf->bm", obm, power,
                       preferred_element_type=jnp.float32)           # (16, M)
    tob = jnp.sqrt(bands + EPS)                                      # (16, M)

    # ---- per-item, per-signal STOI correlation -------------------------------
    inv_d = 1.0 / (N_BANDS * n_seg)
    for item in range(bb):
        base = 2 * item * t_pad
        x_t = lax.slice(tob, (0, base), (N_BANDS_PAD, base + t_pad))             # clean
        y_t = lax.slice(tob, (0, base + t_pad), (N_BANDS_PAD, base + 2 * t_pad))  # est.
        corr_sum = _segment_corr_sum(x_t, y_t, n_seg)
        out_ref[item] = jnp.full((8, HOP), -(corr_sum * inv_d), dtype=out_ref.dtype)


# ---- wrapper ------------------------------------------------------------------
def _pick_batch_block(batch, t_pad):
    """Largest divisor of `batch` that (a) keeps >= 2 grid steps when batch >= 2
    (one per v7x TensorCore) and (b) keeps the in-kernel frame slab modest."""
    slab_bytes_per_item = 2 * t_pad * (2 * NBINS) * 4      # f32 frame slab
    max_items = max(1, (8 * 1024 * 1024) // slab_bytes_per_item)
    bb = 1
    for cand in range(1, min(batch, 8, max_items) + 1):
        if batch % cand == 0 and (batch // cand >= 2 or batch == 1):
            bb = cand
    return bb


def stoi_loss(x, s):
    """x: estimate (B, L), s: clean target (B, L). Returns scalar mean(-STOI)."""
    x = x.astype(jnp.float32)
    s = s.astype(jnp.float32)
    B, L = x.shape
    assert L >= NFFT, "signal shorter than one analysis frame"
    R = L // HOP                          # 128-sample rows
    T = R - (N_SLABS - 1)                 # == 1 + (L - NFFT)//HOP STFT frames
    assert T >= SEG, "signal too short for a 30-frame STOI segment"
    n_seg = T - SEG + 1

    # Pad the frame count to a multiple of 8 (sublane grain); padded frames are
    # built from zero rows and are never read by the segment stage (the largest
    # frame index used is T - 1).
    T_pad = ((T + 7) // 8) * 8
    R_pad = T_pad + (N_SLABS - 1)

    # pure reshape into 128-sample rows — no gather, no 4x frame duplication
    xr = x[:, :R * HOP].reshape(B, R, HOP)
    sr = s[:, :R * HOP].reshape(B, R, HOP)
    if R_pad > R:
        pad = ((0, 0), (0, R_pad - R), (0, 0))
        xr = jnp.pad(xr, pad)
        sr = jnp.pad(sr, pad)

    d = jnp.asarray(_dft_mat(), dtype=jnp.bfloat16)     # (512, 512) bf16 MXU weights
    obm = jnp.asarray(_obm_padded())                    # (16, 256) f32

    Bb = _pick_batch_block(B, T_pad)
    assert B % Bb == 0
    grid = (B // Bb,)
    kernel = functools.partial(_stoi_kernel, bb=Bb, t_pad=T_pad, n_seg=n_seg)

    m_rows = B * 2 * T_pad
    cost = pl.CostEstimate(
        flops=int(2 * m_rows * NFFT * (2 * NBINS)            # windowed DFT matmul
                  + 2 * m_rows * NBINS * N_BANDS_PAD         # OBM projection
                  + B * 2 * SEG * N_BANDS_PAD * n_seg * 8),  # segment statistics
        transcendentals=int(m_rows * N_BANDS_PAD + B * N_BANDS_PAD * n_seg * 5),
        bytes_accessed=int(2 * B * R_pad * HOP * 4 + d.size * 2 + obm.size * 4
                           + B * 8 * HOP * 4))

    # actual VMEM footprint (double-buffered inputs/constants + live work
    # arrays) with ~2x headroom — stays far below v7x's 64 MiB.
    slab_elems = 2 * Bb * T_pad * (2 * NBINS)
    vmem_bytes = int(2 * 2 * Bb * R_pad * HOP * 4           # signal blocks (x2 buffers)
                     + 2 * (d.size * 2 + obm.size * 4)      # constants (x2 buffers)
                     + slab_elems * (4 + 2 + 4 + 4)         # slab f32+bf16, spec, power/bands
                     + 2 * Bb * 8 * HOP * 4 + (1 << 20))
    vmem_limit = int(min(56 * 1024 * 1024, max(8 * 1024 * 1024, 2 * vmem_bytes)))

    out = pl.pallas_call(
        kernel,
        out_shape=jax.ShapeDtypeStruct((B, 8, HOP), jnp.float32),
        grid=grid,
        in_specs=[
            pl.BlockSpec((Bb, R_pad, HOP), lambda g: (g, 0, 0)),
            pl.BlockSpec((Bb, R_pad, HOP), lambda g: (g, 0, 0)),
            pl.BlockSpec((NFFT, 2 * NBINS), lambda g: (0, 0)),
            pl.BlockSpec((N_BANDS_PAD, NBINS), lambda g: (0, 0)),
        ],
        out_specs=pl.BlockSpec((Bb, 8, HOP), lambda g: (g, 0, 0)),
        compiler_params=pltpu.CompilerParams(
            dimension_semantics=("parallel",),
            vmem_limit_bytes=vmem_limit),
        cost_estimate=cost,
    )(xr, sr, d, obm)

    per_item = out[:, 0, 0]              # per-batch negative STOI
    return jnp.mean(per_item)            # STOILoss: .mean()


# ---- pure-JAX reference (original formulation, for a sanity check only) --------
def _stoi_loss_ref(x, s):
    x = x.astype(jnp.float32)
    s = s.astype(jnp.float32)
    B, L = x.shape
    T = 1 + (L - NFFT) // HOP
    idx = np.arange(T)[:, None] * HOP + np.arange(NFFT)[None, :]

    nb_full = NFFT // 2 + 1
    w = np.hanning(WIN_LEN + 2)[1:-1]
    pad = (NFFT - WIN_LEN) // 2
    wpad = np.zeros(NFFT, dtype=np.float64)
    wpad[pad:pad + WIN_LEN] = w
    n = np.arange(NFFT)[:, None]
    kk = np.arange(nb_full)[None, :]
    ang = 2.0 * np.pi * n * kk / NFFT
    dr = jnp.asarray((wpad[:, None] * np.cos(ang)).astype(np.float32))
    di = jnp.asarray((-wpad[:, None] * np.sin(ang)).astype(np.float32))
    obm_t = jnp.asarray(_thirdoct_full(SR, NFFT, N_BANDS, MIN_FREQ).T)  # (257,15)

    def tob(fr):
        re = fr @ dr
        im = fr @ di
        return jnp.sqrt((re * re + im * im) @ obm_t + EPS)

    xt = tob(s[:, idx])   # clean
    yt = tob(x[:, idx])   # estimate
    n_seg = T - SEG + 1
    vals = []
    for m in range(n_seg):
        xs = xt[:, m:m + SEG]
        ys = yt[:, m:m + SEG]
        nx = jnp.sqrt(jnp.sum(xs * xs, axis=1, keepdims=True))
        ny = jnp.sqrt(jnp.sum(ys * ys, axis=1, keepdims=True))
        yp = jnp.minimum(ys * (nx / (ny + EPS)), xs * CLIP)
        xc = xs - xs.mean(1, keepdims=True)
        yc = yp - yp.mean(1, keepdims=True)
        xc = xc / (jnp.sqrt(jnp.sum(xc * xc, axis=1, keepdims=True)) + EPS)
        yc = yc / (jnp.sqrt(jnp.sum(yc * yc, axis=1, keepdims=True)) + EPS)
        vals.append(jnp.sum(xc * yc, axis=(1, 2)))
    d = jnp.stack(vals, -1).sum(-1) / (N_BANDS * n_seg)
    return jnp.mean(-d)


if __name__ == "__main__":
    B, L = 2, 4480                     # -> 32 STFT frames, 3 STOI segments
    key = jax.random.PRNGKey(0)
    k1, k2 = jax.random.split(key)
    s = jax.random.normal(k1, (B, L), dtype=jnp.float32)             # clean target
    x = s + 0.3 * jax.random.normal(k2, (B, L), dtype=jnp.float32)   # estimate

    loss = jax.block_until_ready(stoi_loss(x, s))
    ref = jax.block_until_ready(_stoi_loss_ref(x, s))
    assert np.isfinite(float(loss))
    assert abs(float(loss) - float(ref)) < 5e-3, (float(loss), float(ref))
    print("KERNEL_OK")
</pallas_src>

<mosaic_0001>
module attributes {stable_mosaic.version = 11 : i64} {
  func.func @_stoi_kernel(%arg0: i32, %arg1: memref<1x35x128xf32, #tpu.memory_space<vmem>>, %arg2: memref<1x35x128xf32, #tpu.memory_space<vmem>>, %arg3: memref<512x512xbf16, #tpu.memory_space<vmem>>, %arg4: memref<16x256xf32, #tpu.memory_space<vmem>>, %arg5: memref<1x8x128xf32, #tpu.memory_space<vmem>>) attributes {dimension_semantics = [#tpu.dimension_semantics<parallel>], iteration_bounds = array<i64: 2>, scalar_prefetch = 0 : i64, scratch_operands = 0 : i64, tpu.core_type = #tpu.core_type<tc>, window_params = [{transform_indices = @transform_0, window_bounds = array<i64: 1, 35, 128>}, {transform_indices = @transform_1, window_bounds = array<i64: 1, 35, 128>}, {pipeline_mode = #tpu.pipeline_mode<synchronous>, transform_indices = @transform_2, window_bounds = array<i64: 512, 512>}, {pipeline_mode = #tpu.pipeline_mode<synchronous>, transform_indices = @transform_3, window_bounds = array<i64: 16, 256>}, {transform_indices = @transform_4, window_bounds = array<i64: 1, 8, 128>}]} {
    %c0 = arith.constant 0 : index
    %c0_0 = arith.constant 0 : index
    %0 = vector.load %arg3[%c0, %c0_0] : memref<512x512xbf16, #tpu.memory_space<vmem>>, vector<512x512xbf16>
    %c0_1 = arith.constant 0 : index
    %c0_2 = arith.constant 0 : index
    %1 = vector.load %arg4[%c0_1, %c0_2] : memref<16x256xf32, #tpu.memory_space<vmem>>, vector<16x256xf32>
    %c0_3 = arith.constant 0 : index
    %c0_4 = arith.constant 0 : index
    %c0_5 = arith.constant 0 : index
    %2 = vector.load %arg2[%c0_3, %c0_4, %c0_5] : memref<1x35x128xf32, #tpu.memory_space<vmem>>, vector<1x35x128xf32>
    %3 = vector.shape_cast %2 : vector<1x35x128xf32> to vector<35x128xf32>
    %4 = vector.extract_strided_slice %3 {offsets = [0, 0], sizes = [32, 128], strides = [1, 1]} : vector<35x128xf32> to vector<32x128xf32>
    %5 = vector.extract_strided_slice %3 {offsets = [1, 0], sizes = [32, 128], strides = [1, 1]} : vector<35x128xf32> to vector<32x128xf32>
    %6 = vector.extract_strided_slice %3 {offsets = [2, 0], sizes = [32, 128], strides = [1, 1]} : vector<35x128xf32> to vector<32x128xf32>
    %7 = vector.extract_strided_slice %3 {offsets = [3, 0], sizes = [32, 128], strides = [1, 1]} : vector<35x128xf32> to vector<32x128xf32>
    %8 = tpu.concatenate %4, %5, %6, %7 in 1 : vector<32x128xf32>, vector<32x128xf32>, vector<32x128xf32>, vector<32x128xf32> -> vector<32x512xf32>
    %c0_6 = arith.constant 0 : index
    %c0_7 = arith.constant 0 : index
    %c0_8 = arith.constant 0 : index
    %9 = vector.load %arg1[%c0_6, %c0_7, %c0_8] : memref<1x35x128xf32, #tpu.memory_space<vmem>>, vector<1x35x128xf32>
    %10 = vector.shape_cast %9 : vector<1x35x128xf32> to vector<35x128xf32>
    %11 = vector.extract_strided_slice %10 {offsets = [0, 0], sizes = [32, 128], strides = [1, 1]} : vector<35x128xf32> to vector<32x128xf32>
    %12 = vector.extract_strided_slice %10 {offsets = [1, 0], sizes = [32, 128], strides = [1, 1]} : vector<35x128xf32> to vector<32x128xf32>
    %13 = vector.extract_strided_slice %10 {offsets = [2, 0], sizes = [32, 128], strides = [1, 1]} : vector<35x128xf32> to vector<32x128xf32>
    %14 = vector.extract_strided_slice %10 {offsets = [3, 0], sizes = [32, 128], strides = [1, 1]} : vector<35x128xf32> to vector<32x128xf32>
    %15 = tpu.concatenate %11, %12, %13, %14 in 1 : vector<32x128xf32>, vector<32x128xf32>, vector<32x128xf32>, vector<32x128xf32> -> vector<32x512xf32>
    %16 = tpu.concatenate %8, %15 in 0 : vector<32x512xf32>, vector<32x512xf32> -> vector<64x512xf32>
    %17 = arith.truncf %16 : vector<64x512xf32> to vector<64x512xbf16>
    %cst = arith.constant dense<0.000000e+00> : vector<64x512xf32>
    %18 = tpu.matmul %17, %0, %cst {dimension_numbers = #tpu.dot_dimension_numbers<[1], [0], [0], [1], [0, 0, 1, 1], [], []>} : vector<64x512xbf16>, vector<512x512xbf16>, vector<64x512xf32> -> vector<64x512xf32>
    %19 = vector.extract_strided_slice %18 {offsets = [0, 0], sizes = [64, 256], strides = [1, 1]} : vector<64x512xf32> to vector<64x256xf32>
    %20 = vector.extract_strided_slice %18 {offsets = [0, 256], sizes = [64, 256], strides = [1, 1]} : vector<64x512xf32> to vector<64x256xf32>
    %21 = arith.mulf %19, %19 : vector<64x256xf32>
    %22 = arith.mulf %20, %20 : vector<64x256xf32>
    %23 = arith.addf %21, %22 : vector<64x256xf32>
    "tpu.trace_start"() <{level = 10 : i32, message = "bf,mf->bm"}> : () -> ()
    %cst_9 = arith.constant dense<0.000000e+00> : vector<16x64xf32>
    %24 = tpu.matmul %1, %23, %cst_9 {dimension_numbers = #tpu.dot_dimension_numbers<[1], [1], [0], [0], [0, 0, 1, 0], [], []>} : vector<16x256xf32>, vector<64x256xf32>, vector<16x64xf32> -> vector<16x64xf32>
    "tpu.trace_stop"() : () -> ()
    %cst_10 = arith.constant 9.99999993E-9 : f32
    %25 = vector.broadcast %cst_10 : f32 to vector<16x64xf32>
    %26 = arith.addf %24, %25 : vector<16x64xf32>
    %27 = math.sqrt %26 : vector<16x64xf32>
    %28 = vector.extract_strided_slice %27 {offsets = [0, 0], sizes = [16, 32], strides = [1, 1]} : vector<16x64xf32> to vector<16x32xf32>
    %29 = vector.extract_strided_slice %27 {offsets = [0, 32], sizes = [16, 32], strides = [1, 1]} : vector<16x64xf32> to vector<16x32xf32>
    %cst_11 = arith.constant 0.000000e+00 : f32
    %30 = vector.broadcast %cst_11 : f32 to vector<16x3xf32>
    %cst_12 = arith.constant 0.000000e+00 : f32
    %31 = vector.broadcast %cst_12 : f32 to vector<16x3xf32>
    %cst_13 = arith.constant 0.000000e+00 : f32
    %32 = vector.broadcast %cst_13 : f32 to vector<16x3xf32>
    %33 = vector.extract_strided_slice %28 {offsets = [0, 0], sizes = [16, 3], strides = [1, 1]} : vector<16x32xf32> to vector<16x3xf32>
    %34 = vector.extract_strided_slice %29 {offsets = [0, 0], sizes = [16, 3], strides = [1, 1]} : vector<16x32xf32> to vector<16x3xf32>
    %35 = arith.addf %30, %33 : vector<16x3xf32>
    %36 = arith.mulf %33, %33 : vector<16x3xf32>
    %37 = arith.addf %31, %36 : vector<16x3xf32>
    %38 = arith.mulf %34, %34 : vector<16x3xf32>
    %39 = arith.addf %32, %38 : vector<16x3xf32>
    %40 = vector.extract_strided_slice %28 {offsets = [0, 1], sizes = [16, 3], strides = [1, 1]} : vector<16x32xf32> to vector<16x3xf32>
    %41 = vector.extract_strided_slice %29 {offsets = [0, 1], sizes = [16, 3], strides = [1, 1]} : vector<16x32xf32> to vector<16x3xf32>
    %42 = arith.addf %35, %40 : vector<16x3xf32>
    %43 = arith.mulf %40, %40 : vector<16x3xf32>
    %44 = arith.addf %37, %43 : vector<16x3xf32>
    %45 = arith.mulf %41, %41 : vector<16x3xf32>
    %46 = arith.addf %39, %45 : vector<16x3xf32>
    %47 = vector.extract_strided_slice %28 {offsets = [0, 2], sizes = [16, 3], strides = [1, 1]} : vector<16x32xf32> to vector<16x3xf32>
    %48 = vector.extract_strided_slice %29 {offsets = [0, 2], sizes = [16, 3], strides = [1, 1]} : vector<16x32xf32> to vector<16x3xf32>
    %49 = arith.addf %42, %47 : vector<16x3xf32>
    %50 = arith.mulf %47, %47 : vector<16x3xf32>
    %51 = arith.addf %44, %50 : vector<16x3xf32>
    %52 = arith.mulf %48, %48 : vector<16x3xf32>
    %53 = arith.addf %46, %52 : vector<16x3xf32>
    %54 = vector.extract_strided_slice %28 {offsets = [0, 3], sizes = [16, 3], strides = [1, 1]} : vector<16x32xf32> to vector<16x3xf32>
    %55 = vector.extract_strided_slice %29 {offsets = [0, 3], sizes = [16, 3], strides = [1, 1]} : vector<16x32xf32> to vector<16x3xf32>
    %56 = arith.addf %49, %54 : vector<16x3xf32>
    %57 = arith.mulf %54, %54 : vector<16x3xf32>
    %58 = arith.addf %51, %57 : vector<16x3xf32>
    %59 = arith.mulf %55, %55 : vector<16x3xf32>
    %60 = arith.addf %53, %59 : vector<16x3xf32>
    %61 = vector.extract_strided_slice %28 {offsets = [0, 4], sizes = [16, 3], strides = [1, 1]} : vector<16x32xf32> to vector<16x3xf32>
    %62 = vector.extract_strided_slice %29 {offsets = [0, 4], sizes = [16, 3], strides = [1, 1]} : vector<16x32xf32> to vector<16x3xf32>
    %63 = arith.addf %56, %61 : vector<16x3xf32>
    %64 = arith.mulf %61, %61 : vector<16x3xf32>
    %65 = arith.addf %58, %64 : vector<16x3xf32>
    %66 = arith.mulf %62, %62 : vector<16x3xf32>
    %67 = arith.addf %60, %66 : vector<16x3xf32>
    %68 = vector.extract_strided_slice %28 {offsets = [0, 5], sizes = [16, 3], strides = [1, 1]} : vector<16x32xf32> to vector<16x3xf32>
    %69 = vector.extract_strided_slice %29 {offsets = [0, 5], sizes = [16, 3], strides = [1, 1]} : vector<16x32xf32> to vector<16x3xf32>
    %70 = arith.addf %63, %68 : vector<16x3xf32>
    %71 = arith.mulf %68, %68 : vector<16x3xf32>
    %72 = arith.addf %65, %71 : vector<16x3xf32>
    %73 = arith.mulf %69, %69 : vector<16x3xf32>
    %74 = arith.addf %67, %73 : vector<16x3xf32>
    %75 = vector.extract_strided_slice %28 {offsets = [0, 6], sizes = [16, 3], strides = [1, 1]} : vector<16x32xf32> to vector<16x3xf32>
    %76 = vector.extract_strided_slice %29 {offsets = [0, 6], sizes = [16, 3], strides = [1, 1]} : vector<16x32xf32> to vector<16x3xf32>
    %77 = arith.addf %70, %75 : vector<16x3xf32>
    %78 = arith.mulf %75, %75 : vector<16x3xf32>
    %79 = arith.addf %72, %78 : vector<16x3xf32>
    %80 = arith.mulf %76, %76 : vector<16x3xf32>
    %81 = arith.addf %74, %80 : vector<16x3xf32>
    %82 = vector.extract_strided_slice %28 {offsets = [0, 7], sizes = [16, 3], strides = [1, 1]} : vector<16x32xf32> to vector<16x3xf32>
    %83 = vector.extract_strided_slice %29 {offsets = [0, 7], sizes = [16, 3], strides = [1, 1]} : vector<16x32xf32> to vector<16x3xf32>
    %84 = arith.addf %77, %82 : vector<16x3xf32>
    %85 = arith.mulf %82, %82 : vector<16x3xf32>
    %86 = arith.addf %79, %85 : vector<16x3xf32>
    %87 = arith.mulf %83, %83 : vector<16x3xf32>
    %88 = arith.addf %81, %87 : vector<16x3xf32>
    %89 = vector.extract_strided_slice %28 {offsets = [0, 8], sizes = [16, 3], strides = [1, 1]} : vector<16x32xf32> to vector<16x3xf32>
    %90 = vector.extract_strided_slice %29 {offsets = [0, 8], sizes = [16, 3], strides = [1, 1]} : vector<16x32xf32> to vector<16x3xf32>
    %91 = arith.addf %84, %89 : vector<16x3xf32>
    %92 = arith.mulf %89, %89 : vector<16x3xf32>
    %93 = arith.addf %86, %92 : vector<16x3xf32>
    %94 = arith.mulf %90, %90 : vector<16x3xf32>
    %95 = arith.addf %88, %94 : vector<16x3xf32>
    %96 = vector.extract_strided_slice %28 {offsets = [0, 9], sizes = [16, 3], strides = [1, 1]} : vector<16x32xf32> to vector<16x3xf32>
    %97 = vector.extract_strided_slice %29 {offsets = [0, 9], sizes = [16, 3], strides = [1, 1]} : vector<16x32xf32> to vector<16x3xf32>
    %98 = arith.addf %91, %96 : vector<16x3xf32>
    %99 = arith.mulf %96, %96 : vector<16x3xf32>
    %100 = arith.addf %93, %99 : vector<16x3xf32>
    %101 = arith.mulf %97, %97 : vector<16x3xf32>
    %102 = arith.addf %95, %101 : vector<16x3xf32>
    %103 = vector.extract_strided_slice %28 {offsets = [0, 10], sizes = [16, 3], strides = [1, 1]} : vector<16x32xf32> to vector<16x3xf32>
    %104 = vector.extract_strided_slice %29 {offsets = [0, 10], sizes = [16, 3], strides = [1, 1]} : vector<16x32xf32> to vector<16x3xf32>
    %105 = arith.addf %98, %103 : vector<16x3xf32>
    %106 = arith.mulf %103, %103 : vector<16x3xf32>
    %107 = arith.addf %100, %106 : vector<16x3xf32>
    %108 = arith.mulf %104, %104 : vector<16x3xf32>
    %109 = arith.addf %102, %108 : vector<16x3xf32>
    %110 = vector.extract_strided_slice %28 {offsets = [0, 11], sizes = [16, 3], strides = [1, 1]} : vector<16x32xf32> to vector<16x3xf32>
    %111 = vector.extract_strided_slice %29 {offsets = [0, 11], sizes = [16, 3], strides = [1, 1]} : vector<16x32xf32> to vector<16x3xf32>
    %112 = arith.addf %105, %110 : vector<16x3xf32>
    %113 = arith.mulf %110, %110 : vector<16x3xf32>
    %114 = arith.addf %107, %113 : vector<16x3xf32>
    %115 = arith.mulf %111, %111 : vector<16x3xf32>
    %116 = arith.addf %109, %115 : vector<16x3xf32>
    %117 = vector.extract_strided_slice %28 {offsets = [0, 12], sizes = [16, 3], strides = [1, 1]} : vector<16x32xf32> to vector<16x3xf32>
    %118 = vector.extract_strided_slice %29 {offsets = [0, 12], sizes = [16, 3], strides = [1, 1]} : vector<16x32xf32> to vector<16x3xf32>
    %119 = arith.addf %112, %117 : vector<16x3xf32>
    %120 = arith.mulf %117, %117 : vector<16x3xf32>
    %121 = arith.addf %114, %120 : vector<16x3xf32>
    %122 = arith.mulf %118, %118 : vector<16x3xf32>
    %123 = arith.addf %116, %122 : vector<16x3xf32>
    %124 = vector.extract_strided_slice %28 {offsets = [0, 13], sizes = [16, 3], strides = [1, 1]} : vector<16x32xf32> to vector<16x3xf32>
    %125 = vector.extract_strided_slice %29 {offsets = [0, 13], sizes = [16, 3], strides = [1, 1]} : vector<16x32xf32> to vector<16x3xf32>
    %126 = arith.addf %119, %124 : vector<16x3xf32>
    %127 = arith.mulf %124, %124 : vector<16x3xf32>
    %128 = arith.addf %121, %127 : vector<16x3xf32>
    %129 = arith.mulf %125, %125 : vector<16x3xf32>
    %130 = arith.addf %123, %129 : vector<16x3xf32>
    %131 = vector.extract_strided_slice %28 {offsets = [0, 14], sizes = [16, 3], strides = [1, 1]} : vector<16x32xf32> to vector<16x3xf32>
    %132 = vector.extract_strided_slice %29 {offsets = [0, 14], sizes = [16, 3], strides = [1, 1]} : vector<16x32xf32> to vector<16x3xf32>
    %133 = arith.addf %126, %131 : vector<16x3xf32>
    %134 = arith.mulf %131, %131 : vector<16x3xf32>
    %135 = arith.addf %128, %134 : vector<16x3xf32>
    %136 = arith.mulf %132, %132 : vector<16x3xf32>
    %137 = arith.addf %130, %136 : vector<16x3xf32>
    %138 = vector.extract_strided_slice %28 {offsets = [0, 15], sizes = [16, 3], strides = [1, 1]} : vector<16x32xf32> to vector<16x3xf32>
    %139 = vector.extract_strided_slice %29 {offsets = [0, 15], sizes = [16, 3], strides = [1, 1]} : vector<16x32xf32> to vector<16x3xf32>
    %140 = arith.addf %133, %138 : vector<16x3xf32>
    %141 = arith.mulf %138, %138 : vector<16x3xf32>
    %142 = arith.addf %135, %141 : vector<16x3xf32>
    %143 = arith.mulf %139, %139 : vector<16x3xf32>
    %144 = arith.addf %137, %143 : vector<16x3xf32>
    %145 = vector.extract_strided_slice %28 {offsets = [0, 16], sizes = [16, 3], strides = [1, 1]} : vector<16x32xf32> to vector<16x3xf32>
    %146 = vector.extract_strided_slice %29 {offsets = [0, 16], sizes = [16, 3], strides = [1, 1]} : vector<16x32xf32> to vector<16x3xf32>
    %147 = arith.addf %140, %145 : vector<16x3xf32>
    %148 = arith.mulf %145, %145 : vector<16x3xf32>
    %149 = arith.addf %142, %148 : vector<16x3xf32>
    %150 = arith.mulf %146, %146 : vector<16x3xf32>
    %151 = arith.addf %144, %150 : vector<16x3xf32>
    %152 = vector.extract_strided_slice %28 {offsets = [0, 17], sizes = [16, 3], strides = [1, 1]} : vector<16x32xf32> to vector<16x3xf32>
    %153 = vector.extract_strided_slice %29 {offsets = [0, 17], sizes = [16, 3], strides = [1, 1]} : vector<16x32xf32> to vector<16x3xf32>
    %154 = arith.addf %147, %152 : vector<16x3xf32>
    %155 = arith.mulf %152, %152 : vector<16x3xf32>
    %156 = arith.addf %149, %155 : vector<16x3xf32>
    %157 = arith.mulf %153, %153 : vector<16x3xf32>
    %158 = arith.addf %151, %157 : vector<16x3xf32>
    %159 = vector.extract_strided_slice %28 {offsets = [0, 18], sizes = [16, 3], strides = [1, 1]} : vector<16x32xf32> to vector<16x3xf32>
    %160 = vector.extract_strided_slice %29 {offsets = [0, 18], sizes = [16, 3], strides = [1, 1]} : vector<16x32xf32> to vector<16x3xf32>
    %161 = arith.addf %154, %159 : vector<16x3xf32>
    %162 = arith.mulf %159, %159 : vector<16x3xf32>
    %163 = arith.addf %156, %162 : vector<16x3xf32>
    %164 = arith.mulf %160, %160 : vector<16x3xf32>
    %165 = arith.addf %158, %164 : vector<16x3xf32>
    %166 = vector.extract_strided_slice %28 {offsets = [0, 19], sizes = [16, 3], strides = [1, 1]} : vector<16x32xf32> to vector<16x3xf32>
    %167 = vector.extract_strided_slice %29 {offsets = [0, 19], sizes = [16, 3], strides = [1, 1]} : vector<16x32xf32> to vector<16x3xf32>
    %168 = arith.addf %161, %166 : vector<16x3xf32>
    %169 = arith.mulf %166, %166 : vector<16x3xf32>
    %170 = arith.addf %163, %169 : vector<16x3xf32>
    %171 = arith.mulf %167, %167 : vector<16x3xf32>
    %172 = arith.addf %165, %171 : vector<16x3xf32>
    %173 = vector.extract_strided_slice %28 {offsets = [0, 20], sizes = [16, 3], strides = [1, 1]} : vector<16x32xf32> to vector<16x3xf32>
    %174 = vector.extract_strided_slice %29 {offsets = [0, 20], sizes = [16, 3], strides = [1, 1]} : vector<16x32xf32> to vector<16x3xf32>
    %175 = arith.addf %168, %173 : vector<16x3xf32>
    %176 = arith.mulf %173, %173 : vector<16x3xf32>
    %177 = arith.addf %170, %176 : vector<16x3xf32>
    %178 = arith.mulf %174, %174 : vector<16x3xf32>
    %179 = arith.addf %172, %178 : vector<16x3xf32>
    %180 = vector.extract_strided_slice %28 {offsets = [0, 21], sizes = [16, 3], strides = [1, 1]} : vector<16x32xf32> to vector<16x3xf32>
    %181 = vector.extract_strided_slice %29 {offsets = [0, 21], sizes = [16, 3], strides = [1, 1]} : vector<16x32xf32> to vector<16x3xf32>
    %182 = arith.addf %175, %180 : vector<16x3xf32>
    %183 = arith.mulf %180, %180 : vector<16x3xf32>
    %184 = arith.addf %177, %183 : vector<16x3xf32>
    %185 = arith.mulf %181, %181 : vector<16x3xf32>
    %186 = arith.addf %179, %185 : vector<16x3xf32>
    %187 = vector.extract_strided_slice %28 {offsets = [0, 22], sizes = [16, 3], strides = [1, 1]} : vector<16x32xf32> to vector<16x3xf32>
    %188 = vector.extract_strided_slice %29 {offsets = [0, 22], sizes = [16, 3], strides = [1, 1]} : vector<16x32xf32> to vector<16x3xf32>
    %189 = arith.addf %182, %187 : vector<16x3xf32>
    %190 = arith.mulf %187, %187 : vector<16x3xf32>
    %191 = arith.addf %184, %190 : vector<16x3xf32>
    %192 = arith.mulf %188, %188 : vector<16x3xf32>
    %193 = arith.addf %186, %192 : vector<16x3xf32>
    %194 = vector.extract_strided_slice %28 {offsets = [0, 23], sizes = [16, 3], strides = [1, 1]} : vector<16x32xf32> to vector<16x3xf32>
    %195 = vector.extract_strided_slice %29 {offsets = [0, 23], sizes = [16, 3], strides = [1, 1]} : vector<16x32xf32> to vector<16x3xf32>
    %196 = arith.addf %189, %194 : vector<16x3xf32>
    %197 = arith.mulf %194, %194 : vector<16x3xf32>
    %198 = arith.addf %191, %197 : vector<16x3xf32>
    %199 = arith.mulf %195, %195 : vector<16x3xf32>
    %200 = arith.addf %193, %199 : vector<16x3xf32>
    %201 = vector.extract_strided_slice %28 {offsets = [0, 24], sizes = [16, 3], strides = [1, 1]} : vector<16x32xf32> to vector<16x3xf32>
    %202 = vector.extract_strided_slice %29 {offsets = [0, 24], sizes = [16, 3], strides = [1, 1]} : vector<16x32xf32> to vector<16x3xf32>
    %203 = arith.addf %196, %201 : vector<16x3xf32>
    %204 = arith.mulf %201, %201 : vector<16x3xf32>
    %205 = arith.addf %198, %204 : vector<16x3xf32>
    %206 = arith.mulf %202, %202 : vector<16x3xf32>
    %207 = arith.addf %200, %206 : vector<16x3xf32>
    %208 = vector.extract_strided_slice %28 {offsets = [0, 25], sizes = [16, 3], strides = [1, 1]} : vector<16x32xf32> to vector<16x3xf32>
    %209 = vector.extract_strided_slice %29 {offsets = [0, 25], sizes = [16, 3], strides = [1, 1]} : vector<16x32xf32> to vector<16x3xf32>
    %210 = arith.addf %203, %208 : vector<16x3xf32>
    %211 = arith.mulf %208, %208 : vector<16x3xf32>
    %212 = arith.addf %205, %211 : vector<16x3xf32>
    %213 = arith.mulf %209, %209 : vector<16x3xf32>
    %214 = arith.addf %207, %213 : vector<16x3xf32>
    %215 = vector.extract_strided_slice %28 {offsets = [0, 26], sizes = [16, 3], strides = [1, 1]} : vector<16x32xf32> to vector<16x3xf32>
    %216 = vector.extract_strided_slice %29 {offsets = [0, 26], sizes = [16, 3], strides = [1, 1]} : vector<16x32xf32> to vector<16x3xf32>
    %217 = arith.addf %210, %215 : vector<16x3xf32>
    %218 = arith.mulf %215, %215 : vector<16x3xf32>
    %219 = arith.addf %212, %218 : vector<16x3xf32>
    %220 = arith.mulf %216, %216 : vector<16x3xf32>
    %221 = arith.addf %214, %220 : vector<16x3xf32>
    %222 = vector.extract_strided_slice %28 {offsets = [0, 27], sizes = [16, 3], strides = [1, 1]} : vector<16x32xf32> to vector<16x3xf32>
    %223 = vector.extract_strided_slice %29 {offsets = [0, 27], sizes = [16, 3], strides = [1, 1]} : vector<16x32xf32> to vector<16x3xf32>
    %224 = arith.addf %217, %222 : vector<16x3xf32>
    %225 = arith.mulf %222, %222 : vector<16x3xf32>
    %226 = arith.addf %219, %225 : vector<16x3xf32>
    %227 = arith.mulf %223, %223 : vector<16x3xf32>
    %228 = arith.addf %221, %227 : vector<16x3xf32>
    %229 = vector.extract_strided_slice %28 {offsets = [0, 28], sizes = [16, 3], strides = [1, 1]} : vector<16x32xf32> to vector<16x3xf32>
    %230 = vector.extract_strided_slice %29 {offsets = [0, 28], sizes = [16, 3], strides = [1, 1]} : vector<16x32xf32> to vector<16x3xf32>
    %231 = arith.addf %224, %229 : vector<16x3xf32>
    %232 = arith.mulf %229, %229 : vector<16x3xf32>
    %233 = arith.addf %226, %232 : vector<16x3xf32>
    %234 = arith.mulf %230, %230 : vector<16x3xf32>
    %235 = arith.addf %228, %234 : vector<16x3xf32>
    %236 = vector.extract_strided_slice %28 {offsets = [0, 29], sizes = [16, 3], strides = [1, 1]} : vector<16x32xf32> to vector<16x3xf32>
    %237 = vector.extract_strided_slice %29 {offsets = [0, 29], sizes = [16, 3], strides = [1, 1]} : vector<16x32xf32> to vector<16x3xf32>
    %238 = arith.addf %231, %236 : vector<16x3xf32>
    %239 = arith.mulf %236, %236 : vector<16x3xf32>
    %240 = arith.addf %233, %239 : vector<16x3xf32>
    %241 = arith.mulf %237, %237 : vector<16x3xf32>
    %242 = arith.addf %235, %241 : vector<16x3xf32>
    %243 = math.sqrt %240 : vector<16x3xf32>
    %244 = math.sqrt %242 : vector<16x3xf32>
    %cst_14 = arith.constant 9.99999993E-9 : f32
    %245 = vector.broadcast %cst_14 : f32 to vector<16x3xf32>
    %246 = arith.addf %244, %245 : vector<16x3xf32>
    %247 = arith.divf %243, %246 : vector<16x3xf32>
    %cst_15 = arith.constant 0.0333333351 : f32
    %248 = vector.broadcast %cst_15 : f32 to vector<16x3xf32>
    %249 = arith.mulf %238, %248 : vector<16x3xf32>
    %cst_16 = arith.constant 0.000000e+00 : f32
    %250 = vector.broadcast %cst_16 : f32 to vector<16x3xf32>
    %cst_17 = arith.constant 0.000000e+00 : f32
    %251 = vector.broadcast %cst_17 : f32 to vector<16x3xf32>
    %cst_18 = arith.constant 0.000000e+00 : f32
    %252 = vector.broadcast %cst_18 : f32 to vector<16x3xf32>
    %cst_19 = arith.constant 0.000000e+00 : f32
    %253 = vector.broadcast %cst_19 : f32 to vector<16x3xf32>
    %254 = vector.extract_strided_slice %28 {offsets = [0, 0], sizes = [16, 3], strides = [1, 1]} : vector<16x32xf32> to vector<16x3xf32>
    %255 = vector.extract_strided_slice %29 {offsets = [0, 0], sizes = [16, 3], strides = [1, 1]} : vector<16x32xf32> to vector<16x3xf32>
    %256 = arith.subf %254, %249 : vector<16x3xf32>
    %257 = arith.mulf %255, %247 : vector<16x3xf32>
    %cst_20 = arith.constant 6.62341309 : f32
    %258 = vector.broadcast %cst_20 : f32 to vector<16x3xf32>
    %259 = arith.mulf %254, %258 : vector<16x3xf32>
    %260 = arith.minimumf %257, %259 : vector<16x3xf32>
    %261 = arith.mulf %256, %256 : vector<16x3xf32>
    %262 = arith.addf %250, %261 : vector<16x3xf32>
    %263 = arith.mulf %256, %260 : vector<16x3xf32>
    %264 = arith.addf %251, %263 : vector<16x3xf32>
    %265 = arith.addf %252, %260 : vector<16x3xf32>
    %266 = arith.mulf %260, %260 : vector<16x3xf32>
    %267 = arith.addf %253, %266 : vector<16x3xf32>
    %268 = vector.extract_strided_slice %28 {offsets = [0, 1], sizes = [16, 3], strides = [1, 1]} : vector<16x32xf32> to vector<16x3xf32>
    %269 = vector.extract_strided_slice %29 {offsets = [0, 1], sizes = [16, 3], strides = [1, 1]} : vector<16x32xf32> to vector<16x3xf32>
    %270 = arith.subf %268, %249 : vector<16x3xf32>
    %271 = arith.mulf %269, %247 : vector<16x3xf32>
    %cst_21 = arith.constant 6.62341309 : f32
    %272 = vector.broadcast %cst_21 : f32 to vector<16x3xf32>
    %273 = arith.mulf %268, %272 : vector<16x3xf32>
    %274 = arith.minimumf %271, %273 : vector<16x3xf32>
    %275 = arith.mulf %270, %270 : vector<16x3xf32>
    %276 = arith.addf %262, %275 : vector<16x3xf32>
    %277 = arith.mulf %270, %274 : vector<16x3xf32>
    %278 = arith.addf %264, %277 : vector<16x3xf32>
    %279 = arith.addf %265, %274 : vector<16x3xf32>
    %280 = arith.mulf %274, %274 : vector<16x3xf32>
    %281 = arith.addf %267, %280 : vector<16x3xf32>
    %282 = vector.extract_strided_slice %28 {offsets = [0, 2], sizes = [16, 3], strides = [1, 1]} : vector<16x32xf32> to vector<16x3xf32>
    %283 = vector.extract_strided_slice %29 {offsets = [0, 2], sizes = [16, 3], strides = [1, 1]} : vector<16x32xf32> to vector<16x3xf32>
    %284 = arith.subf %282, %249 : vector<16x3xf32>
    %285 = arith.mulf %283, %247 : vector<16x3xf32>
    %cst_22 = arith.constant 6.62341309 : f32
    %286 = vector.broadcast %cst_22 : f32 to vector<16x3xf32>
    %287 = arith.mulf %282, %286 : vector<16x3xf32>
    %288 = arith.minimumf %285, %287 : vector<16x3xf32>
    %289 = arith.mulf %284, %284 : vector<16x3xf32>
    %290 = arith.addf %276, %289 : vector<16x3xf32>
    %291 = arith.mulf %284, %288 : vector<16x3xf32>
    %292 = arith.addf %278, %291 : vector<16x3xf32>
    %293 = arith.addf %279, %288 : vector<16x3xf32>
    %294 = arith.mulf %288, %288 : vector<16x3xf32>
    %295 = arith.addf %281, %294 : vector<16x3xf32>
    %296 = vector.extract_strided_slice %28 {offsets = [0, 3], sizes = [16, 3], strides = [1, 1]} : vector<16x32xf32> to vector<16x3xf32>
    %297 = vector.extract_strided_slice %29 {offsets = [0, 3], sizes = [16, 3], strides = [1, 1]} : vector<16x32xf32> to vector<16x3xf32>
    %298 = arith.subf %296, %249 : vector<16x3xf32>
    %299 = arith.mulf %297, %247 : vector<16x3xf32>
    %cst_23 = arith.constant 6.62341309 : f32
    %300 = vector.broadcast %cst_23 : f32 to vector<16x3xf32>
    %301 = arith.mulf %296, %300 : vector<16x3xf32>
    %302 = arith.minimumf %299, %301 : vector<16x3xf32>
    %303 = arith.mulf %298, %298 : vector<16x3xf32>
    %304 = arith.addf %290, %303 : vector<16x3xf32>
    %305 = arith.mulf %298, %302 : vector<16x3xf32>
    %306 = arith.addf %292, %305 : vector<16x3xf32>
    %307 = arith.addf %293, %302 : vector<16x3xf32>
    %308 = arith.mulf %302, %302 : vector<16x3xf32>
    %309 = arith.addf %295, %308 : vector<16x3xf32>
    %310 = vector.extract_strided_slice %28 {offsets = [0, 4], sizes = [16, 3], strides = [1, 1]} : vector<16x32xf32> to vector<16x3xf32>
    %311 = vector.extract_strided_slice %29 {offsets = [0, 4], sizes = [16, 3], strides = [1, 1]} : vector<16x32xf32> to vector<16x3xf32>
    %312 = arith.subf %310, %249 : vector<16x3xf32>
    %313 = arith.mulf %311, %247 : vector<16x3xf32>
    %cst_24 = arith.constant 6.62341309 : f32
    %314 = vector.broadcast %cst_24 : f32 to vector<16x3xf32>
    %315 = arith.mulf %310, %314 : vector<16x3xf32>
    %316 = arith.minimumf %313, %315 : vector<16x3xf32>
    %317 = arith.mulf %312, %312 : vector<16x3xf32>
    %318 = arith.addf %304, %317 : vector<16x3xf32>
    %319 = arith.mulf %312, %316 : vector<16x3xf32>
    %320 = arith.addf %306, %319 : vector<16x3xf32>
    %321 = arith.addf %307, %316 : vector<16x3xf32>
    %322 = arith.mulf %316, %316 : vector<16x3xf32>
    %323 = arith.addf %309, %322 : vector<16x3xf32>
    %324 = vector.extract_strided_slice %28 {offsets = [0, 5], sizes = [16, 3], strides = [1, 1]} : vector<16x32xf32> to vector<16x3xf32>
    %325 = vector.extract_strided_slice %29 {offsets = [0, 5], sizes = [16, 3], strides = [1, 1]} : vector<16x32xf32> to vector<16x3xf32>
    %326 = arith.subf %324, %249 : vector<16x3xf32>
    %327 = arith.mulf %325, %247 : vector<16x3xf32>
    %cst_25 = arith.constant 6.62341309 : f32
    %328 = vector.broadcast %cst_25 : f32 to vector<16x3xf32>
    %329 = arith.mulf %324, %328 : vector<16x3xf32>
    %330 = arith.minimumf %327, %329 : vector<16x3xf32>
    %331 = arith.mulf %326, %326 : vector<16x3xf32>
    %332 = arith.addf %318, %331 : vector<16x3xf32>
    %333 = arith.mulf %326, %330 : vector<16x3xf32>
    %334 = arith.addf %320, %333 : vector<16x3xf32>
    %335 = arith.addf %321, %330 : vector<16x3xf32>
    %336 = arith.mulf %330, %330 : vector<16x3xf32>
    %337 = arith.addf %323, %336 : vector<16x3xf32>
    %338 = vector.extract_strided_slice %28 {offsets = [0, 6], sizes = [16, 3], strides = [1, 1]} : vector<16x32xf32> to vector<16x3xf32>
    %339 = vector.extract_strided_slice %29 {offsets = [0, 6], sizes = [16, 3], strides = [1, 1]} : vector<16x32xf32> to vector<16x3xf32>
    %340 = arith.subf %338, %249 : vector<16x3xf32>
    %341 = arith.mulf %339, %247 : vector<16x3xf32>
    %cst_26 = arith.constant 6.62341309 : f32
    %342 = vector.broadcast %cst_26 : f32 to vector<16x3xf32>
    %343 = arith.mulf %338, %342 : vector<16x3xf32>
    %344 = arith.minimumf %341, %343 : vector<16x3xf32>
    %345 = arith.mulf %340, %340 : vector<16x3xf32>
    %346 = arith.addf %332, %345 : vector<16x3xf32>
    %347 = arith.mulf %340, %344 : vector<16x3xf32>
    %348 = arith.addf %334, %347 : vector<16x3xf32>
    %349 = arith.addf %335, %344 : vector<16x3xf32>
    %350 = arith.mulf %344, %344 : vector<16x3xf32>
    %351 = arith.addf %337, %350 : vector<16x3xf32>
    %352 = vector.extract_strided_slice %28 {offsets = [0, 7], sizes = [16, 3], strides = [1, 1]} : vector<16x32xf32> to vector<16x3xf32>
    %353 = vector.extract_strided_slice %29 {offsets = [0, 7], sizes = [16, 3], strides = [1, 1]} : vector<16x32xf32> to vector<16x3xf32>
    %354 = arith.subf %352, %249 : vector<16x3xf32>
    %355 = arith.mulf %353, %247 : vector<16x3xf32>
    %cst_27 = arith.constant 6.62341309 : f32
    %356 = vector.broadcast %cst_27 : f32 to vector<16x3xf32>
    %357 = arith.mulf %352, %356 : vector<16x3xf32>
    %358 = arith.minimumf %355, %357 : vector<16x3xf32>
    %359 = arith.mulf %354, %354 : vector<16x3xf32>
    %360 = arith.addf %346, %359 : vector<16x3xf32>
    %361 = arith.mulf %354, %358 : vector<16x3xf32>
    %362 = arith.addf %348, %361 : vector<16x3xf32>
    %363 = arith.addf %349, %358 : vector<16x3xf32>
    %364 = arith.mulf %358, %358 : vector<16x3xf32>
    %365 = arith.addf %351, %364 : vector<16x3xf32>
    %366 = vector.extract_strided_slice %28 {offsets = [0, 8], sizes = [16, 3], strides = [1, 1]} : vector<16x32xf32> to vector<16x3xf32>
    %367 = vector.extract_strided_slice %29 {offsets = [0, 8], sizes = [16, 3], strides = [1, 1]} : vector<16x32xf32> to vector<16x3xf32>
    %368 = arith.subf %366, %249 : vector<16x3xf32>
    %369 = arith.mulf %367, %247 : vector<16x3xf32>
    %cst_28 = arith.constant 6.62341309 : f32
    %370 = vector.broadcast %cst_28 : f32 to vector<16x3xf32>
    %371 = arith.mulf %366, %370 : vector<16x3xf32>
    %372 = arith.minimumf %369, %371 : vector<16x3xf32>
    %373 = arith.mulf %368, %368 : vector<16x3xf32>
    %374 = arith.addf %360, %373 : vector<16x3xf32>
    %375 = arith.mulf %368, %372 : vector<16x3xf32>
    %376 = arith.addf %362, %375 : vector<16x3xf32>
    %377 = arith.addf %363, %372 : vector<16x3xf32>
    %378 = arith.mulf %372, %372 : vector<16x3xf32>
    %379 = arith.addf %365, %378 : vector<16x3xf32>
    %380 = vector.extract_strided_slice %28 {offsets = [0, 9], sizes = [16, 3], strides = [1, 1]} : vector<16x32xf32> to vector<16x3xf32>
    %381 = vector.extract_strided_slice %29 {offsets = [0, 9], sizes = [16, 3], strides = [1, 1]} : vector<16x32xf32> to vector<16x3xf32>
    %382 = arith.subf %380, %249 : vector<16x3xf32>
    %383 = arith.mulf %381, %247 : vector<16x3xf32>
    %cst_29 = arith.constant 6.62341309 : f32
    %384 = vector.broadcast %cst_29 : f32 to vector<16x3xf32>
    %385 = arith.mulf %380, %384 : vector<16x3xf32>
    %386 = arith.minimumf %383, %385 : vector<16x3xf32>
    %387 = arith.mulf %382, %382 : vector<16x3xf32>
    %388 = arith.addf %374, %387 : vector<16x3xf32>
    %389 = arith.mulf %382, %386 : vector<16x3xf32>
    %390 = arith.addf %376, %389 : vector<16x3xf32>
    %391 = arith.addf %377, %386 : vector<16x3xf32>
    %392 = arith.mulf %386, %386 : vector<16x3xf32>
    %393 = arith.addf %379, %392 : vector<16x3xf32>
    %394 = vector.extract_strided_slice %28 {offsets = [0, 10], sizes = [16, 3], strides = [1, 1]} : vector<16x32xf32> to vector<16x3xf32>
    %395 = vector.extract_strided_slice %29 {offsets = [0, 10], sizes = [16, 3], strides = [1, 1]} : vector<16x32xf32> to vector<16x3xf32>
    %396 = arith.subf %394, %249 : vector<16x3xf32>
    %397 = arith.mulf %395, %247 : vector<16x3xf32>
    %cst_30 = arith.constant 6.62341309 : f32
    %398 = vector.broadcast %cst_30 : f32 to vector<16x3xf32>
    %399 = arith.mulf %394, %398 : vector<16x3xf32>
    %400 = arith.minimumf %397, %399 : vector<16x3xf32>
    %401 = arith.mulf %396, %396 : vector<16x3xf32>
    %402 = arith.addf %388, %401 : vector<16x3xf32>
    %403 = arith.mulf %396, %400 : vector<16x3xf32>
    %404 = arith.addf %390, %403 : vector<16x3xf32>
    %405 = arith.addf %391, %400 : vector<16x3xf32>
    %406 = arith.mulf %400, %400 : vector<16x3xf32>
    %407 = arith.addf %393, %406 : vector<16x3xf32>
    %408 = vector.extract_strided_slice %28 {offsets = [0, 11], sizes = [16, 3], strides = [1, 1]} : vector<16x32xf32> to vector<16x3xf32>
    %409 = vector.extract_strided_slice %29 {offsets = [0, 11], sizes = [16, 3], strides = [1, 1]} : vector<16x32xf32> to vector<16x3xf32>
    %410 = arith.subf %408, %249 : vector<16x3xf32>
    %411 = arith.mulf %409, %247 : vector<16x3xf32>
    %cst_31 = arith.constant 6.62341309 : f32
    %412 = vector.broadcast %cst_31 : f32 to vector<16x3xf32>
    %413 = arith.mulf %408, %412 : vector<16x3xf32>
    %414 = arith.minimumf %411, %413 : vector<16x3xf32>
    %415 = arith.mulf %410, %410 : vector<16x3xf32>
    %416 = arith.addf %402, %415 : vector<16x3xf32>
    %417 = arith.mulf %410, %414 : vector<16x3xf32>
    %418 = arith.addf %404, %417 : vector<16x3xf32>
    %419 = arith.addf %405, %414 : vector<16x3xf32>
    %420 = arith.mulf %414, %414 : vector<16x3xf32>
    %421 = arith.addf %407, %420 : vector<16x3xf32>
    %422 = vector.extract_strided_slice %28 {offsets = [0, 12], sizes = [16, 3], strides = [1, 1]} : vector<16x32xf32> to vector<16x3xf32>
    %423 = vector.extract_strided_slice %29 {offsets = [0, 12], sizes = [16, 3], strides = [1, 1]} : vector<16x32xf32> to vector<16x3xf32>
    %424 = arith.subf %422, %249 : vector<16x3xf32>
    %425 = arith.mulf %423, %247 : vector<16x3xf32>
    %cst_32 = arith.constant 6.62341309 : f32
    %426 = vector.broadcast %cst_32 : f32 to vector<16x3xf32>
    %427 = arith.mulf %422, %426 : vector<16x3xf32>
    %428 = arith.minimumf %425, %427 : vector<16x3xf32>
    %429 = arith.mulf %424, %424 : vector<16x3xf32>
    %430 = arith.addf %416, %429 : vector<16x3xf32>
    %431 = arith.mulf %424, %428 : vector<16x3xf32>
    %432 = arith.addf %418, %431 : vector<16x3xf32>
    %433 = arith.addf %419, %428 : vector<16x3xf32>
    %434 = arith.mulf %428, %428 : vector<16x3xf32>
    %435 = arith.addf %421, %434 : vector<16x3xf32>
    %436 = vector.extract_strided_slice %28 {offsets = [0, 13], sizes = [16, 3], strides = [1, 1]} : vector<16x32xf32> to vector<16x3xf32>
    %437 = vector.extract_strided_slice %29 {offsets = [0, 13], sizes = [16, 3], strides = [1, 1]} : vector<16x32xf32> to vector<16x3xf32>
    %438 = arith.subf %436, %249 : vector<16x3xf32>
    %439 = arith.mulf %437, %247 : vector<16x3xf32>
    %cst_33 = arith.constant 6.62341309 : f32
    %440 = vector.broadcast %cst_33 : f32 to vector<16x3xf32>
    %441 = arith.mulf %436, %440 : vector<16x3xf32>
    %442 = arith.minimumf %439, %441 : vector<16x3xf32>
    %443 = arith.mulf %438, %438 : vector<16x3xf32>
    %444 = arith.addf %430, %443 : vector<16x3xf32>
    %445 = arith.mulf %438, %442 : vector<16x3xf32>
    %446 = arith.addf %432, %445 : vector<16x3xf32>
    %447 = arith.addf %433, %442 : vector<16x3xf32>
    %448 = arith.mulf %442, %442 : vector<16x3xf32>
    %449 = arith.addf %435, %448 : vector<16x3xf32>
    %450 = vector.extract_strided_slice %28 {offsets = [0, 14], sizes = [16, 3], strides = [1, 1]} : vector<16x32xf32> to vector<16x3xf32>
    %451 = vector.extract_strided_slice %29 {offsets = [0, 14], sizes = [16, 3], strides = [1, 1]} : vector<16x32xf32> to vector<16x3xf32>
    %452 = arith.subf %450, %249 : vector<16x3xf32>
    %453 = arith.mulf %451, %247 : vector<16x3xf32>
    %cst_34 = arith.constant 6.62341309 : f32
    %454 = vector.broadcast %cst_34 : f32 to vector<16x3xf32>
    %455 = arith.mulf %450, %454 : vector<16x3xf32>
    %456 = arith.minimumf %453, %455 : vector<16x3xf32>
    %457 = arith.mulf %452, %452 : vector<16x3xf32>
    %458 = arith.addf %444, %457 : vector<16x3xf32>
    %459 = arith.mulf %452, %456 : vector<16x3xf32>
    %460 = arith.addf %446, %459 : vector<16x3xf32>
    %461 = arith.addf %447, %456 : vector<16x3xf32>
    %462 = arith.mulf %456, %456 : vector<16x3xf32>
    %463 = arith.addf %449, %462 : vector<16x3xf32>
    %464 = vector.extract_strided_slice %28 {offsets = [0, 15], sizes = [16, 3], strides = [1, 1]} : vector<16x32xf32> to vector<16x3xf32>
    %465 = vector.extract_strided_slice %29 {offsets = [0, 15], sizes = [16, 3], strides = [1, 1]} : vector<16x32xf32> to vector<16x3xf32>
    %466 = arith.subf %464, %249 : vector<16x3xf32>
    %467 = arith.mulf %465, %247 : vector<16x3xf32>
    %cst_35 = arith.constant 6.62341309 : f32
    %468 = vector.broadcast %cst_35 : f32 to vector<16x3xf32>
    %469 = arith.mulf %464, %468 : vector<16x3xf32>
    %470 = arith.minimumf %467, %469 : vector<16x3xf32>
    %471 = arith.mulf %466, %466 : vector<16x3xf32>
    %472 = arith.addf %458, %471 : vector<16x3xf32>
    %473 = arith.mulf %466, %470 : vector<16x3xf32>
    %474 = arith.addf %460, %473 : vector<16x3xf32>
    %475 = arith.addf %461, %470 : vector<16x3xf32>
    %476 = arith.mulf %470, %470 : vector<16x3xf32>
    %477 = arith.addf %463, %476 : vector<16x3xf32>
    %478 = vector.extract_strided_slice %28 {offsets = [0, 16], sizes = [16, 3], strides = [1, 1]} : vector<16x32xf32> to vector<16x3xf32>
    %479 = vector.extract_strided_slice %29 {offsets = [0, 16], sizes = [16, 3], strides = [1, 1]} : vector<16x32xf32> to vector<16x3xf32>
    %480 = arith.subf %478, %249 : vector<16x3xf32>
    %481 = arith.mulf %479, %247 : vector<16x3xf32>
    %cst_36 = arith.constant 6.62341309 : f32
    %482 = vector.broadcast %cst_36 : f32 to vector<16x3xf32>
    %483 = arith.mulf %478, %482 : vector<16x3xf32>
    %484 = arith.minimumf %481, %483 : vector<16x3xf32>
    %485 = arith.mulf %480, %480 : vector<16x3xf32>
    %486 = arith.addf %472, %485 : vector<16x3xf32>
    %487 = arith.mulf %480, %484 : vector<16x3xf32>
    %488 = arith.addf %474, %487 : vector<16x3xf32>
    %489 = arith.addf %475, %484 : vector<16x3xf32>
    %490 = arith.mulf %484, %484 : vector<16x3xf32>
    %491 = arith.addf %477, %490 : vector<16x3xf32>
    %492 = vector.extract_strided_slice %28 {offsets = [0, 17], sizes = [16, 3], strides = [1, 1]} : vector<16x32xf32> to vector<16x3xf32>
    %493 = vector.extract_strided_slice %29 {offsets = [0, 17], sizes = [16, 3], strides = [1, 1]} : vector<16x32xf32> to vector<16x3xf32>
    %494 = arith.subf %492, %249 : vector<16x3xf32>
    %495 = arith.mulf %493, %247 : vector<16x3xf32>
    %cst_37 = arith.constant 6.62341309 : f32
    %496 = vector.broadcast %cst_37 : f32 to vector<16x3xf32>
    %497 = arith.mulf %492, %496 : vector<16x3xf32>
    %498 = arith.minimumf %495, %497 : vector<16x3xf32>
    %499 = arith.mulf %494, %494 : vector<16x3xf32>
    %500 = arith.addf %486, %499 : vector<16x3xf32>
    %501 = arith.mulf %494, %498 : vector<16x3xf32>
    %502 = arith.addf %488, %501 : vector<16x3xf32>
    %503 = arith.addf %489, %498 : vector<16x3xf32>
    %504 = arith.mulf %498, %498 : vector<16x3xf32>
    %505 = arith.addf %491, %504 : vector<16x3xf32>
    %506 = vector.extract_strided_slice %28 {offsets = [0, 18], sizes = [16, 3], strides = [1, 1]} : vector<16x32xf32> to vector<16x3xf32>
    %507 = vector.extract_strided_slice %29 {offsets = [0, 18], sizes = [16, 3], strides = [1, 1]} : vector<16x32xf32> to vector<16x3xf32>
    %508 = arith.subf %506, %249 : vector<16x3xf32>
    %509 = arith.mulf %507, %247 : vector<16x3xf32>
    %cst_38 = arith.constant 6.62341309 : f32
    %510 = vector.broadcast %cst_38 : f32 to vector<16x3xf32>
    %511 = arith.mulf %506, %510 : vector<16x3xf32>
    %512 = arith.minimumf %509, %511 : vector<16x3xf32>
    %513 = arith.mulf %508, %508 : vector<16x3xf32>
    %514 = arith.addf %500, %513 : vector<16x3xf32>
    %515 = arith.mulf %508, %512 : vector<16x3xf32>
    %516 = arith.addf %502, %515 : vector<16x3xf32>
    %517 = arith.addf %503, %512 : vector<16x3xf32>
    %518 = arith.mulf %512, %512 : vector<16x3xf32>
    %519 = arith.addf %505, %518 : vector<16x3xf32>
    %520 = vector.extract_strided_slice %28 {offsets = [0, 19], sizes = [16, 3], strides = [1, 1]} : vector<16x32xf32> to vector<16x3xf32>
    %521 = vector.extract_strided_slice %29 {offsets = [0, 19], sizes = [16, 3], strides = [1, 1]} : vector<16x32xf32> to vector<16x3xf32>
    %522 = arith.subf %520, %249 : vector<16x3xf32>
    %523 = arith.mulf %521, %247 : vector<16x3xf32>
    %cst_39 = arith.constant 6.62341309 : f32
    %524 = vector.broadcast %cst_39 : f32 to vector<16x3xf32>
    %525 = arith.mulf %520, %524 : vector<16x3xf32>
    %526 = arith.minimumf %523, %525 : vector<16x3xf32>
    %527 = arith.mulf %522, %522 : vector<16x3xf32>
    %528 = arith.addf %514, %527 : vector<16x3xf32>
    %529 = arith.mulf %522, %526 : vector<16x3xf32>
    %530 = arith.addf %516, %529 : vector<16x3xf32>
    %531 = arith.addf %517, %526 : vector<16x3xf32>
    %532 = arith.mulf %526, %526 : vector<16x3xf32>
    %533 = arith.addf %519, %532 : vector<16x3xf32>
    %534 = vector.extract_strided_slice %28 {offsets = [0, 20], sizes = [16, 3], strides = [1, 1]} : vector<16x32xf32> to vector<16x3xf32>
    %535 = vector.extract_strided_slice %29 {offsets = [0, 20], sizes = [16, 3], strides = [1, 1]} : vector<16x32xf32> to vector<16x3xf32>
    %536 = arith.subf %534, %249 : vector<16x3xf32>
    %537 = arith.mulf %535, %247 : vector<16x3xf32>
    %cst_40 = arith.constant 6.62341309 : f32
    %538 = vector.broadcast %cst_40 : f32 to vector<16x3xf32>
    %539 = arith.mulf %534, %538 : vector<16x3xf32>
    %540 = arith.minimumf %537, %539 : vector<16x3xf32>
    %541 = arith.mulf %536, %536 : vector<16x3xf32>
    %542 = arith.addf %528, %541 : vector<16x3xf32>
    %543 = arith.mulf %536, %540 : vector<16x3xf32>
    %544 = arith.addf %530, %543 : vector<16x3xf32>
    %545 = arith.addf %531, %540 : vector<16x3xf32>
    %546 = arith.mulf %540, %540 : vector<16x3xf32>
    %547 = arith.addf %533, %546 : vector<16x3xf32>
    %548 = vector.extract_strided_slice %28 {offsets = [0, 21], sizes = [16, 3], strides = [1, 1]} : vector<16x32xf32> to vector<16x3xf32>
    %549 = vector.extract_strided_slice %29 {offsets = [0, 21], sizes = [16, 3], strides = [1, 1]} : vector<16x32xf32> to vector<16x3xf32>
    %550 = arith.subf %548, %249 : vector<16x3xf32>
    %551 = arith.mulf %549, %247 : vector<16x3xf32>
    %cst_41 = arith.constant 6.62341309 : f32
    %552 = vector.broadcast %cst_41 : f32 to vector<16x3xf32>
    %553 = arith.mulf %548, %552 : vector<16x3xf32>
    %554 = arith.minimumf %551, %553 : vector<16x3xf32>
    %555 = arith.mulf %550, %550 : vector<16x3xf32>
    %556 = arith.addf %542, %555 : vector<16x3xf32>
    %557 = arith.mulf %550, %554 : vector<16x3xf32>
    %558 = arith.addf %544, %557 : vector<16x3xf32>
    %559 = arith.addf %545, %554 : vector<16x3xf32>
    %560 = arith.mulf %554, %554 : vector<16x3xf32>
    %561 = arith.addf %547, %560 : vector<16x3xf32>
    %562 = vector.extract_strided_slice %28 {offsets = [0, 22], sizes = [16, 3], strides = [1, 1]} : vector<16x32xf32> to vector<16x3xf32>
    %563 = vector.extract_strided_slice %29 {offsets = [0, 22], sizes = [16, 3], strides = [1, 1]} : vector<16x32xf32> to vector<16x3xf32>
    %564 = arith.subf %562, %249 : vector<16x3xf32>
    %565 = arith.mulf %563, %247 : vector<16x3xf32>
    %cst_42 = arith.constant 6.62341309 : f32
    %566 = vector.broadcast %cst_42 : f32 to vector<16x3xf32>
    %567 = arith.mulf %562, %566 : vector<16x3xf32>
    %568 = arith.minimumf %565, %567 : vector<16x3xf32>
    %569 = arith.mulf %564, %564 : vector<16x3xf32>
    %570 = arith.addf %556, %569 : vector<16x3xf32>
    %571 = arith.mulf %564, %568 : vector<16x3xf32>
    %572 = arith.addf %558, %571 : vector<16x3xf32>
    %573 = arith.addf %559, %568 : vector<16x3xf32>
    %574 = arith.mulf %568, %568 : vector<16x3xf32>
    %575 = arith.addf %561, %574 : vector<16x3xf32>
    %576 = vector.extract_strided_slice %28 {offsets = [0, 23], sizes = [16, 3], strides = [1, 1]} : vector<16x32xf32> to vector<16x3xf32>
    %577 = vector.extract_strided_slice %29 {offsets = [0, 23], sizes = [16, 3], strides = [1, 1]} : vector<16x32xf32> to vector<16x3xf32>
    %578 = arith.subf %576, %249 : vector<16x3xf32>
    %579 = arith.mulf %577, %247 : vector<16x3xf32>
    %cst_43 = arith.constant 6.62341309 : f32
    %580 = vector.broadcast %cst_43 : f32 to vector<16x3xf32>
    %581 = arith.mulf %576, %580 : vector<16x3xf32>
    %582 = arith.minimumf %579, %581 : vector<16x3xf32>
    %583 = arith.mulf %578, %578 : vector<16x3xf32>
    %584 = arith.addf %570, %583 : vector<16x3xf32>
    %585 = arith.mulf %578, %582 : vector<16x3xf32>
    %586 = arith.addf %572, %585 : vector<16x3xf32>
    %587 = arith.addf %573, %582 : vector<16x3xf32>
    %588 = arith.mulf %582, %582 : vector<16x3xf32>
    %589 = arith.addf %575, %588 : vector<16x3xf32>
    %590 = vector.extract_strided_slice %28 {offsets = [0, 24], sizes = [16, 3], strides = [1, 1]} : vector<16x32xf32> to vector<16x3xf32>
    %591 = vector.extract_strided_slice %29 {offsets = [0, 24], sizes = [16, 3], strides = [1, 1]} : vector<16x32xf32> to vector<16x3xf32>
    %592 = arith.subf %590, %249 : vector<16x3xf32>
    %593 = arith.mulf %591, %247 : vector<16x3xf32>
    %cst_44 = arith.constant 6.62341309 : f32
    %594 = vector.broadcast %cst_44 : f32 to vector<16x3xf32>
    %595 = arith.mulf %590, %594 : vector<16x3xf32>
    %596 = arith.minimumf %593, %595 : vector<16x3xf32>
    %597 = arith.mulf %592, %592 : vector<16x3xf32>
    %598 = arith.addf %584, %597 : vector<16x3xf32>
    %599 = arith.mulf %592, %596 : vector<16x3xf32>
    %600 = arith.addf %586, %599 : vector<16x3xf32>
    %601 = arith.addf %587, %596 : vector<16x3xf32>
    %602 = arith.mulf %596, %596 : vector<16x3xf32>
    %603 = arith.addf %589, %602 : vector<16x3xf32>
    %604 = vector.extract_strided_slice %28 {offsets = [0, 25], sizes = [16, 3], strides = [1, 1]} : vector<16x32xf32> to vector<16x3xf32>
    %605 = vector.extract_strided_slice %29 {offsets = [0, 25], sizes = [16, 3], strides = [1, 1]} : vector<16x32xf32> to vector<16x3xf32>
    %606 = arith.subf %604, %249 : vector<16x3xf32>
    %607 = arith.mulf %605, %247 : vector<16x3xf32>
    %cst_45 = arith.constant 6.62341309 : f32
    %608 = vector.broadcast %cst_45 : f32 to vector<16x3xf32>
    %609 = arith.mulf %604, %608 : vector<16x3xf32>
    %610 = arith.minimumf %607, %609 : vector<16x3xf32>
    %611 = arith.mulf %606, %606 : vector<16x3xf32>
    %612 = arith.addf %598, %611 : vector<16x3xf32>
    %613 = arith.mulf %606, %610 : vector<16x3xf32>
    %614 = arith.addf %600, %613 : vector<16x3xf32>
    %615 = arith.addf %601, %610 : vector<16x3xf32>
    %616 = arith.mulf %610, %610 : vector<16x3xf32>
    %617 = arith.addf %603, %616 : vector<16x3xf32>
    %618 = vector.extract_strided_slice %28 {offsets = [0, 26], sizes = [16, 3], strides = [1, 1]} : vector<16x32xf32> to vector<16x3xf32>
    %619 = vector.extract_strided_slice %29 {offsets = [0, 26], sizes = [16, 3], strides = [1, 1]} : vector<16x32xf32> to vector<16x3xf32>
    %620 = arith.subf %618, %249 : vector<16x3xf32>
    %621 = arith.mulf %619, %247 : vector<16x3xf32>
    %cst_46 = arith.constant 6.62341309 : f32
    %622 = vector.broadcast %cst_46 : f32 to vector<16x3xf32>
    %623 = arith.mulf %618, %622 : vector<16x3xf32>
    %624 = arith.minimumf %621, %623 : vector<16x3xf32>
    %625 = arith.mulf %620, %620 : vector<16x3xf32>
    %626 = arith.addf %612, %625 : vector<16x3xf32>
    %627 = arith.mulf %620, %624 : vector<16x3xf32>
    %628 = arith.addf %614, %627 : vector<16x3xf32>
    %629 = arith.addf %615, %624 : vector<16x3xf32>
    %630 = arith.mulf %624, %624 : vector<16x3xf32>
    %631 = arith.addf %617, %630 : vector<16x3xf32>
    %632 = vector.extract_strided_slice %28 {offsets = [0, 27], sizes = [16, 3], strides = [1, 1]} : vector<16x32xf32> to vector<16x3xf32>
    %633 = vector.extract_strided_slice %29 {offsets = [0, 27], sizes = [16, 3], strides = [1, 1]} : vector<16x32xf32> to vector<16x3xf32>
    %634 = arith.subf %632, %249 : vector<16x3xf32>
    %635 = arith.mulf %633, %247 : vector<16x3xf32>
    %cst_47 = arith.constant 6.62341309 : f32
    %636 = vector.broadcast %cst_47 : f32 to vector<16x3xf32>
    %637 = arith.mulf %632, %636 : vector<16x3xf32>
    %638 = arith.minimumf %635, %637 : vector<16x3xf32>
    %639 = arith.mulf %634, %634 : vector<16x3xf32>
    %640 = arith.addf %626, %639 : vector<16x3xf32>
    %641 = arith.mulf %634, %638 : vector<16x3xf32>
    %642 = arith.addf %628, %641 : vector<16x3xf32>
    %643 = arith.addf %629, %638 : vector<16x3xf32>
    %644 = arith.mulf %638, %638 : vector<16x3xf32>
    %645 = arith.addf %631, %644 : vector<16x3xf32>
    %646 = vector.extract_strided_slice %28 {offsets = [0, 28], sizes = [16, 3], strides = [1, 1]} : vector<16x32xf32> to vector<16x3xf32>
    %647 = vector.extract_strided_slice %29 {offsets = [0, 28], sizes = [16, 3], strides = [1, 1]} : vector<16x32xf32> to vector<16x3xf32>
    %648 = arith.subf %646, %249 : vector<16x3xf32>
    %649 = arith.mulf %647, %247 : vector<16x3xf32>
    %cst_48 = arith.constant 6.62341309 : f32
    %650 = vector.broadcast %cst_48 : f32 to vector<16x3xf32>
    %651 = arith.mulf %646, %650 : vector<16x3xf32>
    %652 = arith.minimumf %649, %651 : vector<16x3xf32>
    %653 = arith.mulf %648, %648 : vector<16x3xf32>
    %654 = arith.addf %640, %653 : vector<16x3xf32>
    %655 = arith.mulf %648, %652 : vector<16x3xf32>
    %656 = arith.addf %642, %655 : vector<16x3xf32>
    %657 = arith.addf %643, %652 : vector<16x3xf32>
    %658 = arith.mulf %652, %652 : vector<16x3xf32>
    %659 = arith.addf %645, %658 : vector<16x3xf32>
    %660 = vector.extract_strided_slice %28 {offsets = [0, 29], sizes = [16, 3], strides = [1, 1]} : vector<16x32xf32> to vector<16x3xf32>
    %661 = vector.extract_strided_slice %29 {offsets = [0, 29], sizes = [16, 3], strides = [1, 1]} : vector<16x32xf32> to vector<16x3xf32>
    %662 = arith.subf %660, %249 : vector<16x3xf32>
    %663 = arith.mulf %661, %247 : vector<16x3xf32>
    %cst_49 = arith.constant 6.62341309 : f32
    %664 = vector.broadcast %cst_49 : f32 to vector<16x3xf32>
    %665 = arith.mulf %660, %664 : vector<16x3xf32>
    %666 = arith.minimumf %663, %665 : vector<16x3xf32>
    %667 = arith.mulf %662, %662 : vector<16x3xf32>
    %668 = arith.addf %654, %667 : vector<16x3xf32>
    %669 = arith.mulf %662, %666 : vector<16x3xf32>
    %670 = arith.addf %656, %669 : vector<16x3xf32>
    %671 = arith.addf %657, %666 : vector<16x3xf32>
    %672 = arith.mulf %666, %666 : vector<16x3xf32>
    %673 = arith.addf %659, %672 : vector<16x3xf32>
    %cst_50 = arith.constant 0.0333333351 : f32
    %674 = vector.broadcast %cst_50 : f32 to vector<16x3xf32>
    %675 = arith.mulf %671, %674 : vector<16x3xf32>
    %cst_51 = arith.constant 3.000000e+01 : f32
    %676 = vector.broadcast %cst_51 : f32 to vector<16x3xf32>
    %677 = arith.mulf %676, %675 : vector<16x3xf32>
    %678 = arith.mulf %677, %675 : vector<16x3xf32>
    %679 = arith.subf %673, %678 : vector<16x3xf32>
    %cst_52 = arith.constant 0.000000e+00 : f32
    %680 = vector.broadcast %cst_52 : f32 to vector<16x3xf32>
    %681 = arith.maximumf %679, %680 : vector<16x3xf32>
    %682 = math.sqrt %668 : vector<16x3xf32>
    %cst_53 = arith.constant 9.99999993E-9 : f32
    %683 = vector.broadcast %cst_53 : f32 to vector<16x3xf32>
    %684 = arith.addf %682, %683 : vector<16x3xf32>
    %685 = math.sqrt %681 : vector<16x3xf32>
    %cst_54 = arith.constant 9.99999993E-9 : f32
    %686 = vector.broadcast %cst_54 : f32 to vector<16x3xf32>
    %687 = arith.addf %685, %686 : vector<16x3xf32>
    %688 = arith.mulf %684, %687 : vector<16x3xf32>
    %689 = arith.divf %670, %688 : vector<16x3xf32>
    %690 = tpu.iota {dimensions = array<i32: 0>} : vector<16x3xi32>
    %c15_i32 = arith.constant 15 : i32
    %691 = vector.broadcast %c15_i32 : i32 to vector<16x3xi32>
    %692 = arith.cmpi slt, %690, %691 : vector<16x3xi32>
    %cst_55 = arith.constant 0.000000e+00 : f32
    %693 = vector.broadcast %cst_55 : f32 to vector<16x3xf32>
    %694 = arith.select %692, %689, %693 : vector<16x3xi1>, vector<16x3xf32>
    %695 = vector.shape_cast %694 : vector<16x3xf32> to vector<1x16x3xf32>
    %cst_56 = arith.constant dense<0.000000e+00> : vector<1xf32>
    %696 = vector.multi_reduction <add>, %695, %cst_56 [1, 2] : vector<1x16x3xf32> to vector<1xf32>
    %697 = vector.shape_cast %696 : vector<1xf32> to vector<1x1x1xf32>
    %698 = vector.extract %697[0, 0, 0] : f32 from vector<1x1x1xf32>
    %cst_57 = arith.constant 0.000000e+00 : f32
    %699 = arith.addf %cst_57, %698 : f32
    %cst_58 = arith.constant 0.0222222228 : f32
    %700 = arith.mulf %699, %cst_58 : f32
    %cst_59 = arith.constant 0.000000e+00 : f32
    %701 = arith.subf %cst_59, %700 : f32
    %702 = vector.broadcast %701 : f32 to vector<8x128xf32>
    %c0_60 = arith.constant 0 : index
    %c0_61 = arith.constant 0 : index
    %c0_62 = arith.constant 0 : index
    %703 = vector.load %arg5[%c0_60, %c0_61, %c0_62] : memref<1x8x128xf32, #tpu.memory_space<vmem>>, vector<1x8x128xf32>
    %704 = vector.shape_cast %703 : vector<1x8x128xf32> to vector<8x128xf32>
    %705 = vector.shape_cast %702 : vector<8x128xf32> to vector<1x8x128xf32>
    tpu.vector_store %arg5[%c0_60, %c0_61, %c0_62], %705 {strides = array<i32>} : memref<1x8x128xf32, #tpu.memory_space<vmem>>, vector<1x8x128xf32>,
    return
  }
  func.func @transform_0(%arg0: i32) -> (i32, i32, i32) {
    %c0_i32 = arith.constant 0 : i32
    %c0_i32_0 = arith.constant 0 : i32
    %c0_i32_1 = arith.constant 0 : i32
    return %arg0, %c0_i32, %c0_i32_0 : i32, i32, i32
  }
  func.func @transform_1(%arg0: i32) -> (i32, i32, i32) {
    %c0_i32 = arith.constant 0 : i32
    %c0_i32_0 = arith.constant 0 : i32
    %c0_i32_1 = arith.constant 0 : i32
    return %arg0, %c0_i32, %c0_i32_0 : i32, i32, i32
  }
  func.func @transform_2(%arg0: i32) -> (i32, i32) {
    %c0_i32 = arith.constant 0 : i32
    %c0_i32_0 = arith.constant 0 : i32
    %c0_i32_1 = arith.constant 0 : i32
    return %c0_i32, %c0_i32_0 : i32, i32
  }
  func.func @transform_3(%arg0: i32) -> (i32, i32) {
    %c0_i32 = arith.constant 0 : i32
    %c0_i32_0 = arith.constant 0 : i32
    %c0_i32_1 = arith.constant 0 : i32
    return %c0_i32, %c0_i32_0 : i32, i32
  }
  func.func @transform_4(%arg0: i32) -> (i32, i32, i32) {
    %c0_i32 = arith.constant 0 : i32
    %c0_i32_0 = arith.constant 0 : i32
    %c0_i32_1 = arith.constant 0 : i32
    return %arg0, %c0_i32, %c0_i32_0 : i32, i32, i32
  }
}

</mosaic_0001>

<llo_original>
// kernel: tpu_custom_call.1
$region0: #{tpu_custom_call.1}
  #allocation0 [shape = 'u32[]', space=smem, size = 0x4, offset = 0x4, fixed_abs, tag = 'smem constant byte address 0x4 - core index']
  #allocation1 [shape = 'u32[72,128]{1,0:T(1,128)}', space=vmem, size = 0x9000, scoped, tag = 'internal scratch']
  %s0 = inlined_call_operand.vmem [shape: f32[2,35,128], index: 0, kind: input, shape index: {}]
  %s1 = inlined_call_operand.vmem [shape: f32[2,35,128], index: 1, kind: input, shape index: {}]
  %s2 = inlined_call_operand.hbm [shape: bf16[512,512], index: 2, kind: input, shape index: {}]
  %s3 = inlined_call_operand.vmem [shape: f32[16,256], index: 3, kind: input, shape index: {}]
  %s4 = inlined_call_operand.hbm [shape: f32[2,8,128], index: 4, kind: output, shape index: {}]
  %s5 = sld [smem:[#allocation0]]
  $region53: #{tpu_custom_call.1} parent=0
    _
  %s7 = ssub.s32 1, %s5
  %s8 = scalar_select 0, %s7, %s5
  $region1: #{tpu_custom_call.1} parent=0
    #allocation2 [shape = 'u8[524288]{0}', space=vmem, size = 0x80000, scoped, tag = 'input window, operand 2, single buffered']
    #allocation3 [shape = 's32[2]{0}', space=sflag, size = 0x8, scoped, tag = 'scoped memory for tpu_custom_call.1']
    #allocation4 [shape = 's32[2]{0}', space=sflag, size = 0x8, scoped, tag = 'scoped memory for tpu_custom_call.1']
    #allocation5 [shape = 'u8[8192]{0}', space=vmem, size = 0x2000, scoped, tag = 'output window, operand 0']
    %9 = vsyncpa [#allocation3], 0
    %10 = vsyncpa [#allocation4], 0
    %s11 = scalar_lea.sflag [#allocation4], 1
    %12 = vsyncpa %s11, 0
    loop: start=0, step=1, limit=4
    $region2: #{tpu_custom_call.1} parent=1 // loop_pre_header
      _
    $region3: #{tpu_custom_call.1} parent=1 // loop_header
      %s14 = sphi 0, %s18
      %p15 = scmp.ge.s32.totalorder %s14, 4
      %s24 = sphi 0, %s26
      %s27 = sphi 0, %s24
      %s28 = sphi 0, %s27
      %s44 = sphi 0, %s28
      %s50 = sphi 0, %s52
      %s53 = sphi 0, %s50
      %s54 = sphi 0, %s53
      %s70 = sphi 0, %s54
      %s74 = sphi 0, %s74
      %s76 = sphi 0, %s74
      %s77 = sphi 0, %s76
      %s91 = sphi 0, %s77
      %s95 = sphi 0, %s95
      %s97 = sphi 0, %s95
      %s98 = sphi 0, %s97
      %s112 = sphi 0, %s98
      %s118 = sphi 0, %s120
      %s121 = sphi 0, %s118
      %s122 = sphi 0, %s121
      %s138 = sphi 0, %s122
    $region4: #{tpu_custom_call.1} parent=1 // loop_header_branch
      %17 = sbr.rel (%p15) target = $region8
    $region5: #{tpu_custom_call.1} parent=1 // loop_body
      %s19 = ssub.s32 %s14, 1
      %s20 = ssub.s32 %s14, 2
      %s21 = sadd.s32 %s14, 1
      %s22 = ssub.s32 %s14, %s21
      %p23 = scmp.eq.s32.totalorder %s22, 0
      %s25 = sadd.s32 %s24, 1
      %s26 = scalar_select %p23, %s24, %s25
      %p29 = pneg %p23
      %p30 = scmp.eq.s32.totalorder %s14, 1
      %p31 = por %p29, %p30
      %p32 = scmp.ne.s32.totalorder %s24, %s27
      %p33 = scmp.eq.s32.totalorder %s14, 0
      %p34 = por %p32, %p33
      %p35 = scmp.ne.s32.totalorder %s24, %s27
      %p36 = scmp.eq.s32.totalorder %s19, 1
      %p37 = por %p35, %p36
      %p38 = scmp.ne.s32.totalorder %s27, %s28
      %p39 = scmp.eq.s32.totalorder %s19, 0
      %p40 = por %p38, %p39
      %p41 = scmp.ne.s32.totalorder %s27, %s28
      %p42 = scmp.eq.s32.totalorder %s20, 1
      %p43 = por %p41, %p42
      %p45 = scmp.ne.s32.totalorder %s28, %s44
      %p46 = scmp.eq.s32.totalorder %s20, 0
      %p47 = por %p45, %p46
      %s48 = ssub.s32 %s14, %s21
      %p49 = scmp.eq.s32.totalorder %s48, 0
      %s51 = sadd.s32 %s50, 1
      %s52 = scalar_select %p49, %s50, %s51
      %p55 = pneg %p49
      %p56 = scmp.eq.s32.totalorder %s14, 1
      %p57 = por %p55, %p56
      %p58 = scmp.ne.s32.totalorder %s50, %s53
      %p59 = scmp.eq.s32.totalorder %s14, 0
      %p60 = por %p58, %p59
      %p61 = scmp.ne.s32.totalorder %s50, %s53
      %p62 = scmp.eq.s32.totalorder %s19, 1
      %p63 = por %p61, %p62
      %p64 = scmp.ne.s32.totalorder %s53, %s54
      %p65 = scmp.eq.s32.totalorder %s19, 0
      %p66 = por %p64, %p65
      %p67 = scmp.ne.s32.totalorder %s53, %s54
      %p68 = scmp.eq.s32.totalorder %s20, 1
      %p69 = por %p67, %p68
      %p71 = scmp.ne.s32.totalorder %s54, %s70
      %p72 = scmp.eq.s32.totalorder %s20, 0
      %p73 = por %p71, %p72
      %s75 = sadd.s32 %s74, 1
      %p78 = scmp.eq.s32.totalorder %s14, 1
      %p79 = scmp.ne.s32.totalorder %s74, %s76
      %p80 = scmp.eq.s32.totalorder %s14, 0
      %p81 = por %p79, %p80
      %p82 = scmp.ne.s32.totalorder %s74, %s76
      %p83 = scmp.eq.s32.totalorder %s19, 1
      %p84 = por %p82, %p83
      %p85 = scmp.ne.s32.totalorder %s76, %s77
      %p86 = scmp.eq.s32.totalorder %s19, 0
      %p87 = por %p85, %p86
      %p88 = scmp.ne.s32.totalorder %s76, %s77
      %p89 = scmp.eq.s32.totalorder %s20, 1
      %p90 = por %p88, %p89
      %p92 = scmp.ne.s32.totalorder %s77, %s91
      %p93 = scmp.eq.s32.totalorder %s20, 0
      %p94 = por %p92, %p93
      %s96 = sadd.s32 %s95, 1
      %p99 = scmp.eq.s32.totalorder %s14, 1
      %p100 = scmp.ne.s32.totalorder %s95, %s97
      %p101 = scmp.eq.s32.totalorder %s14, 0
      %p102 = por %p100, %p101
      %p103 = scmp.ne.s32.totalorder %s95, %s97
      %p104 = scmp.eq.s32.totalorder %s19, 1
      %p105 = por %p103, %p104
      %p106 = scmp.ne.s32.totalorder %s97, %s98
      %p107 = scmp.eq.s32.totalorder %s19, 0
      %p108 = por %p106, %p107
      %p109 = scmp.ne.s32.totalorder %s97, %s98
      %p110 = scmp.eq.s32.totalorder %s20, 1
      %p111 = por %p109, %p110
      %p113 = scmp.ne.s32.totalorder %s98, %s112
      %p114 = scmp.eq.s32.totalorder %s20, 0
      %p115 = por %p113, %p114
      %s116 = ssub.s32 %s14, %s21
      %p117 = scmp.eq.s32.totalorder %s116, 0
      %s119 = sadd.s32 %s118, 1
      %s120 = scalar_select %p117, %s118, %s119
      %p123 = pneg %p117
      %p124 = scmp.eq.s32.totalorder %s14, 1
      %p125 = por %p123, %p124
      %p126 = scmp.ne.s32.totalorder %s118, %s121
      %p127 = scmp.eq.s32.totalorder %s14, 0
      %p128 = por %p126, %p127
      %p129 = scmp.ne.s32.totalorder %s118, %s121
      %p130 = scmp.eq.s32.totalorder %s19, 1
      %p131 = por %p129, %p130
      %p132 = scmp.ne.s32.totalorder %s121, %s122
      %p133 = scmp.eq.s32.totalorder %s19, 0
      %p134 = por %p132, %p133
      %p135 = scmp.ne.s32.totalorder %s121, %s122
      %p136 = scmp.eq.s32.totalorder %s20, 1
      %p137 = por %p135, %p136
      %p139 = scmp.ne.s32.totalorder %s122, %s138
      %p140 = scmp.eq.s32.totalorder %s20, 0
      %p141 = por %p139, %p140
      %p142 = scmp.le.s32.totalorder 1, %s14
      %p143 = scmp.lt.s32.totalorder %s14, 3
      %p144 = pnand %p142, %p143
      %p145 = pneg %p144
      // Predicated region
      $region9: #{tpu_custom_call.1} parent=5 // pred_check
        _
      $region10: #{tpu_custom_call.1} parent=5 // pred_check_branch
        %147 = sbr.rel (%p144) target = $region12
      $region11: #{tpu_custom_call.1} parent=5 // pred_region
        %s148 = ssub.s32 %s14, 1
        // Predicated region
        $region13: #{tpu_custom_call.1} parent=11 // pred_check
          %p149 = pneg %p87
        $region14: #{tpu_custom_call.1} parent=11 // pred_check_branch
          %151 = sbr.rel (%p149) target = $region16
        $region15: #{tpu_custom_call.1} parent=11 // pred_region
          %153 = vsyncadd [#allocation3], 0
          %s154 = sshll.u32 %s2, 4
          %s155 = int_to_ptr.hbm [resolvable:$true] %s154
          %s156 = sshll.u32 [#allocation2], 4
          %s157 = int_to_ptr.vmem [resolvable:$true] %s156
          %162 = dma.hbm_to_vmem [thread:$0]  %s155, 16384, %s157, [#allocation3], 256, 256, 16
        $region16: #{tpu_custom_call.1} parent=11 // pred_fallthru
          _
        // Predicated region
        $region17: #{tpu_custom_call.1} parent=11 // pred_check
          %p163 = pneg %p108
        $region18: #{tpu_custom_call.1} parent=11 // pred_check_branch
          %165 = sbr.rel (%p163) target = $region20
        $region19: #{tpu_custom_call.1} parent=11 // pred_region
          _
        $region20: #{tpu_custom_call.1} parent=11 // pred_fallthru
          _
      $region12: #{tpu_custom_call.1} parent=5 // pred_fallthru
        _
      %p166 = scmp.lt.s32.totalorder %s14, 2
      // Predicated region
      $region21: #{tpu_custom_call.1} parent=5 // pred_check
        %p167 = pneg %p166
      $region22: #{tpu_custom_call.1} parent=5 // pred_check_branch
        %169 = sbr.rel (%p167) target = $region24
      $region23: #{tpu_custom_call.1} parent=5 // pred_region
        // Predicated region
        $region25: #{tpu_custom_call.1} parent=23 // pred_check
          %p170 = pneg %p34
        $region26: #{tpu_custom_call.1} parent=23 // pred_check_branch
          %172 = sbr.rel (%p170) target = $region28
        $region27: #{tpu_custom_call.1} parent=23 // pred_region
          %p173 = scmp.lt.s32.totalorder %s14, 1
          %s174 = scalar_select %p173, %s14, 1
          %s175 = smul.addr %s174, 5
          %s176 = smul.addr %s175, 8
          %s177 = scalar_lea.vmem %s0, %s176
        $region28: #{tpu_custom_call.1} parent=23 // pred_fallthru
          _
        // Predicated region
        $region29: #{tpu_custom_call.1} parent=23 // pred_check
          %p178 = pneg %p60
        $region30: #{tpu_custom_call.1} parent=23 // pred_check_branch
          %180 = sbr.rel (%p178) target = $region32
        $region31: #{tpu_custom_call.1} parent=23 // pred_region
          %p181 = scmp.lt.s32.totalorder %s14, 1
          %s182 = scalar_select %p181, %s14, 1
          %s183 = smul.addr %s182, 5
          %s184 = smul.addr %s183, 8
          %s185 = scalar_lea.vmem %s1, %s184
        $region32: #{tpu_custom_call.1} parent=23 // pred_fallthru
          _
      $region24: #{tpu_custom_call.1} parent=5 // pred_fallthru
        _
      %p186 = scmp.le.s32.totalorder 1, %s14
      %p187 = scmp.lt.s32.totalorder %s14, 3
      %p188 = pnand %p186, %p187
      %p189 = pneg %p188
      // Predicated region
      $region33: #{tpu_custom_call.1} parent=5 // pred_check
        _
      $region34: #{tpu_custom_call.1} parent=5 // pred_check_branch
        %191 = sbr.rel (%p188) target = $region36
      $region35: #{tpu_custom_call.1} parent=5 // pred_region
        %s192 = ssub.s32 %s14, 1
        // Predicated region
        $region37: #{tpu_custom_call.1} parent=35 // pred_check
          %p193 = pneg %p87
        $region38: #{tpu_custom_call.1} parent=35 // pred_check_branch
          %195 = sbr.rel (%p193) target = $region40
        $region39: #{tpu_custom_call.1} parent=35 // pred_region
          %197 = dma.done [#allocation3], 16384
        $region40: #{tpu_custom_call.1} parent=35 // pred_fallthru
          _
        %p198 = scmp.lt.s32.totalorder %s19, 1
        %s199 = scalar_select %p198, %s19, 1
        %s200 = smul.addr %s199, 5
        %s201 = smul.addr %s200, 8
        %s202 = scalar_lea.vmem %s0, %s201
        %p203 = pneg %p40
        %p204 = pneg %p37
        %p205 = scmp.lt.s32.totalorder %s19, 1
        %s206 = scalar_select %p205, %s19, 1
        %s207 = smul.addr %s206, 5
        %s208 = smul.addr %s207, 8
        %s209 = scalar_lea.vmem %s1, %s208
        %p210 = pneg %p66
        %p211 = pneg %p63
        %p212 = pneg %p87
        %p213 = pneg %p84
        %p214 = pneg %p108
        %p215 = pneg %p105
        %p216 = pneg %p134
        %p217 = pneg %p131
        %s218 = sand.u32 %s121, 1
        %s219 = scalar_lea.sflag [#allocation4], %s218
        %s220 = sand.u32 %s121, 1
        %s221 = smul.addr %s220, 8
        %s222 = scalar_lea.vmem [#allocation5], %s221
        %p223 = scmp.lt.s32.totalorder %s19, 1
        %s224 = scalar_select %p223, %s19, 1
        %s225 = smul.addr %s224, 5
        %s226 = smul.addr %s225, 8
        %s227 = scalar_lea.vmem %s0, %s226
        %p228 = scmp.lt.s32.totalorder %s19, 1
        %s229 = scalar_select %p228, %s19, 1
        %s230 = smul.addr %s229, 5
        %s231 = smul.addr %s230, 8
        %s232 = scalar_lea.vmem %s1, %s231
        %v233 = vld [vmem:[#allocation2] sm:$0xff]
        %v234 = vld [vmem:[#allocation2 + $0x8] sm:$0xff]
        %v235 = vld [vmem:[#allocation2 + $0x10] sm:$0xff]
        %v236 = vld [vmem:[#allocation2 + $0x18] sm:$0xff]
        %v237 = vld [vmem:[#allocation2 + $0x20] sm:$0xff]
        %v238 = vld [vmem:[#allocation2 + $0x28] sm:$0xff]
        %v239 = vld [vmem:[#allocation2 + $0x30] sm:$0xff]
        %v240 = vld [vmem:[#allocation2 + $0x38] sm:$0xff]
        %v241 = vld [vmem:[#allocation2 + $0x40] sm:$0xff]
        %v242 = vld [vmem:[#allocation2 + $0x48] sm:$0xff]
        %v243 = vld [vmem:[#allocation2 + $0x50] sm:$0xff]
        %v244 = vld [vmem:[#allocation2 + $0x58] sm:$0xff]
        %v245 = vld [vmem:[#allocation2 + $0x60] sm:$0xff]
        %v246 = vld [vmem:[#allocation2 + $0x68] sm:$0xff]
        %v247 = vld [vmem:[#allocation2 + $0x70] sm:$0xff]
        %v248 = vld [vmem:[#allocation2 + $0x78] sm:$0xff]
        %v249 = vld [vmem:[#allocation2 + $0x80] sm:$0xff]
        %v250 = vld [vmem:[#allocation2 + $0x88] sm:$0xff]
        %v251 = vld [vmem:[#allocation2 + $0x90] sm:$0xff]
        %v252 = vld [vmem:[#allocation2 + $0x98] sm:$0xff]
        %v253 = vld [vmem:[#allocation2 + $0xa0] sm:$0xff]
        %v254 = vld [vmem:[#allocation2 + $0xa8] sm:$0xff]
        %v255 = vld [vmem:[#allocation2 + $0xb0] sm:$0xff]
        %v256 = vld [vmem:[#allocation2 + $0xb8] sm:$0xff]
        %v257 = vld [vmem:[#allocation2 + $0xc0] sm:$0xff]
        %v258 = vld [vmem:[#allocation2 + $0xc8] sm:$0xff]
        %v259 = vld [vmem:[#allocation2 + $0xd0] sm:$0xff]
        %v260 = vld [vmem:[#allocation2 + $0xd8] sm:$0xff]
        %v261 = vld [vmem:[#allocation2 + $0xe0] sm:$0xff]
        %v262 = vld [vmem:[#allocation2 + $0xe8] sm:$0xff]
        %v263 = vld [vmem:[#allocation2 + $0xf0] sm:$0xff]
        %v264 = vld [vmem:[#allocation2 + $0xf8] sm:$0xff]
        %v265 = vld [vmem:[#allocation2 + $0x100] sm:$0xff]
        %v266 = vld [vmem:[#allocation2 + $0x108] sm:$0xff]
        %v267 = vld [vmem:[#allocation2 + $0x110] sm:$0xff]
        %v268 = vld [vmem:[#allocation2 + $0x118] sm:$0xff]
        %v269 = vld [vmem:[#allocation2 + $0x120] sm:$0xff]
        %v270 = vld [vmem:[#allocation2 + $0x128] sm:$0xff]
        %v271 = vld [vmem:[#allocation2 + $0x130] sm:$0xff]
        %v272 = vld [vmem:[#allocation2 + $0x138] sm:$0xff]
        %v273 = vld [vmem:[#allocation2 + $0x140] sm:$0xff]
        %v274 = vld [vmem:[#allocation2 + $0x148] sm:$0xff]
        %v275 = vld [vmem:[#allocation2 + $0x150] sm:$0xff]
        %v276 = vld [vmem:[#allocation2 + $0x158] sm:$0xff]
        %v277 = vld [vmem:[#allocation2 + $0x160] sm:$0xff]
        %v278 = vld [vmem:[#allocation2 + $0x168] sm:$0xff]
        %v279 = vld [vmem:[#allocation2 + $0x170] sm:$0xff]
        %v280 = vld [vmem:[#allocation2 + $0x178] sm:$0xff]
        %v281 = vld [vmem:[#allocation2 + $0x180] sm:$0xff]
        %v282 = vld [vmem:[#allocation2 + $0x188] sm:$0xff]
        %v283 = vld [vmem:[#allocation2 + $0x190] sm:$0xff]
        %v284 = vld [vmem:[#allocation2 + $0x198] sm:$0xff]
        %v285 = vld [vmem:[#allocation2 + $0x1a0] sm:$0xff]
        %v286 = vld [vmem:[#allocation2 + $0x1a8] sm:$0xff]
        %v287 = vld [vmem:[#allocation2 + $0x1b0] sm:$0xff]
        %v288 = vld [vmem:[#allocation2 + $0x1b8] sm:$0xff]
        %v289 = vld [vmem:[#allocation2 + $0x1c0] sm:$0xff]
        %v290 = vld [vmem:[#allocation2 + $0x1c8] sm:$0xff]
        %v291 = vld [vmem:[#allocation2 + $0x1d0] sm:$0xff]
        %v292 = vld [vmem:[#allocation2 + $0x1d8] sm:$0xff]
        %v293 = vld [vmem:[#allocation2 + $0x1e0] sm:$0xff]
        %v294 = vld [vmem:[#allocation2 + $0x1e8] sm:$0xff]
        %v295 = vld [vmem:[#allocation2 + $0x1f0] sm:$0xff]
        %v296 = vld [vmem:[#allocation2 + $0x1f8] sm:$0xff]
        %v297 = vld [vmem:[#allocation2 + $0x200] sm:$0xff]
        %v298 = vld [vmem:[#allocation2 + $0x208] sm:$0xff]
        %v299 = vld [vmem:[#allocation2 + $0x210] sm:$0xff]
        %v300 = vld [vmem:[#allocation2 + $0x218] sm:$0xff]
        %v301 = vld [vmem:[#allocation2 + $0x220] sm:$0xff]
        %v302 = vld [vmem:[#allocation2 + $0x228] sm:$0xff]
        %v303 = vld [vmem:[#allocation2 + $0x230] sm:$0xff]
        %v304 = vld [vmem:[#allocation2 + $0x238] sm:$0xff]
        %v305 = vld [vmem:[#allocation2 + $0x240] sm:$0xff]
        %v306 = vld [vmem:[#allocation2 + $0x248] sm:$0xff]
        %v307 = vld [vmem:[#allocation2 + $0x250] sm:$0xff]
        %v308 = vld [vmem:[#allocation2 + $0x258] sm:$0xff]
        %v309 = vld [vmem:[#allocation2 + $0x260] sm:$0xff]
        %v310 = vld [vmem:[#allocation2 + $0x268] sm:$0xff]
        %v311 = vld [vmem:[#allocation2 + $0x270] sm:$0xff]
        %v312 = vld [vmem:[#allocation2 + $0x278] sm:$0xff]
        %v313 = vld [vmem:[#allocation2 + $0x280] sm:$0xff]
        %v314 = vld [vmem:[#allocation2 + $0x288] sm:$0xff]
        %v315 = vld [vmem:[#allocation2 + $0x290] sm:$0xff]
        %v316 = vld [vmem:[#allocation2 + $0x298] sm:$0xff]
        %v317 = vld [vmem:[#allocation2 + $0x2a0] sm:$0xff]
        %v318 = vld [vmem:[#allocation2 + $0x2a8] sm:$0xff]
        %v319 = vld [vmem:[#allocation2 + $0x2b0] sm:$0xff]
        %v320 = vld [vmem:[#allocation2 + $0x2b8] sm:$0xff]
        %v321 = vld [vmem:[#allocation2 + $0x2c0] sm:$0xff]
        %v322 = vld [vmem:[#allocation2 + $0x2c8] sm:$0xff]
        %v323 = vld [vmem:[#allocation2 + $0x2d0] sm:$0xff]
        %v324 = vld [vmem:[#allocation2 + $0x2d8] sm:$0xff]
        %v325 = vld [vmem:[#allocation2 + $0x2e0] sm:$0xff]
        %v326 = vld [vmem:[#allocation2 + $0x2e8] sm:$0xff]
        %v327 = vld [vmem:[#allocation2 + $0x2f0] sm:$0xff]
        %v328 = vld [vmem:[#allocation2 + $0x2f8] sm:$0xff]
        %v329 = vld [vmem:[#allocation2 + $0x300] sm:$0xff]
        %v330 = vld [vmem:[#allocation2 + $0x308] sm:$0xff]
        %v331 = vld [vmem:[#allocation2 + $0x310] sm:$0xff]
        %v332 = vld [vmem:[#allocation2 + $0x318] sm:$0xff]
        %v333 = vld [vmem:[#allocation2 + $0x320] sm:$0xff]
        %v334 = vld [vmem:[#allocation2 + $0x328] sm:$0xff]
        %v335 = vld [vmem:[#allocation2 + $0x330] sm:$0xff]
        %v336 = vld [vmem:[#allocation2 + $0x338] sm:$0xff]
        %v337 = vld [vmem:[#allocation2 + $0x340] sm:$0xff]
        %v338 = vld [vmem:[#allocation2 + $0x348] sm:$0xff]
        %v339 = vld [vmem:[#allocation2 + $0x350] sm:$0xff]
        %v340 = vld [vmem:[#allocation2 + $0x358] sm:$0xff]
        %v341 = vld [vmem:[#allocation2 + $0x360] sm:$0xff]
        %v342 = vld [vmem:[#allocation2 + $0x368] sm:$0xff]
        %v343 = vld [vmem:[#allocation2 + $0x370] sm:$0xff]
        %v344 = vld [vmem:[#allocation2 + $0x378] sm:$0xff]
        %v345 = vld [vmem:[#allocation2 + $0x380] sm:$0xff]
        %v346 = vld [vmem:[#allocation2 + $0x388] sm:$0xff]
        %v347 = vld [vmem:[#allocation2 + $0x390] sm:$0xff]
        %v348 = vld [vmem:[#allocation2 + $0x398] sm:$0xff]
        %v349 = vld [vmem:[#allocation2 + $0x3a0] sm:$0xff]
        %v350 = vld [vmem:[#allocation2 + $0x3a8] sm:$0xff]
        %v351 = vld [vmem:[#allocation2 + $0x3b0] sm:$0xff]
        %v352 = vld [vmem:[#allocation2 + $0x3b8] sm:$0xff]
        %v353 = vld [vmem:[#allocation2 + $0x3c0] sm:$0xff]
        %v354 = vld [vmem:[#allocation2 + $0x3c8] sm:$0xff]
        %v355 = vld [vmem:[#allocation2 + $0x3d0] sm:$0xff]
        %v356 = vld [vmem:[#allocation2 + $0x3d8] sm:$0xff]
        %v357 = vld [vmem:[#allocation2 + $0x3e0] sm:$0xff]
        %v358 = vld [vmem:[#allocation2 + $0x3e8] sm:$0xff]
        %v359 = vld [vmem:[#allocation2 + $0x3f0] sm:$0xff]
        %v360 = vld [vmem:[#allocation2 + $0x3f8] sm:$0xff]
        %v361 = vld [vmem:[%s3] sm:$0xff]
        %v362 = vld [vmem:[%s3 + $0x8] sm:$0xff]
        %v363 = vld [vmem:[%s3 + $0x10] sm:$0xff]
        %v364 = vld [vmem:[%s3 + $0x18] sm:$0xff]
        %v365 = vld [vmem:[%s232] sm:$0xff]
        %v366 = vld [vmem:[%s232 + $0x8] sm:$0xff]
        %v367 = vld [vmem:[%s232 + $0x10] sm:$0xff]
        %v368 = vld [vmem:[%s232 + $0x18] sm:$0xff]
        %v369 = vld [vmem:[%s232 + $0x20] sm:$0x7]
        %vm375 = vcmask 1046528
        %v376 = vrot.slane %v365, 1
        %v377 = vrot.slane %v366, 1
        %v378 = vsel %vm375, %v376, %v377
        %v379 = vrot.slane %v367, 1
        %v380 = vsel %vm375, %v377, %v379
        %v381 = vrot.slane %v368, 1
        %v382 = vsel %vm375, %v379, %v381
        %v383 = vrot.slane %v369, 1
        %v384 = vsel %vm375, %v381, %v383
        %vm389 = vcmask 1045504
        %v390 = vrot.slane %v365, 2
        %v391 = vrot.slane %v366, 2
        %v392 = vsel %vm389, %v390, %v391
        %v393 = vrot.slane %v367, 2
        %v394 = vsel %vm389, %v391, %v393
        %v395 = vrot.slane %v368, 2
        %v396 = vsel %vm389, %v393, %v395
        %v397 = vrot.slane %v369, 2
        %v398 = vsel %vm389, %v395, %v397
        %vm403 = vcmask 1044480
        %v404 = vrot.slane %v365, 3
        %v405 = vrot.slane %v366, 3
        %v406 = vsel %vm403, %v404, %v405
        %v407 = vrot.slane %v367, 3
        %v408 = vsel %vm403, %v405, %v407
        %v409 = vrot.slane %v368, 3
        %v410 = vsel %vm403, %v407, %v409
        %v411 = vrot.slane %v369, 3
        %v412 = vsel %vm403, %v409, %v411
        %v417 = vld [vmem:[%s227] sm:$0xff]
        %v418 = vld [vmem:[%s227 + $0x8] sm:$0xff]
        %v419 = vld [vmem:[%s227 + $0x10] sm:$0xff]
        %v420 = vld [vmem:[%s227 + $0x18] sm:$0xff]
        %v421 = vld [vmem:[%s227 + $0x20] sm:$0x7]
        %v427 = vrot.slane %v417, 1
        %v428 = vrot.slane %v418, 1
        %v429 = vsel %vm375, %v427, %v428
        %v430 = vrot.slane %v419, 1
        %v431 = vsel %vm375, %v428, %v430
        %v432 = vrot.slane %v420, 1
        %v433 = vsel %vm375, %v430, %v432
        %v434 = vrot.slane %v421, 1
        %v435 = vsel %vm375, %v432, %v434
        %v440 = vrot.slane %v417, 2
        %v441 = vrot.slane %v418, 2
        %v442 = vsel %vm389, %v440, %v441
        %v443 = vrot.slane %v419, 2
        %v444 = vsel %vm389, %v441, %v443
        %v445 = vrot.slane %v420, 2
        %v446 = vsel %vm389, %v443, %v445
        %v447 = vrot.slane %v421, 2
        %v448 = vsel %vm389, %v445, %v447
        %v453 = vrot.slane %v417, 3
        %v454 = vrot.slane %v418, 3
        %v455 = vsel %vm403, %v453, %v454
        %v456 = vrot.slane %v419, 3
        %v457 = vsel %vm403, %v454, %v456
        %v458 = vrot.slane %v420, 3
        %v459 = vsel %vm403, %v456, %v458
        %v460 = vrot.slane %v421, 3
        %v461 = vsel %vm403, %v458, %v460
        %v466 = vpack.c.bf16 %v366, %v365
        %v467 = vpack.c.bf16 %v380, %v378
        %v468 = vpack.c.bf16 %v394, %v392
        %v469 = vpack.c.bf16 %v408, %v406
        %v470 = vpack.c.bf16 %v368, %v367
        %v471 = vpack.c.bf16 %v384, %v382
        %v472 = vpack.c.bf16 %v398, %v396
        %v473 = vpack.c.bf16 %v412, %v410
        %v474 = vpack.c.bf16 %v418, %v417
        %v475 = vpack.c.bf16 %v431, %v429
        %v476 = vpack.c.bf16 %v444, %v442
        %v477 = vpack.c.bf16 %v457, %v455
        %v478 = vpack.c.bf16 %v420, %v419
        %v479 = vpack.c.bf16 %v435, %v433
        %v480 = vpack.c.bf16 %v448, %v446
        %v481 = vpack.c.bf16 %v461, %v459
        %v610 = vunpack.c.l.b16 %v233
        %v611 = vunpack.c.h.b16 %v233
        %v612 = vunpack.c.l.b16 %v234
        %v613 = vunpack.c.h.b16 %v234
        %v614 = vunpack.c.l.b16 %v235
        %v615 = vunpack.c.h.b16 %v235
        %v616 = vunpack.c.l.b16 %v236
        %v617 = vunpack.c.h.b16 %v236
        %v618 = vunpack.c.l.b16 %v237
        %v619 = vunpack.c.h.b16 %v237
        %v620 = vunpack.c.l.b16 %v238
        %v621 = vunpack.c.h.b16 %v238
        %v622 = vunpack.c.l.b16 %v239
        %v623 = vunpack.c.h.b16 %v239
        %v624 = vunpack.c.l.b16 %v240
        %v625 = vunpack.c.h.b16 %v240
        %v626 = vunpack.c.l.b16 %v241
        %v627 = vunpack.c.h.b16 %v241
        %v628 = vunpack.c.l.b16 %v242
        %v629 = vunpack.c.h.b16 %v242
        %v630 = vunpack.c.l.b16 %v243
        %v631 = vunpack.c.h.b16 %v243
        %v632 = vunpack.c.l.b16 %v244
        %v633 = vunpack.c.h.b16 %v244
        %v634 = vunpack.c.l.b16 %v245
        %v635 = vunpack.c.h.b16 %v245
        %v636 = vunpack.c.l.b16 %v246
        %v637 = vunpack.c.h.b16 %v246
        %v638 = vunpack.c.l.b16 %v247
        %v639 = vunpack.c.h.b16 %v247
        %v640 = vunpack.c.l.b16 %v248
        %v641 = vunpack.c.h.b16 %v248
        %v642 = vunpack.c.l.b16 %v249
        %v643 = vunpack.c.h.b16 %v249
        %v644 = vunpack.c.l.b16 %v250
        %v645 = vunpack.c.h.b16 %v250
        %v646 = vunpack.c.l.b16 %v251
        %v647 = vunpack.c.h.b16 %v251
        %v648 = vunpack.c.l.b16 %v252
        %v649 = vunpack.c.h.b16 %v252
        %v650 = vunpack.c.l.b16 %v253
        %v651 = vunpack.c.h.b16 %v253
        %v652 = vunpack.c.l.b16 %v254
        %v653 = vunpack.c.h.b16 %v254
        %v654 = vunpack.c.l.b16 %v255
        %v655 = vunpack.c.h.b16 %v255
        %v656 = vunpack.c.l.b16 %v256
        %v657 = vunpack.c.h.b16 %v256
        %v658 = vunpack.c.l.b16 %v257
        %v659 = vunpack.c.h.b16 %v257
        %v660 = vunpack.c.l.b16 %v258
        %v661 = vunpack.c.h.b16 %v258
        %v662 = vunpack.c.l.b16 %v259
        %v663 = vunpack.c.h.b16 %v259
        %v664 = vunpack.c.l.b16 %v260
        %v665 = vunpack.c.h.b16 %v260
        %v666 = vunpack.c.l.b16 %v261
        %v667 = vunpack.c.h.b16 %v261
        %v668 = vunpack.c.l.b16 %v262
        %v669 = vunpack.c.h.b16 %v262
        %v670 = vunpack.c.l.b16 %v263
        %v671 = vunpack.c.h.b16 %v263
        %v672 = vunpack.c.l.b16 %v264
        %v673 = vunpack.c.h.b16 %v264
        %v674 = vunpack.c.l.b16 %v265
        %v675 = vunpack.c.h.b16 %v265
        %v676 = vunpack.c.l.b16 %v266
        %v677 = vunpack.c.h.b16 %v266
        %v678 = vunpack.c.l.b16 %v267
        %v679 = vunpack.c.h.b16 %v267
        %v680 = vunpack.c.l.b16 %v268
        %v681 = vunpack.c.h.b16 %v268
        %v682 = vunpack.c.l.b16 %v269
        %v683 = vunpack.c.h.b16 %v269
        %v684 = vunpack.c.l.b16 %v270
        %v685 = vunpack.c.h.b16 %v270
        %v686 = vunpack.c.l.b16 %v271
        %v687 = vunpack.c.h.b16 %v271
        %v688 = vunpack.c.l.b16 %v272
        %v689 = vunpack.c.h.b16 %v272
        %v690 = vunpack.c.l.b16 %v273
        %v691 = vunpack.c.h.b16 %v273
        %v692 = vunpack.c.l.b16 %v274
        %v693 = vunpack.c.h.b16 %v274
        %v694 = vunpack.c.l.b16 %v275
        %v695 = vunpack.c.h.b16 %v275
        %v696 = vunpack.c.l.b16 %v276
        %v697 = vunpack.c.h.b16 %v276
        %v698 = vunpack.c.l.b16 %v277
        %v699 = vunpack.c.h.b16 %v277
        %v700 = vunpack.c.l.b16 %v278
        %v701 = vunpack.c.h.b16 %v278
        %v702 = vunpack.c.l.b16 %v279
        %v703 = vunpack.c.h.b16 %v279
        %v704 = vunpack.c.l.b16 %v280
        %v705 = vunpack.c.h.b16 %v280
        %v706 = vunpack.c.l.b16 %v281
        %v707 = vunpack.c.h.b16 %v281
        %v708 = vunpack.c.l.b16 %v282
        %v709 = vunpack.c.h.b16 %v282
        %v710 = vunpack.c.l.b16 %v283
        %v711 = vunpack.c.h.b16 %v283
        %v712 = vunpack.c.l.b16 %v284
        %v713 = vunpack.c.h.b16 %v284
        %v714 = vunpack.c.l.b16 %v285
        %v715 = vunpack.c.h.b16 %v285
        %v716 = vunpack.c.l.b16 %v286
        %v717 = vunpack.c.h.b16 %v286
        %v718 = vunpack.c.l.b16 %v287
        %v719 = vunpack.c.h.b16 %v287
        %v720 = vunpack.c.l.b16 %v288
        %v721 = vunpack.c.h.b16 %v288
        %v722 = vunpack.c.l.b16 %v289
        %v723 = vunpack.c.h.b16 %v289
        %v724 = vunpack.c.l.b16 %v290
        %v725 = vunpack.c.h.b16 %v290
        %v726 = vunpack.c.l.b16 %v291
        %v727 = vunpack.c.h.b16 %v291
        %v728 = vunpack.c.l.b16 %v292
        %v729 = vunpack.c.h.b16 %v292
        %v730 = vunpack.c.l.b16 %v293
        %v731 = vunpack.c.h.b16 %v293
        %v732 = vunpack.c.l.b16 %v294
        %v733 = vunpack.c.h.b16 %v294
        %v734 = vunpack.c.l.b16 %v295
        %v735 = vunpack.c.h.b16 %v295
        %v736 = vunpack.c.l.b16 %v296
        %v737 = vunpack.c.h.b16 %v296
        %v738 = vunpack.c.l.b16 %v297
        %v739 = vunpack.c.h.b16 %v297
        %v740 = vunpack.c.l.b16 %v298
        %v741 = vunpack.c.h.b16 %v298
        %v742 = vunpack.c.l.b16 %v299
        %v743 = vunpack.c.h.b16 %v299
        %v744 = vunpack.c.l.b16 %v300
        %v745 = vunpack.c.h.b16 %v300
        %v746 = vunpack.c.l.b16 %v301
        %v747 = vunpack.c.h.b16 %v301
        %v748 = vunpack.c.l.b16 %v302
        %v749 = vunpack.c.h.b16 %v302
        %v750 = vunpack.c.l.b16 %v303
        %v751 = vunpack.c.h.b16 %v303
        %v752 = vunpack.c.l.b16 %v304
        %v753 = vunpack.c.h.b16 %v304
        %v754 = vunpack.c.l.b16 %v305
        %v755 = vunpack.c.h.b16 %v305
        %v756 = vunpack.c.l.b16 %v306
        %v757 = vunpack.c.h.b16 %v306
        %v758 = vunpack.c.l.b16 %v307
        %v759 = vunpack.c.h.b16 %v307
        %v760 = vunpack.c.l.b16 %v308
        %v761 = vunpack.c.h.b16 %v308
        %v762 = vunpack.c.l.b16 %v309
        %v763 = vunpack.c.h.b16 %v309
        %v764 = vunpack.c.l.b16 %v310
        %v765 = vunpack.c.h.b16 %v310
        %v766 = vunpack.c.l.b16 %v311
        %v767 = vunpack.c.h.b16 %v311
        %v768 = vunpack.c.l.b16 %v312
        %v769 = vunpack.c.h.b16 %v312
        %v770 = vunpack.c.l.b16 %v313
        %v771 = vunpack.c.h.b16 %v313
        %v772 = vunpack.c.l.b16 %v314
        %v773 = vunpack.c.h.b16 %v314
        %v774 = vunpack.c.l.b16 %v315
        %v775 = vunpack.c.h.b16 %v315
        %v776 = vunpack.c.l.b16 %v316
        %v777 = vunpack.c.h.b16 %v316
        %v778 = vunpack.c.l.b16 %v317
        %v779 = vunpack.c.h.b16 %v317
        %v780 = vunpack.c.l.b16 %v318
        %v781 = vunpack.c.h.b16 %v318
        %v782 = vunpack.c.l.b16 %v319
        %v783 = vunpack.c.h.b16 %v319
        %v784 = vunpack.c.l.b16 %v320
        %v785 = vunpack.c.h.b16 %v320
        %v786 = vunpack.c.l.b16 %v321
        %v787 = vunpack.c.h.b16 %v321
        %v788 = vunpack.c.l.b16 %v322
        %v789 = vunpack.c.h.b16 %v322
        %v790 = vunpack.c.l.b16 %v323
        %v791 = vunpack.c.h.b16 %v323
        %v792 = vunpack.c.l.b16 %v324
        %v793 = vunpack.c.h.b16 %v324
        %v794 = vunpack.c.l.b16 %v325
        %v795 = vunpack.c.h.b16 %v325
        %v796 = vunpack.c.l.b16 %v326
        %v797 = vunpack.c.h.b16 %v326
        %v798 = vunpack.c.l.b16 %v327
        %v799 = vunpack.c.h.b16 %v327
        %v800 = vunpack.c.l.b16 %v328
        %v801 = vunpack.c.h.b16 %v328
        %v802 = vunpack.c.l.b16 %v329
        %v803 = vunpack.c.h.b16 %v329
        %v804 = vunpack.c.l.b16 %v330
        %v805 = vunpack.c.h.b16 %v330
        %v806 = vunpack.c.l.b16 %v331
        %v807 = vunpack.c.h.b16 %v331
        %v808 = vunpack.c.l.b16 %v332
        %v809 = vunpack.c.h.b16 %v332
        %v810 = vunpack.c.l.b16 %v333
        %v811 = vunpack.c.h.b16 %v333
        %v812 = vunpack.c.l.b16 %v334
        %v813 = vunpack.c.h.b16 %v334
        %v814 = vunpack.c.l.b16 %v335
        %v815 = vunpack.c.h.b16 %v335
        %v816 = vunpack.c.l.b16 %v336
        %v817 = vunpack.c.h.b16 %v336
        %v818 = vunpack.c.l.b16 %v337
        %v819 = vunpack.c.h.b16 %v337
        %v820 = vunpack.c.l.b16 %v338
        %v821 = vunpack.c.h.b16 %v338
        %v822 = vunpack.c.l.b16 %v339
        %v823 = vunpack.c.h.b16 %v339
        %v824 = vunpack.c.l.b16 %v340
        %v825 = vunpack.c.h.b16 %v340
        %v826 = vunpack.c.l.b16 %v341
        %v827 = vunpack.c.h.b16 %v341
        %v828 = vunpack.c.l.b16 %v342
        %v829 = vunpack.c.h.b16 %v342
        %v830 = vunpack.c.l.b16 %v343
        %v831 = vunpack.c.h.b16 %v343
        %v832 = vunpack.c.l.b16 %v344
        %v833 = vunpack.c.h.b16 %v344
        %v834 = vunpack.c.l.b16 %v345
        %v835 = vunpack.c.h.b16 %v345
        %v836 = vunpack.c.l.b16 %v346
        %v837 = vunpack.c.h.b16 %v346
        %v838 = vunpack.c.l.b16 %v347
        %v839 = vunpack.c.h.b16 %v347
        %v840 = vunpack.c.l.b16 %v348
        %v841 = vunpack.c.h.b16 %v348
        %v842 = vunpack.c.l.b16 %v349
        %v843 = vunpack.c.h.b16 %v349
        %v844 = vunpack.c.l.b16 %v350
        %v845 = vunpack.c.h.b16 %v350
        %v846 = vunpack.c.l.b16 %v351
        %v847 = vunpack.c.h.b16 %v351
        %v848 = vunpack.c.l.b16 %v352
        %v849 = vunpack.c.h.b16 %v352
        %v850 = vunpack.c.l.b16 %v353
        %v851 = vunpack.c.h.b16 %v353
        %v852 = vunpack.c.l.b16 %v354
        %v853 = vunpack.c.h.b16 %v354
        %v854 = vunpack.c.l.b16 %v355
        %v855 = vunpack.c.h.b16 %v355
        %v856 = vunpack.c.l.b16 %v356
        %v857 = vunpack.c.h.b16 %v356
        %v858 = vunpack.c.l.b16 %v357
        %v859 = vunpack.c.h.b16 %v357
        %v860 = vunpack.c.l.b16 %v358
        %v861 = vunpack.c.h.b16 %v358
        %v862 = vunpack.c.l.b16 %v359
        %v863 = vunpack.c.h.b16 %v359
        %v864 = vunpack.c.l.b16 %v360
        %v865 = vunpack.c.h.b16 %v360
        %v866 = vpack.c.b16 %v614, %v610
        %v867 = vpack.c.b16 %v615, %v611
        %v868 = vpack.c.b16 %v616, %v612
        %v869 = vpack.c.b16 %v617, %v613
        %v870 = vpack.c.b16 %v622, %v618
        %v871 = vpack.c.b16 %v623, %v619
        %v872 = vpack.c.b16 %v624, %v620
        %v873 = vpack.c.b16 %v625, %v621
        %v874 = vpack.c.b16 %v630, %v626
        %v875 = vpack.c.b16 %v631, %v627
        %v876 = vpack.c.b16 %v632, %v628
        %v877 = vpack.c.b16 %v633, %v629
        %v878 = vpack.c.b16 %v638, %v634
        %v879 = vpack.c.b16 %v639, %v635
        %v880 = vpack.c.b16 %v640, %v636
        %v881 = vpack.c.b16 %v641, %v637
        %v882 = vpack.c.b16 %v646, %v642
        %v883 = vpack.c.b16 %v647, %v643
        %v884 = vpack.c.b16 %v648, %v644
        %v885 = vpack.c.b16 %v649, %v645
        %v886 = vpack.c.b16 %v654, %v650
        %v887 = vpack.c.b16 %v655, %v651
        %v888 = vpack.c.b16 %v656, %v652
        %v889 = vpack.c.b16 %v657, %v653
        %v890 = vpack.c.b16 %v662, %v658
        %v891 = vpack.c.b16 %v663, %v659
        %v892 = vpack.c.b16 %v664, %v660
        %v893 = vpack.c.b16 %v665, %v661
        %v894 = vpack.c.b16 %v670, %v666
        %v895 = vpack.c.b16 %v671, %v667
        %v896 = vpack.c.b16 %v672, %v668
        %v897 = vpack.c.b16 %v673, %v669
        %v898 = vpack.c.b16 %v678, %v674
        %v899 = vpack.c.b16 %v679, %v675
        %v900 = vpack.c.b16 %v680, %v676
        %v901 = vpack.c.b16 %v681, %v677
        %v902 = vpack.c.b16 %v686, %v682
        %v903 = vpack.c.b16 %v687, %v683
        %v904 = vpack.c.b16 %v688, %v684
        %v905 = vpack.c.b16 %v689, %v685
        %v906 = vpack.c.b16 %v694, %v690
        %v907 = vpack.c.b16 %v695, %v691
        %v908 = vpack.c.b16 %v696, %v692
        %v909 = vpack.c.b16 %v697, %v693
        %v910 = vpack.c.b16 %v702, %v698
        %v911 = vpack.c.b16 %v703, %v699
        %v912 = vpack.c.b16 %v704, %v700
        %v913 = vpack.c.b16 %v705, %v701
        %v914 = vpack.c.b16 %v710, %v706
        %v915 = vpack.c.b16 %v711, %v707
        %v916 = vpack.c.b16 %v712, %v708
        %v917 = vpack.c.b16 %v713, %v709
        %v918 = vpack.c.b16 %v718, %v714
        %v919 = vpack.c.b16 %v719, %v715
        %v920 = vpack.c.b16 %v720, %v716
        %v921 = vpack.c.b16 %v721, %v717
        %v922 = vpack.c.b16 %v726, %v722
        %v923 = vpack.c.b16 %v727, %v723
        %v924 = vpack.c.b16 %v728, %v724
        %v925 = vpack.c.b16 %v729, %v725
        %v926 = vpack.c.b16 %v734, %v730
        %v927 = vpack.c.b16 %v735, %v731
        %v928 = vpack.c.b16 %v736, %v732
        %v929 = vpack.c.b16 %v737, %v733
        %v930 = vpack.c.b16 %v742, %v738
        %v931 = vpack.c.b16 %v743, %v739
        %v932 = vpack.c.b16 %v744, %v740
        %v933 = vpack.c.b16 %v745, %v741
        %v934 = vpack.c.b16 %v750, %v746
        %v935 = vpack.c.b16 %v751, %v747
        %v936 = vpack.c.b16 %v752, %v748
        %v937 = vpack.c.b16 %v753, %v749
        %v938 = vpack.c.b16 %v758, %v754
        %v939 = vpack.c.b16 %v759, %v755
        %v940 = vpack.c.b16 %v760, %v756
        %v941 = vpack.c.b16 %v761, %v757
        %v942 = vpack.c.b16 %v766, %v762
        %v943 = vpack.c.b16 %v767, %v763
        %v944 = vpack.c.b16 %v768, %v764
        %v945 = vpack.c.b16 %v769, %v765
        %v946 = vpack.c.b16 %v774, %v770
        %v947 = vpack.c.b16 %v775, %v771
        %v948 = vpack.c.b16 %v776, %v772
        %v949 = vpack.c.b16 %v777, %v773
        %v950 = vpack.c.b16 %v782, %v778
        %v951 = vpack.c.b16 %v783, %v779
        %v952 = vpack.c.b16 %v784, %v780
        %v953 = vpack.c.b16 %v785, %v781
        %v954 = vpack.c.b16 %v790, %v786
        %v955 = vpack.c.b16 %v791, %v787
        %v956 = vpack.c.b16 %v792, %v788
        %v957 = vpack.c.b16 %v793, %v789
        %v958 = vpack.c.b16 %v798, %v794
        %v959 = vpack.c.b16 %v799, %v795
        %v960 = vpack.c.b16 %v800, %v796
        %v961 = vpack.c.b16 %v801, %v797
        %v962 = vpack.c.b16 %v806, %v802
        %v963 = vpack.c.b16 %v807, %v803
        %v964 = vpack.c.b16 %v808, %v804
        %v965 = vpack.c.b16 %v809, %v805
        %v966 = vpack.c.b16 %v814, %v810
        %v967 = vpack.c.b16 %v815, %v811
        %v968 = vpack.c.b16 %v816, %v812
        %v969 = vpack.c.b16 %v817, %v813
        %v970 = vpack.c.b16 %v822, %v818
        %v971 = vpack.c.b16 %v823, %v819
        %v972 = vpack.c.b16 %v824, %v820
        %v973 = vpack.c.b16 %v825, %v821
        %v974 = vpack.c.b16 %v830, %v826
        %v975 = vpack.c.b16 %v831, %v827
        %v976 = vpack.c.b16 %v832, %v828
        %v977 = vpack.c.b16 %v833, %v829
        %v978 = vpack.c.b16 %v838, %v834
        %v979 = vpack.c.b16 %v839, %v835
        %v980 = vpack.c.b16 %v840, %v836
        %v981 = vpack.c.b16 %v841, %v837
        %v982 = vpack.c.b16 %v846, %v842
        %v983 = vpack.c.b16 %v847, %v843
        %v984 = vpack.c.b16 %v848, %v844
        %v985 = vpack.c.b16 %v849, %v845
        %v986 = vpack.c.b16 %v854, %v850
        %v987 = vpack.c.b16 %v855, %v851
        %v988 = vpack.c.b16 %v856, %v852
        %v989 = vpack.c.b16 %v857, %v853
        %v990 = vpack.c.b16 %v862, %v858
        %v991 = vpack.c.b16 %v863, %v859
        %v992 = vpack.c.b16 %v864, %v860
        %v993 = vpack.c.b16 %v865, %v861
        %1122 = vmatpush.bf16.msra.mxu0 %v894
        %1123 = vmatpush.bf16.msra.mxu0 %v890
        %1124 = vmatpush.bf16.msra.mxu0 %v886
        %1125 = vmatpush.bf16.msra.mxu0 %v882
        %1126 = vmatpush.bf16.msra.mxu0 %v878
        %1127 = vmatpush.bf16.msra.mxu0 %v874
        %1128 = vmatpush.bf16.msra.mxu0 %v870
        %1129 = vmatpush.bf16.msra.mxu0 %v866
        %1130 = vmatmul.bf16.gmra.mxu0 %v466
        %v1131 = vpop.f32.mrf.mxu0
        %v1132 = vadd.f32 0.0, %v1131
        %v1133 = vpop.f32.mrf.mxu0
        %v1134 = vadd.f32 0.0, %v1133
        %1135 = vmatmul.bf16.gmra.mxu0 %v470
        %v1136 = vpop.f32.mrf.mxu0
        %v1137 = vadd.f32 0.0, %v1136
        %v1138 = vpop.f32.mrf.mxu0
        %v1139 = vadd.f32 0.0, %v1138
        %1140 = vmatmul.bf16.gmra.mxu0 %v474
        %v1141 = vpop.f32.mrf.mxu0
        %v1142 = vadd.f32 0.0, %v1141
        %v1143 = vpop.f32.mrf.mxu0
        %v1144 = vadd.f32 0.0, %v1143
        %1145 = vmatmul.bf16.gmra.mxu0 %v478
        %v1146 = vpop.f32.mrf.mxu0
        %v1147 = vadd.f32 0.0, %v1146
        %v1148 = vpop.f32.mrf.mxu0
        %v1149 = vadd.f32 0.0, %v1148
        %1150 = vdwg.mxu0
        %1151 = vmatpush.bf16.msra.mxu0 %v926
        %1152 = vmatpush.bf16.msra.mxu0 %v922
        %1153 = vmatpush.bf16.msra.mxu0 %v918
        %1154 = vmatpush.bf16.msra.mxu0 %v914
        %1155 = vmatpush.bf16.msra.mxu0 %v910
        %1156 = vmatpush.bf16.msra.mxu0 %v906
        %1157 = vmatpush.bf16.msra.mxu0 %v902
        %1158 = vmatpush.bf16.msra.mxu0 %v898
        %1159 = vmatmul.bf16.gmra.mxu0 %v467
        %v1160 = vpop.f32.mrf.mxu0
        %v1161 = vadd.f32 %v1132, %v1160
        %v1162 = vpop.f32.mrf.mxu0
        %v1163 = vadd.f32 %v1134, %v1162
        %1164 = vmatmul.bf16.gmra.mxu0 %v471
        %v1165 = vpop.f32.mrf.mxu0
        %v1166 = vadd.f32 %v1137, %v1165
        %v1167 = vpop.f32.mrf.mxu0
        %v1168 = vadd.f32 %v1139, %v1167
        %1169 = vmatmul.bf16.gmra.mxu0 %v475
        %v1170 = vpop.f32.mrf.mxu0
        %v1171 = vadd.f32 %v1142, %v1170
        %v1172 = vpop.f32.mrf.mxu0
        %v1173 = vadd.f32 %v1144, %v1172
        %1174 = vmatmul.bf16.gmra.mxu0 %v479
        %v1175 = vpop.f32.mrf.mxu0
        %v1176 = vadd.f32 %v1147, %v1175
        %v1177 = vpop.f32.mrf.mxu0
        %v1178 = vadd.f32 %v1149, %v1177
        %1179 = vdwg.mxu0
        %1180 = vmatpush.bf16.msra.mxu0 %v958
        %1181 = vmatpush.bf16.msra.mxu0 %v954
        %1182 = vmatpush.bf16.msra.mxu0 %v950
        %1183 = vmatpush.bf16.msra.mxu0 %v946
        %1184 = vmatpush.bf16.msra.mxu0 %v942
        %1185 = vmatpush.bf16.msra.mxu0 %v938
        %1186 = vmatpush.bf16.msra.mxu0 %v934
        %1187 = vmatpush.bf16.msra.mxu0 %v930
        %1188 = vmatmul.bf16.gmra.mxu0 %v468
        %v1189 = vpop.f32.mrf.mxu0
        %v1190 = vadd.f32 %v1161, %v1189
        %v1191 = vpop.f32.mrf.mxu0
        %v1192 = vadd.f32 %v1163, %v1191
        %1193 = vmatmul.bf16.gmra.mxu0 %v472
        %v1194 = vpop.f32.mrf.mxu0
        %v1195 = vadd.f32 %v1166, %v1194
        %v1196 = vpop.f32.mrf.mxu0
        %v1197 = vadd.f32 %v1168, %v1196
        %1198 = vmatmul.bf16.gmra.mxu0 %v476
        %v1199 = vpop.f32.mrf.mxu0
        %v1200 = vadd.f32 %v1171, %v1199
        %v1201 = vpop.f32.mrf.mxu0
        %v1202 = vadd.f32 %v1173, %v1201
        %1203 = vmatmul.bf16.gmra.mxu0 %v480
        %v1204 = vpop.f32.mrf.mxu0
        %v1205 = vadd.f32 %v1176, %v1204
        %v1206 = vpop.f32.mrf.mxu0
        %v1207 = vadd.f32 %v1178, %v1206
        %1208 = vdwg.mxu0
        %1209 = vmatpush.bf16.msra.mxu0 %v990
        %1210 = vmatpush.bf16.msra.mxu0 %v986
        %1211 = vmatpush.bf16.msra.mxu0 %v982
        %1212 = vmatpush.bf16.msra.mxu0 %v978
        %1213 = vmatpush.bf16.msra.mxu0 %v974
        %1214 = vmatpush.bf16.msra.mxu0 %v970
        %1215 = vmatpush.bf16.msra.mxu0 %v966
        %1216 = vmatpush.bf16.msra.mxu0 %v962
        %1217 = vmatmul.bf16.gmra.mxu0 %v469
        %v1218 = vpop.f32.mrf.mxu0
        %v1219 = vadd.f32 %v1190, %v1218
        %v1220 = vpop.f32.mrf.mxu0
        %v1221 = vadd.f32 %v1192, %v1220
        %1222 = vmatmul.bf16.gmra.mxu0 %v473
        %v1223 = vpop.f32.mrf.mxu0
        %v1224 = vadd.f32 %v1195, %v1223
        %v1225 = vpop.f32.mrf.mxu0
        %v1226 = vadd.f32 %v1197, %v1225
        %1227 = vmatmul.bf16.gmra.mxu0 %v477
        %v1228 = vpop.f32.mrf.mxu0
        %v1229 = vadd.f32 %v1200, %v1228
        %v1230 = vpop.f32.mrf.mxu0
        %v1231 = vadd.f32 %v1202, %v1230
        %1232 = vmatmul.bf16.gmra.mxu0 %v481
        %v1233 = vpop.f32.mrf.mxu0
        %v1234 = vadd.f32 %v1205, %v1233
        %v1235 = vpop.f32.mrf.mxu0
        %v1236 = vadd.f32 %v1207, %v1235
        %1237 = vdwg.mxu0
        %1238 = vmatpush.bf16.msra.mxu0 %v895
        %1239 = vmatpush.bf16.msra.mxu0 %v891
        %1240 = vmatpush.bf16.msra.mxu0 %v887
        %1241 = vmatpush.bf16.msra.mxu0 %v883
        %1242 = vmatpush.bf16.msra.mxu0 %v879
        %1243 = vmatpush.bf16.msra.mxu0 %v875
        %1244 = vmatpush.bf16.msra.mxu0 %v871
        %1245 = vmatpush.bf16.msra.mxu0 %v867
        %1246 = vmatmul.bf16.gmra.mxu0 %v466
        %v1247 = vpop.f32.mrf.mxu0
        %v1248 = vadd.f32 0.0, %v1247
        %v1249 = vpop.f32.mrf.mxu0
        %v1250 = vadd.f32 0.0, %v1249
        %1251 = vmatmul.bf16.gmra.mxu0 %v470
        %v1252 = vpop.f32.mrf.mxu0
        %v1253 = vadd.f32 0.0, %v1252
        %v1254 = vpop.f32.mrf.mxu0
        %v1255 = vadd.f32 0.0, %v1254
        %1256 = vmatmul.bf16.gmra.mxu0 %v474
        %v1257 = vpop.f32.mrf.mxu0
        %v1258 = vadd.f32 0.0, %v1257
        %v1259 = vpop.f32.mrf.mxu0
        %v1260 = vadd.f32 0.0, %v1259
        %1261 = vmatmul.bf16.gmra.mxu0 %v478
        %v1262 = vpop.f32.mrf.mxu0
        %v1263 = vadd.f32 0.0, %v1262
        %v1264 = vpop.f32.mrf.mxu0
        %v1265 = vadd.f32 0.0, %v1264
        %1266 = vdwg.mxu0
        %1267 = vmatpush.bf16.msra.mxu0 %v927
        %1268 = vmatpush.bf16.msra.mxu0 %v923
        %1269 = vmatpush.bf16.msra.mxu0 %v919
        %1270 = vmatpush.bf16.msra.mxu0 %v915
        %1271 = vmatpush.bf16.msra.mxu0 %v911
        %1272 = vmatpush.bf16.msra.mxu0 %v907
        %1273 = vmatpush.bf16.msra.mxu0 %v903
        %1274 = vmatpush.bf16.msra.mxu0 %v899
        %1275 = vmatmul.bf16.gmra.mxu0 %v467
        %v1276 = vpop.f32.mrf.mxu0
        %v1277 = vadd.f32 %v1248, %v1276
        %v1278 = vpop.f32.mrf.mxu0
        %v1279 = vadd.f32 %v1250, %v1278
        %1280 = vmatmul.bf16.gmra.mxu0 %v471
        %v1281 = vpop.f32.mrf.mxu0
        %v1282 = vadd.f32 %v1253, %v1281
        %v1283 = vpop.f32.mrf.mxu0
        %v1284 = vadd.f32 %v1255, %v1283
        %1285 = vmatmul.bf16.gmra.mxu0 %v475
        %v1286 = vpop.f32.mrf.mxu0
        %v1287 = vadd.f32 %v1258, %v1286
        %v1288 = vpop.f32.mrf.mxu0
        %v1289 = vadd.f32 %v1260, %v1288
        %1290 = vmatmul.bf16.gmra.mxu0 %v479
        %v1291 = vpop.f32.mrf.mxu0
        %v1292 = vadd.f32 %v1263, %v1291
        %v1293 = vpop.f32.mrf.mxu0
        %v1294 = vadd.f32 %v1265, %v1293
        %1295 = vdwg.mxu0
        %1296 = vmatpush.bf16.msra.mxu0 %v959
        %1297 = vmatpush.bf16.msra.mxu0 %v955
        %1298 = vmatpush.bf16.msra.mxu0 %v951
        %1299 = vmatpush.bf16.msra.mxu0 %v947
        %1300 = vmatpush.bf16.msra.mxu0 %v943
        %1301 = vmatpush.bf16.msra.mxu0 %v939
        %1302 = vmatpush.bf16.msra.mxu0 %v935
        %1303 = vmatpush.bf16.msra.mxu0 %v931
        %1304 = vmatmul.bf16.gmra.mxu0 %v468
        %v1305 = vpop.f32.mrf.mxu0
        %v1306 = vadd.f32 %v1277, %v1305
        %v1307 = vpop.f32.mrf.mxu0
        %v1308 = vadd.f32 %v1279, %v1307
        %1309 = vmatmul.bf16.gmra.mxu0 %v472
        %v1310 = vpop.f32.mrf.mxu0
        %v1311 = vadd.f32 %v1282, %v1310
        %v1312 = vpop.f32.mrf.mxu0
        %v1313 = vadd.f32 %v1284, %v1312
        %1314 = vmatmul.bf16.gmra.mxu0 %v476
        %v1315 = vpop.f32.mrf.mxu0
        %v1316 = vadd.f32 %v1287, %v1315
        %v1317 = vpop.f32.mrf.mxu0
        %v1318 = vadd.f32 %v1289, %v1317
        %1319 = vmatmul.bf16.gmra.mxu0 %v480
        %v1320 = vpop.f32.mrf.mxu0
        %v1321 = vadd.f32 %v1292, %v1320
        %v1322 = vpop.f32.mrf.mxu0
        %v1323 = vadd.f32 %v1294, %v1322
        %1324 = vdwg.mxu0
        %1325 = vmatpush.bf16.msra.mxu0 %v991
        %1326 = vmatpush.bf16.msra.mxu0 %v987
        %1327 = vmatpush.bf16.msra.mxu0 %v983
        %1328 = vmatpush.bf16.msra.mxu0 %v979
        %1329 = vmatpush.bf16.msra.mxu0 %v975
        %1330 = vmatpush.bf16.msra.mxu0 %v971
        %1331 = vmatpush.bf16.msra.mxu0 %v967
        %1332 = vmatpush.bf16.msra.mxu0 %v963
        %1333 = vmatmul.bf16.gmra.mxu0 %v469
        %v1334 = vpop.f32.mrf.mxu0
        %v1335 = vadd.f32 %v1306, %v1334
        %v1336 = vpop.f32.mrf.mxu0
        %v1337 = vadd.f32 %v1308, %v1336
        %1338 = vmatmul.bf16.gmra.mxu0 %v473
        %v1339 = vpop.f32.mrf.mxu0
        %v1340 = vadd.f32 %v1311, %v1339
        %v1341 = vpop.f32.mrf.mxu0
        %v1342 = vadd.f32 %v1313, %v1341
        %1343 = vmatmul.bf16.gmra.mxu0 %v477
        %v1344 = vpop.f32.mrf.mxu0
        %v1345 = vadd.f32 %v1316, %v1344
        %v1346 = vpop.f32.mrf.mxu0
        %v1347 = vadd.f32 %v1318, %v1346
        %1348 = vmatmul.bf16.gmra.mxu0 %v481
        %v1349 = vpop.f32.mrf.mxu0
        %v1350 = vadd.f32 %v1321, %v1349
        %v1351 = vpop.f32.mrf.mxu0
        %v1352 = vadd.f32 %v1323, %v1351
        %1353 = vdwg.mxu0
        %1354 = vmatpush.bf16.msra.mxu0 %v896
        %1355 = vmatpush.bf16.msra.mxu0 %v892
        %1356 = vmatpush.bf16.msra.mxu0 %v888
        %1357 = vmatpush.bf16.msra.mxu0 %v884
        %1358 = vmatpush.bf16.msra.mxu0 %v880
        %1359 = vmatpush.bf16.msra.mxu0 %v876
        %1360 = vmatpush.bf16.msra.mxu0 %v872
        %1361 = vmatpush.bf16.msra.mxu0 %v868
        %1362 = vmatmul.bf16.gmra.mxu0 %v466
        %v1363 = vpop.f32.mrf.mxu0
        %v1364 = vadd.f32 0.0, %v1363
        %v1365 = vpop.f32.mrf.mxu0
        %v1366 = vadd.f32 0.0, %v1365
        %1367 = vmatmul.bf16.gmra.mxu0 %v470
        %v1368 = vpop.f32.mrf.mxu0
        %v1369 = vadd.f32 0.0, %v1368
        %v1370 = vpop.f32.mrf.mxu0
        %v1371 = vadd.f32 0.0, %v1370
        %1372 = vmatmul.bf16.gmra.mxu0 %v474
        %v1373 = vpop.f32.mrf.mxu0
        %v1374 = vadd.f32 0.0, %v1373
        %v1375 = vpop.f32.mrf.mxu0
        %v1376 = vadd.f32 0.0, %v1375
        %1377 = vmatmul.bf16.gmra.mxu0 %v478
        %v1378 = vpop.f32.mrf.mxu0
        %v1379 = vadd.f32 0.0, %v1378
        %v1380 = vpop.f32.mrf.mxu0
        %v1381 = vadd.f32 0.0, %v1380
        %1382 = vdwg.mxu0
        %1383 = vmatpush.bf16.msra.mxu0 %v928
        %1384 = vmatpush.bf16.msra.mxu0 %v924
        %1385 = vmatpush.bf16.msra.mxu0 %v920
        %1386 = vmatpush.bf16.msra.mxu0 %v916
        %1387 = vmatpush.bf16.msra.mxu0 %v912
        %1388 = vmatpush.bf16.msra.mxu0 %v908
        %1389 = vmatpush.bf16.msra.mxu0 %v904
        %1390 = vmatpush.bf16.msra.mxu0 %v900
        %1391 = vmatmul.bf16.gmra.mxu0 %v467
        %v1392 = vpop.f32.mrf.mxu0
        %v1393 = vadd.f32 %v1364, %v1392
        %v1394 = vpop.f32.mrf.mxu0
        %v1395 = vadd.f32 %v1366, %v1394
        %1396 = vmatmul.bf16.gmra.mxu0 %v471
        %v1397 = vpop.f32.mrf.mxu0
        %v1398 = vadd.f32 %v1369, %v1397
        %v1399 = vpop.f32.mrf.mxu0
        %v1400 = vadd.f32 %v1371, %v1399
        %1401 = vmatmul.bf16.gmra.mxu0 %v475
        %v1402 = vpop.f32.mrf.mxu0
        %v1403 = vadd.f32 %v1374, %v1402
        %v1404 = vpop.f32.mrf.mxu0
        %v1405 = vadd.f32 %v1376, %v1404
        %1406 = vmatmul.bf16.gmra.mxu0 %v479
        %v1407 = vpop.f32.mrf.mxu0
        %v1408 = vadd.f32 %v1379, %v1407
        %v1409 = vpop.f32.mrf.mxu0
        %v1410 = vadd.f32 %v1381, %v1409
        %1411 = vdwg.mxu0
        %1412 = vmatpush.bf16.msra.mxu0 %v960
        %1413 = vmatpush.bf16.msra.mxu0 %v956
        %1414 = vmatpush.bf16.msra.mxu0 %v952
        %1415 = vmatpush.bf16.msra.mxu0 %v948
        %1416 = vmatpush.bf16.msra.mxu0 %v944
        %1417 = vmatpush.bf16.msra.mxu0 %v940
        %1418 = vmatpush.bf16.msra.mxu0 %v936
        %1419 = vmatpush.bf16.msra.mxu0 %v932
        %1420 = vmatmul.bf16.gmra.mxu0 %v468
        %v1421 = vpop.f32.mrf.mxu0
        %v1422 = vadd.f32 %v1393, %v1421
        %v1423 = vpop.f32.mrf.mxu0
        %v1424 = vadd.f32 %v1395, %v1423
        %1425 = vmatmul.bf16.gmra.mxu0 %v472
        %v1426 = vpop.f32.mrf.mxu0
        %v1427 = vadd.f32 %v1398, %v1426
        %v1428 = vpop.f32.mrf.mxu0
        %v1429 = vadd.f32 %v1400, %v1428
        %1430 = vmatmul.bf16.gmra.mxu0 %v476
        %v1431 = vpop.f32.mrf.mxu0
        %v1432 = vadd.f32 %v1403, %v1431
        %v1433 = vpop.f32.mrf.mxu0
        %v1434 = vadd.f32 %v1405, %v1433
        %1435 = vmatmul.bf16.gmra.mxu0 %v480
        %v1436 = vpop.f32.mrf.mxu0
        %v1437 = vadd.f32 %v1408, %v1436
        %v1438 = vpop.f32.mrf.mxu0
        %v1439 = vadd.f32 %v1410, %v1438
        %1440 = vdwg.mxu0
        %1441 = vmatpush.bf16.msra.mxu0 %v992
        %1442 = vmatpush.bf16.msra.mxu0 %v988
        %1443 = vmatpush.bf16.msra.mxu0 %v984
        %1444 = vmatpush.bf16.msra.mxu0 %v980
        %1445 = vmatpush.bf16.msra.mxu0 %v976
        %1446 = vmatpush.bf16.msra.mxu0 %v972
        %1447 = vmatpush.bf16.msra.mxu0 %v968
        %1448 = vmatpush.bf16.msra.mxu0 %v964
        %1449 = vmatmul.bf16.gmra.mxu0 %v469
        %v1450 = vpop.f32.mrf.mxu0
        %v1451 = vadd.f32 %v1422, %v1450
        %v1452 = vpop.f32.mrf.mxu0
        %v1453 = vadd.f32 %v1424, %v1452
        %1454 = vmatmul.bf16.gmra.mxu0 %v473
        %v1455 = vpop.f32.mrf.mxu0
        %v1456 = vadd.f32 %v1427, %v1455
        %v1457 = vpop.f32.mrf.mxu0
        %v1458 = vadd.f32 %v1429, %v1457
        %1459 = vmatmul.bf16.gmra.mxu0 %v477
        %v1460 = vpop.f32.mrf.mxu0
        %v1461 = vadd.f32 %v1432, %v1460
        %v1462 = vpop.f32.mrf.mxu0
        %v1463 = vadd.f32 %v1434, %v1462
        %1464 = vmatmul.bf16.gmra.mxu0 %v481
        %v1465 = vpop.f32.mrf.mxu0
        %v1466 = vadd.f32 %v1437, %v1465
        %v1467 = vpop.f32.mrf.mxu0
        %v1468 = vadd.f32 %v1439, %v1467
        %1469 = vdwg.mxu0
        %1470 = vmatpush.bf16.msra.mxu0 %v897
        %1471 = vmatpush.bf16.msra.mxu0 %v893
        %1472 = vmatpush.bf16.msra.mxu0 %v889
        %1473 = vmatpush.bf16.msra.mxu0 %v885
        %1474 = vmatpush.bf16.msra.mxu0 %v881
        %1475 = vmatpush.bf16.msra.mxu0 %v877
        %1476 = vmatpush.bf16.msra.mxu0 %v873
        %1477 = vmatpush.bf16.msra.mxu0 %v869
        %1478 = vmatmul.bf16.gmra.mxu0 %v466
        %v1479 = vpop.f32.mrf.mxu0
        %v1480 = vadd.f32 0.0, %v1479
        %v1481 = vpop.f32.mrf.mxu0
        %v1482 = vadd.f32 0.0, %v1481
        %1483 = vmatmul.bf16.gmra.mxu0 %v470
        %v1484 = vpop.f32.mrf.mxu0
        %v1485 = vadd.f32 0.0, %v1484
        %v1486 = vpop.f32.mrf.mxu0
        %v1487 = vadd.f32 0.0, %v1486
        %1488 = vmatmul.bf16.gmra.mxu0 %v474
        %v1489 = vpop.f32.mrf.mxu0
        %v1490 = vadd.f32 0.0, %v1489
        %v1491 = vpop.f32.mrf.mxu0
        %v1492 = vadd.f32 0.0, %v1491
        %1493 = vmatmul.bf16.gmra.mxu0 %v478
        %v1494 = vpop.f32.mrf.mxu0
        %v1495 = vadd.f32 0.0, %v1494
        %v1496 = vpop.f32.mrf.mxu0
        %v1497 = vadd.f32 0.0, %v1496
        %1498 = vdwg.mxu0
        %1499 = vmatpush.bf16.msra.mxu0 %v929
        %1500 = vmatpush.bf16.msra.mxu0 %v925
        %1501 = vmatpush.bf16.msra.mxu0 %v921
        %1502 = vmatpush.bf16.msra.mxu0 %v917
        %1503 = vmatpush.bf16.msra.mxu0 %v913
        %1504 = vmatpush.bf16.msra.mxu0 %v909
        %1505 = vmatpush.bf16.msra.mxu0 %v905
        %1506 = vmatpush.bf16.msra.mxu0 %v901
        %1507 = vmatmul.bf16.gmra.mxu0 %v467
        %v1508 = vpop.f32.mrf.mxu0
        %v1509 = vadd.f32 %v1480, %v1508
        %v1510 = vpop.f32.mrf.mxu0
        %v1511 = vadd.f32 %v1482, %v1510
        %1512 = vmatmul.bf16.gmra.mxu0 %v471
        %v1513 = vpop.f32.mrf.mxu0
        %v1514 = vadd.f32 %v1485, %v1513
        %v1515 = vpop.f32.mrf.mxu0
        %v1516 = vadd.f32 %v1487, %v1515
        %1517 = vmatmul.bf16.gmra.mxu0 %v475
        %v1518 = vpop.f32.mrf.mxu0
        %v1519 = vadd.f32 %v1490, %v1518
        %v1520 = vpop.f32.mrf.mxu0
        %v1521 = vadd.f32 %v1492, %v1520
        %1522 = vmatmul.bf16.gmra.mxu0 %v479
        %v1523 = vpop.f32.mrf.mxu0
        %v1524 = vadd.f32 %v1495, %v1523
        %v1525 = vpop.f32.mrf.mxu0
        %v1526 = vadd.f32 %v1497, %v1525
        %1527 = vdwg.mxu0
        %1528 = vmatpush.bf16.msra.mxu0 %v961
        %1529 = vmatpush.bf16.msra.mxu0 %v957
        %1530 = vmatpush.bf16.msra.mxu0 %v953
        %1531 = vmatpush.bf16.msra.mxu0 %v949
        %1532 = vmatpush.bf16.msra.mxu0 %v945
        %1533 = vmatpush.bf16.msra.mxu0 %v941
        %1534 = vmatpush.bf16.msra.mxu0 %v937
        %1535 = vmatpush.bf16.msra.mxu0 %v933
        %1536 = vmatmul.bf16.gmra.mxu0 %v468
        %v1537 = vpop.f32.mrf.mxu0
        %v1538 = vadd.f32 %v1509, %v1537
        %v1539 = vpop.f32.mrf.mxu0
        %v1540 = vadd.f32 %v1511, %v1539
        %1541 = vmatmul.bf16.gmra.mxu0 %v472
        %v1542 = vpop.f32.mrf.mxu0
        %v1543 = vadd.f32 %v1514, %v1542
        %v1544 = vpop.f32.mrf.mxu0
        %v1545 = vadd.f32 %v1516, %v1544
        %1546 = vmatmul.bf16.gmra.mxu0 %v476
        %v1547 = vpop.f32.mrf.mxu0
        %v1548 = vadd.f32 %v1519, %v1547
        %v1549 = vpop.f32.mrf.mxu0
        %v1550 = vadd.f32 %v1521, %v1549
        %1551 = vmatmul.bf16.gmra.mxu0 %v480
        %v1552 = vpop.f32.mrf.mxu0
        %v1553 = vadd.f32 %v1524, %v1552
        %v1554 = vpop.f32.mrf.mxu0
        %v1555 = vadd.f32 %v1526, %v1554
        %1556 = vdwg.mxu0
        %1557 = vmatpush.bf16.msra.mxu0 %v993
        %1558 = vmatpush.bf16.msra.mxu0 %v989
        %1559 = vmatpush.bf16.msra.mxu0 %v985
        %1560 = vmatpush.bf16.msra.mxu0 %v981
        %1561 = vmatpush.bf16.msra.mxu0 %v977
        %1562 = vmatpush.bf16.msra.mxu0 %v973
        %1563 = vmatpush.bf16.msra.mxu0 %v969
        %1564 = vmatpush.bf16.msra.mxu0 %v965
        %1565 = vmatmul.bf16.gmra.mxu0 %v469
        %v1566 = vpop.f32.mrf.mxu0
        %v1567 = vadd.f32 %v1538, %v1566
        %v1568 = vpop.f32.mrf.mxu0
        %v1569 = vadd.f32 %v1540, %v1568
        %1570 = vmatmul.bf16.gmra.mxu0 %v473
        %v1571 = vpop.f32.mrf.mxu0
        %v1572 = vadd.f32 %v1543, %v1571
        %v1573 = vpop.f32.mrf.mxu0
        %v1574 = vadd.f32 %v1545, %v1573
        %1575 = vmatmul.bf16.gmra.mxu0 %v477
        %v1576 = vpop.f32.mrf.mxu0
        %v1577 = vadd.f32 %v1548, %v1576
        %v1578 = vpop.f32.mrf.mxu0
        %v1579 = vadd.f32 %v1550, %v1578
        %1580 = vmatmul.bf16.gmra.mxu0 %v481
        %v1581 = vpop.f32.mrf.mxu0
        %v1582 = vadd.f32 %v1553, %v1581
        %v1583 = vpop.f32.mrf.mxu0
        %v1584 = vadd.f32 %v1555, %v1583
        %1585 = vdwg.mxu0
        %v1586 = vmul.f32 %v1219, %v1219
        %v1587 = vmul.f32 %v1335, %v1335
        %v1588 = vmul.f32 %v1221, %v1221
        %v1589 = vmul.f32 %v1337, %v1337
        %v1590 = vmul.f32 %v1224, %v1224
        %v1591 = vmul.f32 %v1340, %v1340
        %v1592 = vmul.f32 %v1226, %v1226
        %v1593 = vmul.f32 %v1342, %v1342
        %v1594 = vmul.f32 %v1229, %v1229
        %v1595 = vmul.f32 %v1345, %v1345
        %v1596 = vmul.f32 %v1231, %v1231
        %v1597 = vmul.f32 %v1347, %v1347
        %v1598 = vmul.f32 %v1234, %v1234
        %v1599 = vmul.f32 %v1350, %v1350
        %v1600 = vmul.f32 %v1236, %v1236
        %v1601 = vmul.f32 %v1352, %v1352
        %v1602 = vmul.f32 %v1451, %v1451
        %v1603 = vmul.f32 %v1567, %v1567
        %v1604 = vmul.f32 %v1453, %v1453
        %v1605 = vmul.f32 %v1569, %v1569
        %v1606 = vmul.f32 %v1456, %v1456
        %v1607 = vmul.f32 %v1572, %v1572
        %v1608 = vmul.f32 %v1458, %v1458
        %v1609 = vmul.f32 %v1574, %v1574
        %v1610 = vmul.f32 %v1461, %v1461
        %v1611 = vmul.f32 %v1577, %v1577
        %v1612 = vmul.f32 %v1463, %v1463
        %v1613 = vmul.f32 %v1579, %v1579
        %v1614 = vmul.f32 %v1466, %v1466
        %v1615 = vmul.f32 %v1582, %v1582
        %v1616 = vmul.f32 %v1468, %v1468
        %v1617 = vmul.f32 %v1584, %v1584
        %v1618 = vadd.f32 %v1586, %v1602
        %v1619 = vadd.f32 %v1587, %v1603
        %v1620 = vadd.f32 %v1588, %v1604
        %v1621 = vadd.f32 %v1589, %v1605
        %v1622 = vadd.f32 %v1590, %v1606
        %v1623 = vadd.f32 %v1591, %v1607
        %v1624 = vadd.f32 %v1592, %v1608
        %v1625 = vadd.f32 %v1593, %v1609
        %v1626 = vadd.f32 %v1594, %v1610
        %v1627 = vadd.f32 %v1595, %v1611
        %v1628 = vadd.f32 %v1596, %v1612
        %v1629 = vadd.f32 %v1597, %v1613
        %v1630 = vadd.f32 %v1598, %v1614
        %v1631 = vadd.f32 %v1599, %v1615
        %v1632 = vadd.f32 %v1600, %v1616
        %v1633 = vadd.f32 %v1601, %v1617
        %1634 = vmatpush.xpose.msra.mxu0 0.0
        %1635 = vmatpush.xpose.msra.mxu0 0.0
        %1636 = vmatpush.xpose.msra.mxu0 0.0
        %1637 = vmatpush.xpose.msra.mxu0 0.0
        %1638 = vmatpush.xpose.msra.mxu0 0.0
        %1639 = vmatpush.xpose.msra.mxu0 0.0
        %1640 = vmatpush.xpose.msra.mxu0 0.0
        %1641 = vmatpush.xpose.msra.mxu0 0.0
        %1642 = vmatpush.xpose.msra.mxu0 %v1632
        %1643 = vmatpush.xpose.msra.mxu0 %v1630
        %1644 = vmatpush.xpose.msra.mxu0 %v1628
        %1645 = vmatpush.xpose.msra.mxu0 %v1626
        %1646 = vmatpush.xpose.msra.mxu0 %v1624
        %1647 = vmatpush.xpose.msra.mxu0 %v1622
        %1648 = vmatpush.xpose.msra.mxu0 %v1620
        %1649 = vmatpush.xpose.msra.mxu0 %v1618
        %1650 = vmatmul.f32.gmra.mxu0 %v361
        %v1651 = vpop.f32.mrf.mxu0
        %v1652 = vadd.f32 1e-08, %v1651
        %1653 = vmatmul.f32.gmra.mxu0 %v363
        %v1654 = vpop.f32.mrf.mxu0
        %v1655 = vadd.f32 1e-08, %v1654
        %1656 = vdwg.mxu0
        %1657 = vmatpush.xpose.msra.mxu0 0.0
        %1658 = vmatpush.xpose.msra.mxu0 0.0
        %1659 = vmatpush.xpose.msra.mxu0 0.0
        %1660 = vmatpush.xpose.msra.mxu0 0.0
        %1661 = vmatpush.xpose.msra.mxu0 0.0
        %1662 = vmatpush.xpose.msra.mxu0 0.0
        %1663 = vmatpush.xpose.msra.mxu0 0.0
        %1664 = vmatpush.xpose.msra.mxu0 0.0
        %1665 = vmatpush.xpose.msra.mxu0 %v1633
        %1666 = vmatpush.xpose.msra.mxu0 %v1631
        %1667 = vmatpush.xpose.msra.mxu0 %v1629
        %1668 = vmatpush.xpose.msra.mxu0 %v1627
        %1669 = vmatpush.xpose.msra.mxu0 %v1625
        %1670 = vmatpush.xpose.msra.mxu0 %v1623
        %1671 = vmatpush.xpose.msra.mxu0 %v1621
        %1672 = vmatpush.xpose.msra.mxu0 %v1619
        %1673 = vmatmul.f32.gmra.mxu0 %v362
        %v1674 = vpop.f32.mrf.mxu0
        %v1675 = vadd.f32 %v1652, %v1674
        %1676 = vmatmul.f32.gmra.mxu0 %v364
        %v1677 = vpop.f32.mrf.mxu0
        %v1678 = vadd.f32 %v1655, %v1677
        %1679 = vdwg.mxu0
        %v1680 = vrsqrt.pop %v1675
        %v1681 = vmul.f32 %v1680, %v1675
        %v1682 = vmul.f32 %v1681, %v1680
        %v1683 = vmul.f32 0.5, %v1682
        %v1684 = vsub.f32 1.5, %v1683
        %v1685 = vmul.f32 %v1680, %v1684
        %v1686 = vmul.f32 %v1675, %v1685
        %vm1687 = vcmp.eq.f32.partialorder %v1675, inf
        %v1688 = vsel %vm1687, %v1675, %v1686
        %vm1689 = vcmp.eq.f32.partialorder %v1675, 0.0
        %v1690 = vand.u32 %v1675, 2147483648
        %v1691 = vsel %vm1689, %v1690, %v1688
        %v1692 = vrsqrt.pop %v1678
        %v1693 = vmul.f32 %v1692, %v1678
        %v1694 = vmul.f32 %v1693, %v1692
        %v1695 = vmul.f32 0.5, %v1694
        %v1696 = vsub.f32 1.5, %v1695
        %v1697 = vmul.f32 %v1692, %v1696
        %v1698 = vmul.f32 %v1678, %v1697
        %vm1699 = vcmp.eq.f32.partialorder %v1678, inf
        %v1700 = vsel %vm1699, %v1678, %v1698
        %vm1701 = vcmp.eq.f32.partialorder %v1678, 0.0
        %v1702 = vand.u32 %v1678, 2147483648
        %v1703 = vsel %vm1701, %v1702, %v1700
        %v1704 = vadd.f32 %v1691, 0.0
        %v1705 = vadd.f32 %v1703, 0.0
        %v1706 = vmul.f32 %v1691, %v1691
        %v1707 = vmul.f32 %v1703, %v1703
        %v1708 = vadd.f32 %v1706, 0.0
        %v1709 = vadd.f32 %v1707, 0.0
        %1712 = vrot.lane.b32.xlu0 %v1691, 127
        %v1713 = vpop.permute.xlu0 %1712
        %1714 = vrot.lane.b32.xlu0 %v1703, 127
        %v1715 = vpop.permute.xlu0 %1714
        %v1718 = vadd.f32 %v1704, %v1713
        %v1719 = vadd.f32 %v1705, %v1715
        %1722 = vrot.lane.b32.xlu0 %v1706, 127
        %v1723 = vpop.permute.xlu0 %1722
        %1724 = vrot.lane.b32.xlu0 %v1707, 127
        %v1725 = vpop.permute.xlu0 %1724
        %v1728 = vadd.f32 %v1708, %v1723
        %v1729 = vadd.f32 %v1709, %v1725
        %1730 = vrot.lane.b32.xlu0 %v1691, 126
        %v1731 = vpop.permute.xlu0 %1730
        %1732 = vrot.lane.b32.xlu0 %v1703, 126
        %v1733 = vpop.permute.xlu0 %1732
        %v1736 = vadd.f32 %v1718, %v1731
        %v1737 = vadd.f32 %v1719, %v1733
        %1738 = vrot.lane.b32.xlu0 %v1706, 126
        %v1739 = vpop.permute.xlu0 %1738
        %1740 = vrot.lane.b32.xlu0 %v1707, 126
        %v1741 = vpop.permute.xlu0 %1740
        %v1744 = vadd.f32 %v1728, %v1739
        %v1745 = vadd.f32 %v1729, %v1741
        %1746 = vrot.lane.b32.xlu0 %v1691, 125
        %v1747 = vpop.permute.xlu0 %1746
        %1748 = vrot.lane.b32.xlu0 %v1703, 125
        %v1749 = vpop.permute.xlu0 %1748
        %v1752 = vadd.f32 %v1736, %v1747
        %v1753 = vadd.f32 %v1737, %v1749
        %1754 = vrot.lane.b32.xlu0 %v1706, 125
        %v1755 = vpop.permute.xlu0 %1754
        %1756 = vrot.lane.b32.xlu0 %v1707, 125
        %v1757 = vpop.permute.xlu0 %1756
        %v1760 = vadd.f32 %v1744, %v1755
        %v1761 = vadd.f32 %v1745, %v1757
        %1762 = vrot.lane.b32.xlu0 %v1691, 124
        %v1763 = vpop.permute.xlu0 %1762
        %1764 = vrot.lane.b32.xlu0 %v1703, 124
        %v1765 = vpop.permute.xlu0 %1764
        %v1768 = vadd.f32 %v1752, %v1763
        %v1769 = vadd.f32 %v1753, %v1765
        %1770 = vrot.lane.b32.xlu0 %v1706, 124
        %v1771 = vpop.permute.xlu0 %1770
        %1772 = vrot.lane.b32.xlu0 %v1707, 124
        %v1773 = vpop.permute.xlu0 %1772
        %v1776 = vadd.f32 %v1760, %v1771
        %v1777 = vadd.f32 %v1761, %v1773
        %1778 = vrot.lane.b32.xlu0 %v1691, 123
        %v1779 = vpop.permute.xlu0 %1778
        %1780 = vrot.lane.b32.xlu0 %v1703, 123
        %v1781 = vpop.permute.xlu0 %1780
        %v1784 = vadd.f32 %v1768, %v1779
        %v1785 = vadd.f32 %v1769, %v1781
        %1786 = vrot.lane.b32.xlu0 %v1706, 123
        %v1787 = vpop.permute.xlu0 %1786
        %1788 = vrot.lane.b32.xlu0 %v1707, 123
        %v1789 = vpop.permute.xlu0 %1788
        %v1792 = vadd.f32 %v1776, %v1787
        %v1793 = vadd.f32 %v1777, %v1789
        %1794 = vrot.lane.b32.xlu0 %v1691, 122
        %v1795 = vpop.permute.xlu0 %1794
        %1796 = vrot.lane.b32.xlu0 %v1703, 122
        %v1797 = vpop.permute.xlu0 %1796
        %v1800 = vadd.f32 %v1784, %v1795
        %v1801 = vadd.f32 %v1785, %v1797
        %1802 = vrot.lane.b32.xlu0 %v1706, 122
        %v1803 = vpop.permute.xlu0 %1802
        %1804 = vrot.lane.b32.xlu0 %v1707, 122
        %v1805 = vpop.permute.xlu0 %1804
        %v1808 = vadd.f32 %v1792, %v1803
        %v1809 = vadd.f32 %v1793, %v1805
        %1810 = vrot.lane.b32.xlu0 %v1691, 121
        %v1811 = vpop.permute.xlu0 %1810
        %1812 = vrot.lane.b32.xlu0 %v1703, 121
        %v1813 = vpop.permute.xlu0 %1812
        %v1816 = vadd.f32 %v1800, %v1811
        %v1817 = vadd.f32 %v1801, %v1813
        %1818 = vrot.lane.b32.xlu0 %v1706, 121
        %v1819 = vpop.permute.xlu0 %1818
        %1820 = vrot.lane.b32.xlu0 %v1707, 121
        %v1821 = vpop.permute.xlu0 %1820
        %v1824 = vadd.f32 %v1808, %v1819
        %v1825 = vadd.f32 %v1809, %v1821
        %1826 = vrot.lane.b32.xlu0 %v1691, 120
        %v1827 = vpop.permute.xlu0 %1826
        %1828 = vrot.lane.b32.xlu0 %v1703, 120
        %v1829 = vpop.permute.xlu0 %1828
        %v1832 = vadd.f32 %v1816, %v1827
        %v1833 = vadd.f32 %v1817, %v1829
        %1834 = vrot.lane.b32.xlu0 %v1706, 120
        %v1835 = vpop.permute.xlu0 %1834
        %1836 = vrot.lane.b32.xlu0 %v1707, 120
        %v1837 = vpop.permute.xlu0 %1836
        %v1840 = vadd.f32 %v1824, %v1835
        %v1841 = vadd.f32 %v1825, %v1837
        %1842 = vrot.lane.b32.xlu0 %v1691, 119
        %v1843 = vpop.permute.xlu0 %1842
        %1844 = vrot.lane.b32.xlu0 %v1703, 119
        %v1845 = vpop.permute.xlu0 %1844
        %v1848 = vadd.f32 %v1832, %v1843
        %v1849 = vadd.f32 %v1833, %v1845
        %1850 = vrot.lane.b32.xlu0 %v1706, 119
        %v1851 = vpop.permute.xlu0 %1850
        %1852 = vrot.lane.b32.xlu0 %v1707, 119
        %v1853 = vpop.permute.xlu0 %1852
        %v1856 = vadd.f32 %v1840, %v1851
        %v1857 = vadd.f32 %v1841, %v1853
        %1858 = vrot.lane.b32.xlu0 %v1691, 118
        %v1859 = vpop.permute.xlu0 %1858
        %1860 = vrot.lane.b32.xlu0 %v1703, 118
        %v1861 = vpop.permute.xlu0 %1860
        %v1864 = vadd.f32 %v1848, %v1859
        %v1865 = vadd.f32 %v1849, %v1861
        %1866 = vrot.lane.b32.xlu0 %v1706, 118
        %v1867 = vpop.permute.xlu0 %1866
        %1868 = vrot.lane.b32.xlu0 %v1707, 118
        %v1869 = vpop.permute.xlu0 %1868
        %v1872 = vadd.f32 %v1856, %v1867
        %v1873 = vadd.f32 %v1857, %v1869
        %1874 = vrot.lane.b32.xlu0 %v1691, 117
        %v1875 = vpop.permute.xlu0 %1874
        %1876 = vrot.lane.b32.xlu0 %v1703, 117
        %v1877 = vpop.permute.xlu0 %1876
        %v1880 = vadd.f32 %v1864, %v1875
        %v1881 = vadd.f32 %v1865, %v1877
        %1882 = vrot.lane.b32.xlu0 %v1706, 117
        %v1883 = vpop.permute.xlu0 %1882
        %1884 = vrot.lane.b32.xlu0 %v1707, 117
        %v1885 = vpop.permute.xlu0 %1884
        %v1888 = vadd.f32 %v1872, %v1883
        %v1889 = vadd.f32 %v1873, %v1885
        %1890 = vrot.lane.b32.xlu0 %v1691, 116
        %v1891 = vpop.permute.xlu0 %1890
        %1892 = vrot.lane.b32.xlu0 %v1703, 116
        %v1893 = vpop.permute.xlu0 %1892
        %v1896 = vadd.f32 %v1880, %v1891
        %v1897 = vadd.f32 %v1881, %v1893
        %1898 = vrot.lane.b32.xlu0 %v1706, 116
        %v1899 = vpop.permute.xlu0 %1898
        %1900 = vrot.lane.b32.xlu0 %v1707, 116
        %v1901 = vpop.permute.xlu0 %1900
        %v1904 = vadd.f32 %v1888, %v1899
        %v1905 = vadd.f32 %v1889, %v1901
        %1906 = vrot.lane.b32.xlu0 %v1691, 115
        %v1907 = vpop.permute.xlu0 %1906
        %1908 = vrot.lane.b32.xlu0 %v1703, 115
        %v1909 = vpop.permute.xlu0 %1908
        %v1912 = vadd.f32 %v1896, %v1907
        %v1913 = vadd.f32 %v1897, %v1909
        %1914 = vrot.lane.b32.xlu0 %v1706, 115
        %v1915 = vpop.permute.xlu0 %1914
        %1916 = vrot.lane.b32.xlu0 %v1707, 115
        %v1917 = vpop.permute.xlu0 %1916
        %v1920 = vadd.f32 %v1904, %v1915
        %v1921 = vadd.f32 %v1905, %v1917
        %1922 = vrot.lane.b32.xlu0 %v1691, 114
        %v1923 = vpop.permute.xlu0 %1922
        %1924 = vrot.lane.b32.xlu0 %v1703, 114
        %v1925 = vpop.permute.xlu0 %1924
        %v1928 = vadd.f32 %v1912, %v1923
        %v1929 = vadd.f32 %v1913, %v1925
        %1930 = vrot.lane.b32.xlu0 %v1706, 114
        %v1931 = vpop.permute.xlu0 %1930
        %1932 = vrot.lane.b32.xlu0 %v1707, 114
        %v1933 = vpop.permute.xlu0 %1932
        %v1936 = vadd.f32 %v1920, %v1931
        %v1937 = vadd.f32 %v1921, %v1933
        %1938 = vrot.lane.b32.xlu0 %v1691, 113
        %v1939 = vpop.permute.xlu0 %1938
        %1940 = vrot.lane.b32.xlu0 %v1703, 113
        %v1941 = vpop.permute.xlu0 %1940
        %v1944 = vadd.f32 %v1928, %v1939
        %v1945 = vadd.f32 %v1929, %v1941
        %1946 = vrot.lane.b32.xlu0 %v1706, 113
        %v1947 = vpop.permute.xlu0 %1946
        %1948 = vrot.lane.b32.xlu0 %v1707, 113
        %v1949 = vpop.permute.xlu0 %1948
        %v1952 = vadd.f32 %v1936, %v1947
        %v1953 = vadd.f32 %v1937, %v1949
        %1954 = vrot.lane.b32.xlu0 %v1691, 112
        %v1955 = vpop.permute.xlu0 %1954
        %1956 = vrot.lane.b32.xlu0 %v1703, 112
        %v1957 = vpop.permute.xlu0 %1956
        %v1960 = vadd.f32 %v1944, %v1955
        %v1961 = vadd.f32 %v1945, %v1957
        %1962 = vrot.lane.b32.xlu0 %v1706, 112
        %v1963 = vpop.permute.xlu0 %1962
        %1964 = vrot.lane.b32.xlu0 %v1707, 112
        %v1965 = vpop.permute.xlu0 %1964
        %v1968 = vadd.f32 %v1952, %v1963
        %v1969 = vadd.f32 %v1953, %v1965
        %1970 = vrot.lane.b32.xlu0 %v1691, 111
        %v1971 = vpop.permute.xlu0 %1970
        %1972 = vrot.lane.b32.xlu0 %v1703, 111
        %v1973 = vpop.permute.xlu0 %1972
        %v1976 = vadd.f32 %v1960, %v1971
        %v1977 = vadd.f32 %v1961, %v1973
        %1978 = vrot.lane.b32.xlu0 %v1706, 111
        %v1979 = vpop.permute.xlu0 %1978
        %1980 = vrot.lane.b32.xlu0 %v1707, 111
        %v1981 = vpop.permute.xlu0 %1980
        %v1984 = vadd.f32 %v1968, %v1979
        %v1985 = vadd.f32 %v1969, %v1981
        %1986 = vrot.lane.b32.xlu0 %v1691, 110
        %v1987 = vpop.permute.xlu0 %1986
        %1988 = vrot.lane.b32.xlu0 %v1703, 110
        %v1989 = vpop.permute.xlu0 %1988
        %v1992 = vadd.f32 %v1976, %v1987
        %v1993 = vadd.f32 %v1977, %v1989
        %1994 = vrot.lane.b32.xlu0 %v1706, 110
        %v1995 = vpop.permute.xlu0 %1994
        %1996 = vrot.lane.b32.xlu0 %v1707, 110
        %v1997 = vpop.permute.xlu0 %1996
        %v2000 = vadd.f32 %v1984, %v1995
        %v2001 = vadd.f32 %v1985, %v1997
        %2002 = vrot.lane.b32.xlu0 %v1691, 109
        %v2003 = vpop.permute.xlu0 %2002
        %2004 = vrot.lane.b32.xlu0 %v1703, 109
        %v2005 = vpop.permute.xlu0 %2004
        %v2008 = vadd.f32 %v1992, %v2003
        %v2009 = vadd.f32 %v1993, %v2005
        %2010 = vrot.lane.b32.xlu0 %v1706, 109
        %v2011 = vpop.permute.xlu0 %2010
        %2012 = vrot.lane.b32.xlu0 %v1707, 109
        %v2013 = vpop.permute.xlu0 %2012
        %v2016 = vadd.f32 %v2000, %v2011
        %v2017 = vadd.f32 %v2001, %v2013
        %2018 = vrot.lane.b32.xlu0 %v1691, 108
        %v2019 = vpop.permute.xlu0 %2018
        %2020 = vrot.lane.b32.xlu0 %v1703, 108
        %v2021 = vpop.permute.xlu0 %2020
        %v2024 = vadd.f32 %v2008, %v2019
        %v2025 = vadd.f32 %v2009, %v2021
        %2026 = vrot.lane.b32.xlu0 %v1706, 108
        %v2027 = vpop.permute.xlu0 %2026
        %2028 = vrot.lane.b32.xlu0 %v1707, 108
        %v2029 = vpop.permute.xlu0 %2028
        %v2032 = vadd.f32 %v2016, %v2027
        %v2033 = vadd.f32 %v2017, %v2029
        %2034 = vrot.lane.b32.xlu0 %v1691, 107
        %v2035 = vpop.permute.xlu0 %2034
        %2036 = vrot.lane.b32.xlu0 %v1703, 107
        %v2037 = vpop.permute.xlu0 %2036
        %v2040 = vadd.f32 %v2024, %v2035
        %v2041 = vadd.f32 %v2025, %v2037
        %2042 = vrot.lane.b32.xlu0 %v1706, 107
        %v2043 = vpop.permute.xlu0 %2042
        %2044 = vrot.lane.b32.xlu0 %v1707, 107
        %v2045 = vpop.permute.xlu0 %2044
        %v2048 = vadd.f32 %v2032, %v2043
        %v2049 = vadd.f32 %v2033, %v2045
        %2050 = vrot.lane.b32.xlu0 %v1691, 106
        %v2051 = vpop.permute.xlu0 %2050
        %2052 = vrot.lane.b32.xlu0 %v1703, 106
        %v2053 = vpop.permute.xlu0 %2052
        %v2056 = vadd.f32 %v2040, %v2051
        %v2057 = vadd.f32 %v2041, %v2053
        %2058 = vrot.lane.b32.xlu0 %v1706, 106
        %v2059 = vpop.permute.xlu0 %2058
        %2060 = vrot.lane.b32.xlu0 %v1707, 106
        %v2061 = vpop.permute.xlu0 %2060
        %v2064 = vadd.f32 %v2048, %v2059
        %v2065 = vadd.f32 %v2049, %v2061
        %2066 = vrot.lane.b32.xlu0 %v1691, 105
        %v2067 = vpop.permute.xlu0 %2066
        %2068 = vrot.lane.b32.xlu0 %v1703, 105
        %v2069 = vpop.permute.xlu0 %2068
        %v2072 = vadd.f32 %v2056, %v2067
        %v2073 = vadd.f32 %v2057, %v2069
        %2074 = vrot.lane.b32.xlu0 %v1706, 105
        %v2075 = vpop.permute.xlu0 %2074
        %2076 = vrot.lane.b32.xlu0 %v1707, 105
        %v2077 = vpop.permute.xlu0 %2076
        %v2080 = vadd.f32 %v2064, %v2075
        %v2081 = vadd.f32 %v2065, %v2077
        %2082 = vrot.lane.b32.xlu0 %v1691, 104
        %v2083 = vpop.permute.xlu0 %2082
        %2084 = vrot.lane.b32.xlu0 %v1703, 104
        %v2085 = vpop.permute.xlu0 %2084
        %v2088 = vadd.f32 %v2072, %v2083
        %v2089 = vadd.f32 %v2073, %v2085
        %2090 = vrot.lane.b32.xlu0 %v1706, 104
        %v2091 = vpop.permute.xlu0 %2090
        %2092 = vrot.lane.b32.xlu0 %v1707, 104
        %v2093 = vpop.permute.xlu0 %2092
        %v2096 = vadd.f32 %v2080, %v2091
        %v2097 = vadd.f32 %v2081, %v2093
        %2098 = vrot.lane.b32.xlu0 %v1691, 103
        %v2099 = vpop.permute.xlu0 %2098
        %2100 = vrot.lane.b32.xlu0 %v1703, 103
        %v2101 = vpop.permute.xlu0 %2100
        %v2104 = vadd.f32 %v2088, %v2099
        %v2105 = vadd.f32 %v2089, %v2101
        %2106 = vrot.lane.b32.xlu0 %v1706, 103
        %v2107 = vpop.permute.xlu0 %2106
        %2108 = vrot.lane.b32.xlu0 %v1707, 103
        %v2109 = vpop.permute.xlu0 %2108
        %v2112 = vadd.f32 %v2096, %v2107
        %v2113 = vadd.f32 %v2097, %v2109
        %2114 = vrot.lane.b32.xlu0 %v1691, 102
        %v2115 = vpop.permute.xlu0 %2114
        %2116 = vrot.lane.b32.xlu0 %v1703, 102
        %v2117 = vpop.permute.xlu0 %2116
        %v2120 = vadd.f32 %v2104, %v2115
        %v2121 = vadd.f32 %v2105, %v2117
        %2122 = vrot.lane.b32.xlu0 %v1706, 102
        %v2123 = vpop.permute.xlu0 %2122
        %2124 = vrot.lane.b32.xlu0 %v1707, 102
        %v2125 = vpop.permute.xlu0 %2124
        %v2128 = vadd.f32 %v2112, %v2123
        %v2129 = vadd.f32 %v2113, %v2125
        %2130 = vrot.lane.b32.xlu0 %v1691, 101
        %v2131 = vpop.permute.xlu0 %2130
        %2132 = vrot.lane.b32.xlu0 %v1703, 101
        %v2133 = vpop.permute.xlu0 %2132
        %v2136 = vadd.f32 %v2120, %v2131
        %v2137 = vadd.f32 %v2121, %v2133
        %2138 = vrot.lane.b32.xlu0 %v1706, 101
        %v2139 = vpop.permute.xlu0 %2138
        %2140 = vrot.lane.b32.xlu0 %v1707, 101
        %v2141 = vpop.permute.xlu0 %2140
        %v2144 = vadd.f32 %v2128, %v2139
        %v2145 = vadd.f32 %v2129, %v2141
        %2146 = vrot.lane.b32.xlu0 %v1691, 100
        %v2147 = vpop.permute.xlu0 %2146
        %2148 = vrot.lane.b32.xlu0 %v1703, 100
        %v2149 = vpop.permute.xlu0 %2148
        %v2152 = vadd.f32 %v2136, %v2147
        %v2153 = vadd.f32 %v2137, %v2149
        %2154 = vrot.lane.b32.xlu0 %v1706, 100
        %v2155 = vpop.permute.xlu0 %2154
        %2156 = vrot.lane.b32.xlu0 %v1707, 100
        %v2157 = vpop.permute.xlu0 %2156
        %v2160 = vadd.f32 %v2144, %v2155
        %v2161 = vadd.f32 %v2145, %v2157
        %2162 = vrot.lane.b32.xlu0 %v1691, 99
        %v2163 = vpop.permute.xlu0 %2162
        %2164 = vrot.lane.b32.xlu0 %v1703, 99
        %v2165 = vpop.permute.xlu0 %2164
        %v2168 = vadd.f32 %v2152, %v2163
        %v2169 = vadd.f32 %v2153, %v2165
        %2170 = vrot.lane.b32.xlu0 %v1706, 99
        %v2171 = vpop.permute.xlu0 %2170
        %2172 = vrot.lane.b32.xlu0 %v1707, 99
        %v2173 = vpop.permute.xlu0 %2172
        %v2176 = vadd.f32 %v2160, %v2171
        %v2177 = vadd.f32 %v2161, %v2173
        %v2178 = vrsqrt.pop %v2176
        %v2179 = vmul.f32 %v2178, %v2176
        %v2180 = vmul.f32 %v2179, %v2178
        %v2181 = vmul.f32 0.5, %v2180
        %v2182 = vsub.f32 1.5, %v2181
        %v2183 = vmul.f32 %v2178, %v2182
        %v2184 = vmul.f32 %v2176, %v2183
        %vm2185 = vcmp.eq.f32.partialorder %v2176, inf
        %v2186 = vsel %vm2185, %v2176, %v2184
        %vm2187 = vcmp.eq.f32.partialorder %v2176, 0.0
        %v2188 = vand.u32 %v2176, 2147483648
        %v2189 = vsel %vm2187, %v2188, %v2186
        %v2190 = vrsqrt.pop %v2177
        %v2191 = vmul.f32 %v2190, %v2177
        %v2192 = vmul.f32 %v2191, %v2190
        %v2193 = vmul.f32 0.5, %v2192
        %v2194 = vsub.f32 1.5, %v2193
        %v2195 = vmul.f32 %v2190, %v2194
        %v2196 = vmul.f32 %v2177, %v2195
        %vm2197 = vcmp.eq.f32.partialorder %v2177, inf
        %v2198 = vsel %vm2197, %v2177, %v2196
        %vm2199 = vcmp.eq.f32.partialorder %v2177, 0.0
        %v2200 = vand.u32 %v2177, 2147483648
        %v2201 = vsel %vm2199, %v2200, %v2198
        %v2202 = vadd.f32 %v2189, 1e-08
        %v2203 = vadd.f32 %v2201, 1e-08
        %2206 = vrot.lane.b32.xlu0 %v2202, 96
        %v2207 = vpop.permute.xlu0 %2206
        %2208 = vrot.lane.b32.xlu0 %v2203, 96
        %v2209 = vpop.permute.xlu0 %2208
        %v2212 = vrcp.pop %v2207
        %v2213 = vmul.f32 %v2207, %v2212
        %v2214 = vsub.f32 1.0, %v2213
        %v2215 = vmul.f32 %v2212, %v2214
        %v2216 = vadd.f32 %v2212, %v2215
        %vm2217 = vweird.f32 %v2207
        %vm2218 = vweird.f32 %v2212
        %vm2219 = vmor %vm2217, %vm2218
        %v2220 = vsel %vm2219, %v2212, %v2216
        %v2221 = vand.u32 2147483647, %v2207
        %vm2222 = vcmp.eq.f32.partialorder %v2221, 8.507059e+37
        %v2223 = vand.u32 %v2207, 2147483648
        %v2224 = vor.u32 1.1754944e-38, %v2223
        %v2225 = vsel %vm2222, %v2224, %v2220
        %v2226 = vmul.f32 %v2189, %v2225
        %v2227 = vrcp.pop %v2209
        %v2228 = vmul.f32 %v2209, %v2227
        %v2229 = vsub.f32 1.0, %v2228
        %v2230 = vmul.f32 %v2227, %v2229
        %v2231 = vadd.f32 %v2227, %v2230
        %vm2232 = vweird.f32 %v2209
        %vm2233 = vweird.f32 %v2227
        %vm2234 = vmor %vm2232, %vm2233
        %v2235 = vsel %vm2234, %v2227, %v2231
        %v2236 = vand.u32 2147483647, %v2209
        %vm2237 = vcmp.eq.f32.partialorder %v2236, 8.507059e+37
        %v2238 = vand.u32 %v2209, 2147483648
        %v2239 = vor.u32 1.1754944e-38, %v2238
        %v2240 = vsel %vm2237, %v2239, %v2235
        %v2241 = vmul.f32 %v2201, %v2240
        %v2242 = vmul.f32 %v2168, 0.033333335
        %v2243 = vmul.f32 %v2169, 0.033333335
        %v2244 = vsub.f32 %v1691, %v2242
        %v2245 = vsub.f32 %v1703, %v2243
        %2248 = vrot.lane.b32.xlu0 %v2226, 32
        %v2249 = vpop.permute.xlu0 %2248
        %2250 = vrot.lane.b32.xlu0 %v2241, 32
        %v2251 = vpop.permute.xlu0 %2250
        %v2254 = vmul.f32 %v1691, %v2249
        %v2255 = vmul.f32 %v1703, %v2251
        %v2256 = vmul.f32 %v1691, 6.623413
        %v2257 = vmul.f32 %v1703, 6.623413
        %2260 = vrot.lane.b32.xlu0 %v2256, 32
        %v2261 = vpop.permute.xlu0 %2260
        %2262 = vrot.lane.b32.xlu0 %v2257, 32
        %v2263 = vpop.permute.xlu0 %2262
        %v2266 = vmin.f32 %v2254, %v2261
        %v2267 = vmin.f32 %v2255, %v2263
        %v2268 = vmul.f32 %v2244, %v2244
        %v2269 = vmul.f32 %v2245, %v2245
        %v2270 = vadd.f32 %v2268, 0.0
        %v2271 = vadd.f32 %v2269, 0.0
        %2274 = vrot.lane.b32.xlu0 %v2266, 96
        %v2275 = vpop.permute.xlu0 %2274
        %2276 = vrot.lane.b32.xlu0 %v2267, 96
        %v2277 = vpop.permute.xlu0 %2276
        %v2280 = vmul.f32 %v2244, %v2275
        %v2281 = vmul.f32 %v2245, %v2277
        %v2282 = vadd.f32 %v2280, 0.0
        %v2283 = vadd.f32 %v2281, 0.0
        %v2284 = vadd.f32 %v2266, 0.0
        %v2285 = vadd.f32 %v2267, 0.0
        %v2286 = vmul.f32 %v2266, %v2266
        %v2287 = vmul.f32 %v2267, %v2267
        %v2288 = vadd.f32 %v2286, 0.0
        %v2289 = vadd.f32 %v2287, 0.0
        %2292 = vrot.lane.b32.xlu0 %v2242, 1
        %v2293 = vpop.permute.xlu0 %2292
        %2294 = vrot.lane.b32.xlu0 %v2243, 1
        %v2295 = vpop.permute.xlu0 %2294
        %v2298 = vsub.f32 %v1691, %v2293
        %v2299 = vsub.f32 %v1703, %v2295
        %2300 = vrot.lane.b32.xlu0 %v2226, 33
        %v2301 = vpop.permute.xlu0 %2300
        %2302 = vrot.lane.b32.xlu0 %v2241, 33
        %v2303 = vpop.permute.xlu0 %2302
        %v2306 = vmul.f32 %v1691, %v2301
        %v2307 = vmul.f32 %v1703, %v2303
        %v2308 = vmin.f32 %v2306, %v2261
        %v2309 = vmin.f32 %v2307, %v2263
        %v2310 = vmul.f32 %v2298, %v2298
        %v2311 = vmul.f32 %v2299, %v2299
        %2314 = vrot.lane.b32.xlu0 %v2310, 127
        %v2315 = vpop.permute.xlu0 %2314
        %2316 = vrot.lane.b32.xlu0 %v2311, 127
        %v2317 = vpop.permute.xlu0 %2316
        %v2320 = vadd.f32 %v2270, %v2315
        %v2321 = vadd.f32 %v2271, %v2317
        %2324 = vrot.lane.b32.xlu0 %v2308, 96
        %v2325 = vpop.permute.xlu0 %2324
        %2326 = vrot.lane.b32.xlu0 %v2309, 96
        %v2327 = vpop.permute.xlu0 %2326
        %v2330 = vmul.f32 %v2298, %v2325
        %v2331 = vmul.f32 %v2299, %v2327
        %2334 = vrot.lane.b32.xlu0 %v2330, 127
        %v2335 = vpop.permute.xlu0 %2334
        %2336 = vrot.lane.b32.xlu0 %v2331, 127
        %v2337 = vpop.permute.xlu0 %2336
        %v2340 = vadd.f32 %v2282, %v2335
        %v2341 = vadd.f32 %v2283, %v2337
        %2342 = vrot.lane.b32.xlu0 %v2308, 127
        %v2343 = vpop.permute.xlu0 %2342
        %2344 = vrot.lane.b32.xlu0 %v2309, 127
        %v2345 = vpop.permute.xlu0 %2344
        %v2348 = vadd.f32 %v2284, %v2343
        %v2349 = vadd.f32 %v2285, %v2345
        %v2350 = vmul.f32 %v2308, %v2308
        %v2351 = vmul.f32 %v2309, %v2309
        %2354 = vrot.lane.b32.xlu0 %v2350, 127
        %v2355 = vpop.permute.xlu0 %2354
        %2356 = vrot.lane.b32.xlu0 %v2351, 127
        %v2357 = vpop.permute.xlu0 %2356
        %v2360 = vadd.f32 %v2288, %v2355
        %v2361 = vadd.f32 %v2289, %v2357
        %2362 = vrot.lane.b32.xlu0 %v2242, 2
        %v2363 = vpop.permute.xlu0 %2362
        %2364 = vrot.lane.b32.xlu0 %v2243, 2
        %v2365 = vpop.permute.xlu0 %2364
        %v2368 = vsub.f32 %v1691, %v2363
        %v2369 = vsub.f32 %v1703, %v2365
        %2370 = vrot.lane.b32.xlu0 %v2226, 34
        %v2371 = vpop.permute.xlu0 %2370
        %2372 = vrot.lane.b32.xlu0 %v2241, 34
        %v2373 = vpop.permute.xlu0 %2372
        %v2376 = vmul.f32 %v1691, %v2371
        %v2377 = vmul.f32 %v1703, %v2373
        %v2378 = vmin.f32 %v2376, %v2261
        %v2379 = vmin.f32 %v2377, %v2263
        %v2380 = vmul.f32 %v2368, %v2368
        %v2381 = vmul.f32 %v2369, %v2369
        %2384 = vrot.lane.b32.xlu0 %v2380, 126
        %v2385 = vpop.permute.xlu0 %2384
        %2386 = vrot.lane.b32.xlu0 %v2381, 126
        %v2387 = vpop.permute.xlu0 %2386
        %v2390 = vadd.f32 %v2320, %v2385
        %v2391 = vadd.f32 %v2321, %v2387
        %2394 = vrot.lane.b32.xlu0 %v2378, 96
        %v2395 = vpop.permute.xlu0 %2394
        %2396 = vrot.lane.b32.xlu0 %v2379, 96
        %v2397 = vpop.permute.xlu0 %2396
        %v2400 = vmul.f32 %v2368, %v2395
        %v2401 = vmul.f32 %v2369, %v2397
        %2404 = vrot.lane.b32.xlu0 %v2400, 126
        %v2405 = vpop.permute.xlu0 %2404
        %2406 = vrot.lane.b32.xlu0 %v2401, 126
        %v2407 = vpop.permute.xlu0 %2406
        %v2410 = vadd.f32 %v2340, %v2405
        %v2411 = vadd.f32 %v2341, %v2407
        %2412 = vrot.lane.b32.xlu0 %v2378, 126
        %v2413 = vpop.permute.xlu0 %2412
        %2414 = vrot.lane.b32.xlu0 %v2379, 126
        %v2415 = vpop.permute.xlu0 %2414
        %v2418 = vadd.f32 %v2348, %v2413
        %v2419 = vadd.f32 %v2349, %v2415
        %v2420 = vmul.f32 %v2378, %v2378
        %v2421 = vmul.f32 %v2379, %v2379
        %2424 = vrot.lane.b32.xlu0 %v2420, 126
        %v2425 = vpop.permute.xlu0 %2424
        %2426 = vrot.lane.b32.xlu0 %v2421, 126
        %v2427 = vpop.permute.xlu0 %2426
        %v2430 = vadd.f32 %v2360, %v2425
        %v2431 = vadd.f32 %v2361, %v2427
        %2432 = vrot.lane.b32.xlu0 %v2242, 3
        %v2433 = vpop.permute.xlu0 %2432
        %2434 = vrot.lane.b32.xlu0 %v2243, 3
        %v2435 = vpop.permute.xlu0 %2434
        %v2438 = vsub.f32 %v1691, %v2433
        %v2439 = vsub.f32 %v1703, %v2435
        %2440 = vrot.lane.b32.xlu0 %v2226, 35
        %v2441 = vpop.permute.xlu0 %2440
        %2442 = vrot.lane.b32.xlu0 %v2241, 35
        %v2443 = vpop.permute.xlu0 %2442
        %v2446 = vmul.f32 %v1691, %v2441
        %v2447 = vmul.f32 %v1703, %v2443
        %v2448 = vmin.f32 %v2446, %v2261
        %v2449 = vmin.f32 %v2447, %v2263
        %v2450 = vmul.f32 %v2438, %v2438
        %v2451 = vmul.f32 %v2439, %v2439
        %2454 = vrot.lane.b32.xlu0 %v2450, 125
        %v2455 = vpop.permute.xlu0 %2454
        %2456 = vrot.lane.b32.xlu0 %v2451, 125
        %v2457 = vpop.permute.xlu0 %2456
        %v2460 = vadd.f32 %v2390, %v2455
        %v2461 = vadd.f32 %v2391, %v2457
        %2464 = vrot.lane.b32.xlu0 %v2448, 96
        %v2465 = vpop.permute.xlu0 %2464
        %2466 = vrot.lane.b32.xlu0 %v2449, 96
        %v2467 = vpop.permute.xlu0 %2466
        %v2470 = vmul.f32 %v2438, %v2465
        %v2471 = vmul.f32 %v2439, %v2467
        %2474 = vrot.lane.b32.xlu0 %v2470, 125
        %v2475 = vpop.permute.xlu0 %2474
        %2476 = vrot.lane.b32.xlu0 %v2471, 125
        %v2477 = vpop.permute.xlu0 %2476
        %v2480 = vadd.f32 %v2410, %v2475
        %v2481 = vadd.f32 %v2411, %v2477
        %2482 = vrot.lane.b32.xlu0 %v2448, 125
        %v2483 = vpop.permute.xlu0 %2482
        %2484 = vrot.lane.b32.xlu0 %v2449, 125
        %v2485 = vpop.permute.xlu0 %2484
        %v2488 = vadd.f32 %v2418, %v2483
        %v2489 = vadd.f32 %v2419, %v2485
        %v2490 = vmul.f32 %v2448, %v2448
        %v2491 = vmul.f32 %v2449, %v2449
        %2494 = vrot.lane.b32.xlu0 %v2490, 125
        %v2495 = vpop.permute.xlu0 %2494
        %2496 = vrot.lane.b32.xlu0 %v2491, 125
        %v2497 = vpop.permute.xlu0 %2496
        %v2500 = vadd.f32 %v2430, %v2495
        %v2501 = vadd.f32 %v2431, %v2497
        %2502 = vrot.lane.b32.xlu0 %v2242, 4
        %v2503 = vpop.permute.xlu0 %2502
        %2504 = vrot.lane.b32.xlu0 %v2243, 4
        %v2505 = vpop.permute.xlu0 %2504
        %v2508 = vsub.f32 %v1691, %v2503
        %v2509 = vsub.f32 %v1703, %v2505
        %2510 = vrot.lane.b32.xlu0 %v2226, 36
        %v2511 = vpop.permute.xlu0 %2510
        %2512 = vrot.lane.b32.xlu0 %v2241, 36
        %v2513 = vpop.permute.xlu0 %2512
        %v2516 = vmul.f32 %v1691, %v2511
        %v2517 = vmul.f32 %v1703, %v2513
        %v2518 = vmin.f32 %v2516, %v2261
        %v2519 = vmin.f32 %v2517, %v2263
        %v2520 = vmul.f32 %v2508, %v2508
        %v2521 = vmul.f32 %v2509, %v2509
        %2524 = vrot.lane.b32.xlu0 %v2520, 124
        %v2525 = vpop.permute.xlu0 %2524
        %2526 = vrot.lane.b32.xlu0 %v2521, 124
        %v2527 = vpop.permute.xlu0 %2526
        %v2530 = vadd.f32 %v2460, %v2525
        %v2531 = vadd.f32 %v2461, %v2527
        %2534 = vrot.lane.b32.xlu0 %v2518, 96
        %v2535 = vpop.permute.xlu0 %2534
        %2536 = vrot.lane.b32.xlu0 %v2519, 96
        %v2537 = vpop.permute.xlu0 %2536
        %v2540 = vmul.f32 %v2508, %v2535
        %v2541 = vmul.f32 %v2509, %v2537
        %2544 = vrot.lane.b32.xlu0 %v2540, 124
        %v2545 = vpop.permute.xlu0 %2544
        %2546 = vrot.lane.b32.xlu0 %v2541, 124
        %v2547 = vpop.permute.xlu0 %2546
        %v2550 = vadd.f32 %v2480, %v2545
        %v2551 = vadd.f32 %v2481, %v2547
        %2552 = vrot.lane.b32.xlu0 %v2518, 124
        %v2553 = vpop.permute.xlu0 %2552
        %2554 = vrot.lane.b32.xlu0 %v2519, 124
        %v2555 = vpop.permute.xlu0 %2554
        %v2558 = vadd.f32 %v2488, %v2553
        %v2559 = vadd.f32 %v2489, %v2555
        %v2560 = vmul.f32 %v2518, %v2518
        %v2561 = vmul.f32 %v2519, %v2519
        %2564 = vrot.lane.b32.xlu0 %v2560, 124
        %v2565 = vpop.permute.xlu0 %2564
        %2566 = vrot.lane.b32.xlu0 %v2561, 124
        %v2567 = vpop.permute.xlu0 %2566
        %v2570 = vadd.f32 %v2500, %v2565
        %v2571 = vadd.f32 %v2501, %v2567
        %2572 = vrot.lane.b32.xlu0 %v2242, 5
        %v2573 = vpop.permute.xlu0 %2572
        %2574 = vrot.lane.b32.xlu0 %v2243, 5
        %v2575 = vpop.permute.xlu0 %2574
        %v2578 = vsub.f32 %v1691, %v2573
        %v2579 = vsub.f32 %v1703, %v2575
        %2580 = vrot.lane.b32.xlu0 %v2226, 37
        %v2581 = vpop.permute.xlu0 %2580
        %2582 = vrot.lane.b32.xlu0 %v2241, 37
        %v2583 = vpop.permute.xlu0 %2582
        %v2586 = vmul.f32 %v1691, %v2581
        %v2587 = vmul.f32 %v1703, %v2583
        %v2588 = vmin.f32 %v2586, %v2261
        %v2589 = vmin.f32 %v2587, %v2263
        %v2590 = vmul.f32 %v2578, %v2578
        %v2591 = vmul.f32 %v2579, %v2579
        %2594 = vrot.lane.b32.xlu0 %v2590, 123
        %v2595 = vpop.permute.xlu0 %2594
        %2596 = vrot.lane.b32.xlu0 %v2591, 123
        %v2597 = vpop.permute.xlu0 %2596
        %v2600 = vadd.f32 %v2530, %v2595
        %v2601 = vadd.f32 %v2531, %v2597
        %2604 = vrot.lane.b32.xlu0 %v2588, 96
        %v2605 = vpop.permute.xlu0 %2604
        %2606 = vrot.lane.b32.xlu0 %v2589, 96
        %v2607 = vpop.permute.xlu0 %2606
        %v2610 = vmul.f32 %v2578, %v2605
        %v2611 = vmul.f32 %v2579, %v2607
        %2614 = vrot.lane.b32.xlu0 %v2610, 123
        %v2615 = vpop.permute.xlu0 %2614
        %2616 = vrot.lane.b32.xlu0 %v2611, 123
        %v2617 = vpop.permute.xlu0 %2616
        %v2620 = vadd.f32 %v2550, %v2615
        %v2621 = vadd.f32 %v2551, %v2617
        %2622 = vrot.lane.b32.xlu0 %v2588, 123
        %v2623 = vpop.permute.xlu0 %2622
        %2624 = vrot.lane.b32.xlu0 %v2589, 123
        %v2625 = vpop.permute.xlu0 %2624
        %v2628 = vadd.f32 %v2558, %v2623
        %v2629 = vadd.f32 %v2559, %v2625
        %v2630 = vmul.f32 %v2588, %v2588
        %v2631 = vmul.f32 %v2589, %v2589
        %2634 = vrot.lane.b32.xlu0 %v2630, 123
        %v2635 = vpop.permute.xlu0 %2634
        %2636 = vrot.lane.b32.xlu0 %v2631, 123
        %v2637 = vpop.permute.xlu0 %2636
        %v2640 = vadd.f32 %v2570, %v2635
        %v2641 = vadd.f32 %v2571, %v2637
        %2642 = vrot.lane.b32.xlu0 %v2242, 6
        %v2643 = vpop.permute.xlu0 %2642
        %2644 = vrot.lane.b32.xlu0 %v2243, 6
        %v2645 = vpop.permute.xlu0 %2644
        %v2648 = vsub.f32 %v1691, %v2643
        %v2649 = vsub.f32 %v1703, %v2645
        %2650 = vrot.lane.b32.xlu0 %v2226, 38
        %v2651 = vpop.permute.xlu0 %2650
        %2652 = vrot.lane.b32.xlu0 %v2241, 38
        %v2653 = vpop.permute.xlu0 %2652
        %v2656 = vmul.f32 %v1691, %v2651
        %v2657 = vmul.f32 %v1703, %v2653
        %v2658 = vmin.f32 %v2656, %v2261
        %v2659 = vmin.f32 %v2657, %v2263
        %v2660 = vmul.f32 %v2648, %v2648
        %v2661 = vmul.f32 %v2649, %v2649
        %2664 = vrot.lane.b32.xlu0 %v2660, 122
        %v2665 = vpop.permute.xlu0 %2664
        %2666 = vrot.lane.b32.xlu0 %v2661, 122
        %v2667 = vpop.permute.xlu0 %2666
        %v2670 = vadd.f32 %v2600, %v2665
        %v2671 = vadd.f32 %v2601, %v2667
        %2674 = vrot.lane.b32.xlu0 %v2658, 96
        %v2675 = vpop.permute.xlu0 %2674
        %2676 = vrot.lane.b32.xlu0 %v2659, 96
        %v2677 = vpop.permute.xlu0 %2676
        %v2680 = vmul.f32 %v2648, %v2675
        %v2681 = vmul.f32 %v2649, %v2677
        %2684 = vrot.lane.b32.xlu0 %v2680, 122
        %v2685 = vpop.permute.xlu0 %2684
        %2686 = vrot.lane.b32.xlu0 %v2681, 122
        %v2687 = vpop.permute.xlu0 %2686
        %v2690 = vadd.f32 %v2620, %v2685
        %v2691 = vadd.f32 %v2621, %v2687
        %2692 = vrot.lane.b32.xlu0 %v2658, 122
        %v2693 = vpop.permute.xlu0 %2692
        %2694 = vrot.lane.b32.xlu0 %v2659, 122
        %v2695 = vpop.permute.xlu0 %2694
        %v2698 = vadd.f32 %v2628, %v2693
        %v2699 = vadd.f32 %v2629, %v2695
        %v2700 = vmul.f32 %v2658, %v2658
        %v2701 = vmul.f32 %v2659, %v2659
        %2704 = vrot.lane.b32.xlu0 %v2700, 122
        %v2705 = vpop.permute.xlu0 %2704
        %2706 = vrot.lane.b32.xlu0 %v2701, 122
        %v2707 = vpop.permute.xlu0 %2706
        %v2710 = vadd.f32 %v2640, %v2705
        %v2711 = vadd.f32 %v2641, %v2707
        %2712 = vrot.lane.b32.xlu0 %v2242, 7
        %v2713 = vpop.permute.xlu0 %2712
        %2714 = vrot.lane.b32.xlu0 %v2243, 7
        %v2715 = vpop.permute.xlu0 %2714
        %v2718 = vsub.f32 %v1691, %v2713
        %v2719 = vsub.f32 %v1703, %v2715
        %2720 = vrot.lane.b32.xlu0 %v2226, 39
        %v2721 = vpop.permute.xlu0 %2720
        %2722 = vrot.lane.b32.xlu0 %v2241, 39
        %v2723 = vpop.permute.xlu0 %2722
        %v2726 = vmul.f32 %v1691, %v2721
        %v2727 = vmul.f32 %v1703, %v2723
        %v2728 = vmin.f32 %v2726, %v2261
        %v2729 = vmin.f32 %v2727, %v2263
        %v2730 = vmul.f32 %v2718, %v2718
        %v2731 = vmul.f32 %v2719, %v2719
        %2734 = vrot.lane.b32.xlu0 %v2730, 121
        %v2735 = vpop.permute.xlu0 %2734
        %2736 = vrot.lane.b32.xlu0 %v2731, 121
        %v2737 = vpop.permute.xlu0 %2736
        %v2740 = vadd.f32 %v2670, %v2735
        %v2741 = vadd.f32 %v2671, %v2737
        %2744 = vrot.lane.b32.xlu0 %v2728, 96
        %v2745 = vpop.permute.xlu0 %2744
        %2746 = vrot.lane.b32.xlu0 %v2729, 96
        %v2747 = vpop.permute.xlu0 %2746
        %v2750 = vmul.f32 %v2718, %v2745
        %v2751 = vmul.f32 %v2719, %v2747
        %2754 = vrot.lane.b32.xlu0 %v2750, 121
        %v2755 = vpop.permute.xlu0 %2754
        %2756 = vrot.lane.b32.xlu0 %v2751, 121
        %v2757 = vpop.permute.xlu0 %2756
        %v2760 = vadd.f32 %v2690, %v2755
        %v2761 = vadd.f32 %v2691, %v2757
        %2762 = vrot.lane.b32.xlu0 %v2728, 121
        %v2763 = vpop.permute.xlu0 %2762
        %2764 = vrot.lane.b32.xlu0 %v2729, 121
        %v2765 = vpop.permute.xlu0 %2764
        %v2768 = vadd.f32 %v2698, %v2763
        %v2769 = vadd.f32 %v2699, %v2765
        %v2770 = vmul.f32 %v2728, %v2728
        %v2771 = vmul.f32 %v2729, %v2729
        %2774 = vrot.lane.b32.xlu0 %v2770, 121
        %v2775 = vpop.permute.xlu0 %2774
        %2776 = vrot.lane.b32.xlu0 %v2771, 121
        %v2777 = vpop.permute.xlu0 %2776
        %v2780 = vadd.f32 %v2710, %v2775
        %v2781 = vadd.f32 %v2711, %v2777
        %2782 = vrot.lane.b32.xlu0 %v2242, 8
        %v2783 = vpop.permute.xlu0 %2782
        %2784 = vrot.lane.b32.xlu0 %v2243, 8
        %v2785 = vpop.permute.xlu0 %2784
        %v2788 = vsub.f32 %v1691, %v2783
        %v2789 = vsub.f32 %v1703, %v2785
        %2790 = vrot.lane.b32.xlu0 %v2226, 40
        %v2791 = vpop.permute.xlu0 %2790
        %2792 = vrot.lane.b32.xlu0 %v2241, 40
        %v2793 = vpop.permute.xlu0 %2792
        %v2796 = vmul.f32 %v1691, %v2791
        %v2797 = vmul.f32 %v1703, %v2793
        %v2798 = vmin.f32 %v2796, %v2261
        %v2799 = vmin.f32 %v2797, %v2263
        %v2800 = vmul.f32 %v2788, %v2788
        %v2801 = vmul.f32 %v2789, %v2789
        %2804 = vrot.lane.b32.xlu0 %v2800, 120
        %v2805 = vpop.permute.xlu0 %2804
        %2806 = vrot.lane.b32.xlu0 %v2801, 120
        %v2807 = vpop.permute.xlu0 %2806
        %v2810 = vadd.f32 %v2740, %v2805
        %v2811 = vadd.f32 %v2741, %v2807
        %2814 = vrot.lane.b32.xlu0 %v2798, 96
        %v2815 = vpop.permute.xlu0 %2814
        %2816 = vrot.lane.b32.xlu0 %v2799, 96
        %v2817 = vpop.permute.xlu0 %2816
        %v2820 = vmul.f32 %v2788, %v2815
        %v2821 = vmul.f32 %v2789, %v2817
        %2824 = vrot.lane.b32.xlu0 %v2820, 120
        %v2825 = vpop.permute.xlu0 %2824
        %2826 = vrot.lane.b32.xlu0 %v2821, 120
        %v2827 = vpop.permute.xlu0 %2826
        %v2830 = vadd.f32 %v2760, %v2825
        %v2831 = vadd.f32 %v2761, %v2827
        %2832 = vrot.lane.b32.xlu0 %v2798, 120
        %v2833 = vpop.permute.xlu0 %2832
        %2834 = vrot.lane.b32.xlu0 %v2799, 120
        %v2835 = vpop.permute.xlu0 %2834
        %v2838 = vadd.f32 %v2768, %v2833
        %v2839 = vadd.f32 %v2769, %v2835
        %v2840 = vmul.f32 %v2798, %v2798
        %v2841 = vmul.f32 %v2799, %v2799
        %2844 = vrot.lane.b32.xlu0 %v2840, 120
        %v2845 = vpop.permute.xlu0 %2844
        %2846 = vrot.lane.b32.xlu0 %v2841, 120
        %v2847 = vpop.permute.xlu0 %2846
        %v2850 = vadd.f32 %v2780, %v2845
        %v2851 = vadd.f32 %v2781, %v2847
        %2852 = vrot.lane.b32.xlu0 %v2242, 9
        %v2853 = vpop.permute.xlu0 %2852
        %2854 = vrot.lane.b32.xlu0 %v2243, 9
        %v2855 = vpop.permute.xlu0 %2854
        %v2858 = vsub.f32 %v1691, %v2853
        %v2859 = vsub.f32 %v1703, %v2855
        %2860 = vrot.lane.b32.xlu0 %v2226, 41
        %v2861 = vpop.permute.xlu0 %2860
        %2862 = vrot.lane.b32.xlu0 %v2241, 41
        %v2863 = vpop.permute.xlu0 %2862
        %v2866 = vmul.f32 %v1691, %v2861
        %v2867 = vmul.f32 %v1703, %v2863
        %v2868 = vmin.f32 %v2866, %v2261
        %v2869 = vmin.f32 %v2867, %v2263
        %v2870 = vmul.f32 %v2858, %v2858
        %v2871 = vmul.f32 %v2859, %v2859
        %2874 = vrot.lane.b32.xlu0 %v2870, 119
        %v2875 = vpop.permute.xlu0 %2874
        %2876 = vrot.lane.b32.xlu0 %v2871, 119
        %v2877 = vpop.permute.xlu0 %2876
        %v2880 = vadd.f32 %v2810, %v2875
        %v2881 = vadd.f32 %v2811, %v2877
        %2884 = vrot.lane.b32.xlu0 %v2868, 96
        %v2885 = vpop.permute.xlu0 %2884
        %2886 = vrot.lane.b32.xlu0 %v2869, 96
        %v2887 = vpop.permute.xlu0 %2886
        %v2890 = vmul.f32 %v2858, %v2885
        %v2891 = vmul.f32 %v2859, %v2887
        %2894 = vrot.lane.b32.xlu0 %v2890, 119
        %v2895 = vpop.permute.xlu0 %2894
        %2896 = vrot.lane.b32.xlu0 %v2891, 119
        %v2897 = vpop.permute.xlu0 %2896
        %v2900 = vadd.f32 %v2830, %v2895
        %v2901 = vadd.f32 %v2831, %v2897
        %2902 = vrot.lane.b32.xlu0 %v2868, 119
        %v2903 = vpop.permute.xlu0 %2902
        %2904 = vrot.lane.b32.xlu0 %v2869, 119
        %v2905 = vpop.permute.xlu0 %2904
        %v2908 = vadd.f32 %v2838, %v2903
        %v2909 = vadd.f32 %v2839, %v2905
        %v2910 = vmul.f32 %v2868, %v2868
        %v2911 = vmul.f32 %v2869, %v2869
        %2914 = vrot.lane.b32.xlu0 %v2910, 119
        %v2915 = vpop.permute.xlu0 %2914
        %2916 = vrot.lane.b32.xlu0 %v2911, 119
        %v2917 = vpop.permute.xlu0 %2916
        %v2920 = vadd.f32 %v2850, %v2915
        %v2921 = vadd.f32 %v2851, %v2917
        %2922 = vrot.lane.b32.xlu0 %v2242, 10
        %v2923 = vpop.permute.xlu0 %2922
        %2924 = vrot.lane.b32.xlu0 %v2243, 10
        %v2925 = vpop.permute.xlu0 %2924
        %v2928 = vsub.f32 %v1691, %v2923
        %v2929 = vsub.f32 %v1703, %v2925
        %2930 = vrot.lane.b32.xlu0 %v2226, 42
        %v2931 = vpop.permute.xlu0 %2930
        %2932 = vrot.lane.b32.xlu0 %v2241, 42
        %v2933 = vpop.permute.xlu0 %2932
        %v2936 = vmul.f32 %v1691, %v2931
        %v2937 = vmul.f32 %v1703, %v2933
        %v2938 = vmin.f32 %v2936, %v2261
        %v2939 = vmin.f32 %v2937, %v2263
        %v2940 = vmul.f32 %v2928, %v2928
        %v2941 = vmul.f32 %v2929, %v2929
        %2944 = vrot.lane.b32.xlu0 %v2940, 118
        %v2945 = vpop.permute.xlu0 %2944
        %2946 = vrot.lane.b32.xlu0 %v2941, 118
        %v2947 = vpop.permute.xlu0 %2946
        %v2950 = vadd.f32 %v2880, %v2945
        %v2951 = vadd.f32 %v2881, %v2947
        %2954 = vrot.lane.b32.xlu0 %v2938, 96
        %v2955 = vpop.permute.xlu0 %2954
        %2956 = vrot.lane.b32.xlu0 %v2939, 96
        %v2957 = vpop.permute.xlu0 %2956
        %v2960 = vmul.f32 %v2928, %v2955
        %v2961 = vmul.f32 %v2929, %v2957
        %2964 = vrot.lane.b32.xlu0 %v2960, 118
        %v2965 = vpop.permute.xlu0 %2964
        %2966 = vrot.lane.b32.xlu0 %v2961, 118
        %v2967 = vpop.permute.xlu0 %2966
        %v2970 = vadd.f32 %v2900, %v2965
        %v2971 = vadd.f32 %v2901, %v2967
        %2972 = vrot.lane.b32.xlu0 %v2938, 118
        %v2973 = vpop.permute.xlu0 %2972
        %2974 = vrot.lane.b32.xlu0 %v2939, 118
        %v2975 = vpop.permute.xlu0 %2974
        %v2978 = vadd.f32 %v2908, %v2973
        %v2979 = vadd.f32 %v2909, %v2975
        %v2980 = vmul.f32 %v2938, %v2938
        %v2981 = vmul.f32 %v2939, %v2939
        %2984 = vrot.lane.b32.xlu0 %v2980, 118
        %v2985 = vpop.permute.xlu0 %2984
        %2986 = vrot.lane.b32.xlu0 %v2981, 118
        %v2987 = vpop.permute.xlu0 %2986
        %v2990 = vadd.f32 %v2920, %v2985
        %v2991 = vadd.f32 %v2921, %v2987
        %2992 = vrot.lane.b32.xlu0 %v2242, 11
        %v2993 = vpop.permute.xlu0 %2992
        %2994 = vrot.lane.b32.xlu0 %v2243, 11
        %v2995 = vpop.permute.xlu0 %2994
        %v2998 = vsub.f32 %v1691, %v2993
        %v2999 = vsub.f32 %v1703, %v2995
        %3000 = vrot.lane.b32.xlu0 %v2226, 43
        %v3001 = vpop.permute.xlu0 %3000
        %3002 = vrot.lane.b32.xlu0 %v2241, 43
        %v3003 = vpop.permute.xlu0 %3002
        %v3006 = vmul.f32 %v1691, %v3001
        %v3007 = vmul.f32 %v1703, %v3003
        %v3008 = vmin.f32 %v3006, %v2261
        %v3009 = vmin.f32 %v3007, %v2263
        %v3010 = vmul.f32 %v2998, %v2998
        %v3011 = vmul.f32 %v2999, %v2999
        %3014 = vrot.lane.b32.xlu0 %v3010, 117
        %v3015 = vpop.permute.xlu0 %3014
        %3016 = vrot.lane.b32.xlu0 %v3011, 117
        %v3017 = vpop.permute.xlu0 %3016
        %v3020 = vadd.f32 %v2950, %v3015
        %v3021 = vadd.f32 %v2951, %v3017
        %3024 = vrot.lane.b32.xlu0 %v3008, 96
        %v3025 = vpop.permute.xlu0 %3024
        %3026 = vrot.lane.b32.xlu0 %v3009, 96
        %v3027 = vpop.permute.xlu0 %3026
        %v3030 = vmul.f32 %v2998, %v3025
        %v3031 = vmul.f32 %v2999, %v3027
        %3034 = vrot.lane.b32.xlu0 %v3030, 117
        %v3035 = vpop.permute.xlu0 %3034
        %3036 = vrot.lane.b32.xlu0 %v3031, 117
        %v3037 = vpop.permute.xlu0 %3036
        %v3040 = vadd.f32 %v2970, %v3035
        %v3041 = vadd.f32 %v2971, %v3037
        %3042 = vrot.lane.b32.xlu0 %v3008, 117
        %v3043 = vpop.permute.xlu0 %3042
        %3044 = vrot.lane.b32.xlu0 %v3009, 117
        %v3045 = vpop.permute.xlu0 %3044
        %v3048 = vadd.f32 %v2978, %v3043
        %v3049 = vadd.f32 %v2979, %v3045
        %v3050 = vmul.f32 %v3008, %v3008
        %v3051 = vmul.f32 %v3009, %v3009
        %3054 = vrot.lane.b32.xlu0 %v3050, 117
        %v3055 = vpop.permute.xlu0 %3054
        %3056 = vrot.lane.b32.xlu0 %v3051, 117
        %v3057 = vpop.permute.xlu0 %3056
        %v3060 = vadd.f32 %v2990, %v3055
        %v3061 = vadd.f32 %v2991, %v3057
        %3062 = vrot.lane.b32.xlu0 %v2242, 12
        %v3063 = vpop.permute.xlu0 %3062
        %3064 = vrot.lane.b32.xlu0 %v2243, 12
        %v3065 = vpop.permute.xlu0 %3064
        %v3068 = vsub.f32 %v1691, %v3063
        %v3069 = vsub.f32 %v1703, %v3065
        %3070 = vrot.lane.b32.xlu0 %v2226, 44
        %v3071 = vpop.permute.xlu0 %3070
        %3072 = vrot.lane.b32.xlu0 %v2241, 44
        %v3073 = vpop.permute.xlu0 %3072
        %v3076 = vmul.f32 %v1691, %v3071
        %v3077 = vmul.f32 %v1703, %v3073
        %v3078 = vmin.f32 %v3076, %v2261
        %v3079 = vmin.f32 %v3077, %v2263
        %v3080 = vmul.f32 %v3068, %v3068
        %v3081 = vmul.f32 %v3069, %v3069
        %3084 = vrot.lane.b32.xlu0 %v3080, 116
        %v3085 = vpop.permute.xlu0 %3084
        %3086 = vrot.lane.b32.xlu0 %v3081, 116
        %v3087 = vpop.permute.xlu0 %3086
        %v3090 = vadd.f32 %v3020, %v3085
        %v3091 = vadd.f32 %v3021, %v3087
        %3094 = vrot.lane.b32.xlu0 %v3078, 96
        %v3095 = vpop.permute.xlu0 %3094
        %3096 = vrot.lane.b32.xlu0 %v3079, 96
        %v3097 = vpop.permute.xlu0 %3096
        %v3100 = vmul.f32 %v3068, %v3095
        %v3101 = vmul.f32 %v3069, %v3097
        %3104 = vrot.lane.b32.xlu0 %v3100, 116
        %v3105 = vpop.permute.xlu0 %3104
        %3106 = vrot.lane.b32.xlu0 %v3101, 116
        %v3107 = vpop.permute.xlu0 %3106
        %v3110 = vadd.f32 %v3040, %v3105
        %v3111 = vadd.f32 %v3041, %v3107
        %3112 = vrot.lane.b32.xlu0 %v3078, 116
        %v3113 = vpop.permute.xlu0 %3112
        %3114 = vrot.lane.b32.xlu0 %v3079, 116
        %v3115 = vpop.permute.xlu0 %3114
        %v3118 = vadd.f32 %v3048, %v3113
        %v3119 = vadd.f32 %v3049, %v3115
        %v3120 = vmul.f32 %v3078, %v3078
        %v3121 = vmul.f32 %v3079, %v3079
        %3124 = vrot.lane.b32.xlu0 %v3120, 116
        %v3125 = vpop.permute.xlu0 %3124
        %3126 = vrot.lane.b32.xlu0 %v3121, 116
        %v3127 = vpop.permute.xlu0 %3126
        %v3130 = vadd.f32 %v3060, %v3125
        %v3131 = vadd.f32 %v3061, %v3127
        %3132 = vrot.lane.b32.xlu0 %v2242, 13
        %v3133 = vpop.permute.xlu0 %3132
        %3134 = vrot.lane.b32.xlu0 %v2243, 13
        %v3135 = vpop.permute.xlu0 %3134
        %v3138 = vsub.f32 %v1691, %v3133
        %v3139 = vsub.f32 %v1703, %v3135
        %3140 = vrot.lane.b32.xlu0 %v2226, 45
        %v3141 = vpop.permute.xlu0 %3140
        %3142 = vrot.lane.b32.xlu0 %v2241, 45
        %v3143 = vpop.permute.xlu0 %3142
        %v3146 = vmul.f32 %v1691, %v3141
        %v3147 = vmul.f32 %v1703, %v3143
        %v3148 = vmin.f32 %v3146, %v2261
        %v3149 = vmin.f32 %v3147, %v2263
        %v3150 = vmul.f32 %v3138, %v3138
        %v3151 = vmul.f32 %v3139, %v3139
        %3154 = vrot.lane.b32.xlu0 %v3150, 115
        %v3155 = vpop.permute.xlu0 %3154
        %3156 = vrot.lane.b32.xlu0 %v3151, 115
        %v3157 = vpop.permute.xlu0 %3156
        %v3160 = vadd.f32 %v3090, %v3155
        %v3161 = vadd.f32 %v3091, %v3157
        %3164 = vrot.lane.b32.xlu0 %v3148, 96
        %v3165 = vpop.permute.xlu0 %3164
        %3166 = vrot.lane.b32.xlu0 %v3149, 96
        %v3167 = vpop.permute.xlu0 %3166
        %v3170 = vmul.f32 %v3138, %v3165
        %v3171 = vmul.f32 %v3139, %v3167
        %3174 = vrot.lane.b32.xlu0 %v3170, 115
        %v3175 = vpop.permute.xlu0 %3174
        %3176 = vrot.lane.b32.xlu0 %v3171, 115
        %v3177 = vpop.permute.xlu0 %3176
        %v3180 = vadd.f32 %v3110, %v3175
        %v3181 = vadd.f32 %v3111, %v3177
        %3182 = vrot.lane.b32.xlu0 %v3148, 115
        %v3183 = vpop.permute.xlu0 %3182
        %3184 = vrot.lane.b32.xlu0 %v3149, 115
        %v3185 = vpop.permute.xlu0 %3184
        %v3188 = vadd.f32 %v3118, %v3183
        %v3189 = vadd.f32 %v3119, %v3185
        %v3190 = vmul.f32 %v3148, %v3148
        %v3191 = vmul.f32 %v3149, %v3149
        %3194 = vrot.lane.b32.xlu0 %v3190, 115
        %v3195 = vpop.permute.xlu0 %3194
        %3196 = vrot.lane.b32.xlu0 %v3191, 115
        %v3197 = vpop.permute.xlu0 %3196
        %v3200 = vadd.f32 %v3130, %v3195
        %v3201 = vadd.f32 %v3131, %v3197
        %3202 = vrot.lane.b32.xlu0 %v2242, 14
        %v3203 = vpop.permute.xlu0 %3202
        %3204 = vrot.lane.b32.xlu0 %v2243, 14
        %v3205 = vpop.permute.xlu0 %3204
        %v3208 = vsub.f32 %v1691, %v3203
        %v3209 = vsub.f32 %v1703, %v3205
        %3210 = vrot.lane.b32.xlu0 %v2226, 46
        %v3211 = vpop.permute.xlu0 %3210
        %3212 = vrot.lane.b32.xlu0 %v2241, 46
        %v3213 = vpop.permute.xlu0 %3212
        %v3216 = vmul.f32 %v1691, %v3211
        %v3217 = vmul.f32 %v1703, %v3213
        %v3218 = vmin.f32 %v3216, %v2261
        %v3219 = vmin.f32 %v3217, %v2263
        %v3220 = vmul.f32 %v3208, %v3208
        %v3221 = vmul.f32 %v3209, %v3209
        %3224 = vrot.lane.b32.xlu0 %v3220, 114
        %v3225 = vpop.permute.xlu0 %3224
        %3226 = vrot.lane.b32.xlu0 %v3221, 114
        %v3227 = vpop.permute.xlu0 %3226
        %v3230 = vadd.f32 %v3160, %v3225
        %v3231 = vadd.f32 %v3161, %v3227
        %3234 = vrot.lane.b32.xlu0 %v3218, 96
        %v3235 = vpop.permute.xlu0 %3234
        %3236 = vrot.lane.b32.xlu0 %v3219, 96
        %v3237 = vpop.permute.xlu0 %3236
        %v3240 = vmul.f32 %v3208, %v3235
        %v3241 = vmul.f32 %v3209, %v3237
        %3244 = vrot.lane.b32.xlu0 %v3240, 114
        %v3245 = vpop.permute.xlu0 %3244
        %3246 = vrot.lane.b32.xlu0 %v3241, 114
        %v3247 = vpop.permute.xlu0 %3246
        %v3250 = vadd.f32 %v3180, %v3245
        %v3251 = vadd.f32 %v3181, %v3247
        %3252 = vrot.lane.b32.xlu0 %v3218, 114
        %v3253 = vpop.permute.xlu0 %3252
        %3254 = vrot.lane.b32.xlu0 %v3219, 114
        %v3255 = vpop.permute.xlu0 %3254
        %v3258 = vadd.f32 %v3188, %v3253
        %v3259 = vadd.f32 %v3189, %v3255
        %v3260 = vmul.f32 %v3218, %v3218
        %v3261 = vmul.f32 %v3219, %v3219
        %3264 = vrot.lane.b32.xlu0 %v3260, 114
        %v3265 = vpop.permute.xlu0 %3264
        %3266 = vrot.lane.b32.xlu0 %v3261, 114
        %v3267 = vpop.permute.xlu0 %3266
        %v3270 = vadd.f32 %v3200, %v3265
        %v3271 = vadd.f32 %v3201, %v3267
        %3272 = vrot.lane.b32.xlu0 %v2242, 15
        %v3273 = vpop.permute.xlu0 %3272
        %3274 = vrot.lane.b32.xlu0 %v2243, 15
        %v3275 = vpop.permute.xlu0 %3274
        %v3278 = vsub.f32 %v1691, %v3273
        %v3279 = vsub.f32 %v1703, %v3275
        %3280 = vrot.lane.b32.xlu0 %v2226, 47
        %v3281 = vpop.permute.xlu0 %3280
        %3282 = vrot.lane.b32.xlu0 %v2241, 47
        %v3283 = vpop.permute.xlu0 %3282
        %v3286 = vmul.f32 %v1691, %v3281
        %v3287 = vmul.f32 %v1703, %v3283
        %v3288 = vmin.f32 %v3286, %v2261
        %v3289 = vmin.f32 %v3287, %v2263
        %v3290 = vmul.f32 %v3278, %v3278
        %v3291 = vmul.f32 %v3279, %v3279
        %3294 = vrot.lane.b32.xlu0 %v3290, 113
        %v3295 = vpop.permute.xlu0 %3294
        %3296 = vrot.lane.b32.xlu0 %v3291, 113
        %v3297 = vpop.permute.xlu0 %3296
        %v3300 = vadd.f32 %v3230, %v3295
        %v3301 = vadd.f32 %v3231, %v3297
        %3304 = vrot.lane.b32.xlu0 %v3288, 96
        %v3305 = vpop.permute.xlu0 %3304
        %3306 = vrot.lane.b32.xlu0 %v3289, 96
        %v3307 = vpop.permute.xlu0 %3306
        %v3310 = vmul.f32 %v3278, %v3305
        %v3311 = vmul.f32 %v3279, %v3307
        %3314 = vrot.lane.b32.xlu0 %v3310, 113
        %v3315 = vpop.permute.xlu0 %3314
        %3316 = vrot.lane.b32.xlu0 %v3311, 113
        %v3317 = vpop.permute.xlu0 %3316
        %v3320 = vadd.f32 %v3250, %v3315
        %v3321 = vadd.f32 %v3251, %v3317
        %3322 = vrot.lane.b32.xlu0 %v3288, 113
        %v3323 = vpop.permute.xlu0 %3322
        %3324 = vrot.lane.b32.xlu0 %v3289, 113
        %v3325 = vpop.permute.xlu0 %3324
        %v3328 = vadd.f32 %v3258, %v3323
        %v3329 = vadd.f32 %v3259, %v3325
        %v3330 = vmul.f32 %v3288, %v3288
        %v3331 = vmul.f32 %v3289, %v3289
        %3334 = vrot.lane.b32.xlu0 %v3330, 113
        %v3335 = vpop.permute.xlu0 %3334
        %3336 = vrot.lane.b32.xlu0 %v3331, 113
        %v3337 = vpop.permute.xlu0 %3336
        %v3340 = vadd.f32 %v3270, %v3335
        %v3341 = vadd.f32 %v3271, %v3337
        %3342 = vrot.lane.b32.xlu0 %v2242, 16
        %v3343 = vpop.permute.xlu0 %3342
        %3344 = vrot.lane.b32.xlu0 %v2243, 16
        %v3345 = vpop.permute.xlu0 %3344
        %v3348 = vsub.f32 %v1691, %v3343
        %v3349 = vsub.f32 %v1703, %v3345
        %3350 = vrot.lane.b32.xlu0 %v2226, 48
        %v3351 = vpop.permute.xlu0 %3350
        %3352 = vrot.lane.b32.xlu0 %v2241, 48
        %v3353 = vpop.permute.xlu0 %3352
        %v3356 = vmul.f32 %v1691, %v3351
        %v3357 = vmul.f32 %v1703, %v3353
        %v3358 = vmin.f32 %v3356, %v2261
        %v3359 = vmin.f32 %v3357, %v2263
        %v3360 = vmul.f32 %v3348, %v3348
        %v3361 = vmul.f32 %v3349, %v3349
        %3364 = vrot.lane.b32.xlu0 %v3360, 112
        %v3365 = vpop.permute.xlu0 %3364
        %3366 = vrot.lane.b32.xlu0 %v3361, 112
        %v3367 = vpop.permute.xlu0 %3366
        %v3370 = vadd.f32 %v3300, %v3365
        %v3371 = vadd.f32 %v3301, %v3367
        %3374 = vrot.lane.b32.xlu0 %v3358, 96
        %v3375 = vpop.permute.xlu0 %3374
        %3376 = vrot.lane.b32.xlu0 %v3359, 96
        %v3377 = vpop.permute.xlu0 %3376
        %v3380 = vmul.f32 %v3348, %v3375
        %v3381 = vmul.f32 %v3349, %v3377
        %3384 = vrot.lane.b32.xlu0 %v3380, 112
        %v3385 = vpop.permute.xlu0 %3384
        %3386 = vrot.lane.b32.xlu0 %v3381, 112
        %v3387 = vpop.permute.xlu0 %3386
        %v3390 = vadd.f32 %v3320, %v3385
        %v3391 = vadd.f32 %v3321, %v3387
        %3392 = vrot.lane.b32.xlu0 %v3358, 112
        %v3393 = vpop.permute.xlu0 %3392
        %3394 = vrot.lane.b32.xlu0 %v3359, 112
        %v3395 = vpop.permute.xlu0 %3394
        %v3398 = vadd.f32 %v3328, %v3393
        %v3399 = vadd.f32 %v3329, %v3395
        %v3400 = vmul.f32 %v3358, %v3358
        %v3401 = vmul.f32 %v3359, %v3359
        %3404 = vrot.lane.b32.xlu0 %v3400, 112
        %v3405 = vpop.permute.xlu0 %3404
        %3406 = vrot.lane.b32.xlu0 %v3401, 112
        %v3407 = vpop.permute.xlu0 %3406
        %v3410 = vadd.f32 %v3340, %v3405
        %v3411 = vadd.f32 %v3341, %v3407
        %3412 = vrot.lane.b32.xlu0 %v2242, 17
        %v3413 = vpop.permute.xlu0 %3412
        %3414 = vrot.lane.b32.xlu0 %v2243, 17
        %v3415 = vpop.permute.xlu0 %3414
        %v3418 = vsub.f32 %v1691, %v3413
        %v3419 = vsub.f32 %v1703, %v3415
        %3420 = vrot.lane.b32.xlu0 %v2226, 49
        %v3421 = vpop.permute.xlu0 %3420
        %3422 = vrot.lane.b32.xlu0 %v2241, 49
        %v3423 = vpop.permute.xlu0 %3422
        %v3426 = vmul.f32 %v1691, %v3421
        %v3427 = vmul.f32 %v1703, %v3423
        %v3428 = vmin.f32 %v3426, %v2261
        %v3429 = vmin.f32 %v3427, %v2263
        %v3430 = vmul.f32 %v3418, %v3418
        %v3431 = vmul.f32 %v3419, %v3419
        %3434 = vrot.lane.b32.xlu0 %v3430, 111
        %v3435 = vpop.permute.xlu0 %3434
        %3436 = vrot.lane.b32.xlu0 %v3431, 111
        %v3437 = vpop.permute.xlu0 %3436
        %v3440 = vadd.f32 %v3370, %v3435
        %v3441 = vadd.f32 %v3371, %v3437
        %3444 = vrot.lane.b32.xlu0 %v3428, 96
        %v3445 = vpop.permute.xlu0 %3444
        %3446 = vrot.lane.b32.xlu0 %v3429, 96
        %v3447 = vpop.permute.xlu0 %3446
        %v3450 = vmul.f32 %v3418, %v3445
        %v3451 = vmul.f32 %v3419, %v3447
        %3454 = vrot.lane.b32.xlu0 %v3450, 111
        %v3455 = vpop.permute.xlu0 %3454
        %3456 = vrot.lane.b32.xlu0 %v3451, 111
        %v3457 = vpop.permute.xlu0 %3456
        %v3460 = vadd.f32 %v3390, %v3455
        %v3461 = vadd.f32 %v3391, %v3457
        %3462 = vrot.lane.b32.xlu0 %v3428, 111
        %v3463 = vpop.permute.xlu0 %3462
        %3464 = vrot.lane.b32.xlu0 %v3429, 111
        %v3465 = vpop.permute.xlu0 %3464
        %v3468 = vadd.f32 %v3398, %v3463
        %v3469 = vadd.f32 %v3399, %v3465
        %v3470 = vmul.f32 %v3428, %v3428
        %v3471 = vmul.f32 %v3429, %v3429
        %3474 = vrot.lane.b32.xlu0 %v3470, 111
        %v3475 = vpop.permute.xlu0 %3474
        %3476 = vrot.lane.b32.xlu0 %v3471, 111
        %v3477 = vpop.permute.xlu0 %3476
        %v3480 = vadd.f32 %v3410, %v3475
        %v3481 = vadd.f32 %v3411, %v3477
        %3482 = vrot.lane.b32.xlu0 %v2242, 18
        %v3483 = vpop.permute.xlu0 %3482
        %3484 = vrot.lane.b32.xlu0 %v2243, 18
        %v3485 = vpop.permute.xlu0 %3484
        %v3488 = vsub.f32 %v1691, %v3483
        %v3489 = vsub.f32 %v1703, %v3485
        %3490 = vrot.lane.b32.xlu0 %v2226, 50
        %v3491 = vpop.permute.xlu0 %3490
        %3492 = vrot.lane.b32.xlu0 %v2241, 50
        %v3493 = vpop.permute.xlu0 %3492
        %v3496 = vmul.f32 %v1691, %v3491
        %v3497 = vmul.f32 %v1703, %v3493
        %v3498 = vmin.f32 %v3496, %v2261
        %v3499 = vmin.f32 %v3497, %v2263
        %v3500 = vmul.f32 %v3488, %v3488
        %v3501 = vmul.f32 %v3489, %v3489
        %3504 = vrot.lane.b32.xlu0 %v3500, 110
        %v3505 = vpop.permute.xlu0 %3504
        %3506 = vrot.lane.b32.xlu0 %v3501, 110
        %v3507 = vpop.permute.xlu0 %3506
        %v3510 = vadd.f32 %v3440, %v3505
        %v3511 = vadd.f32 %v3441, %v3507
        %3514 = vrot.lane.b32.xlu0 %v3498, 96
        %v3515 = vpop.permute.xlu0 %3514
        %3516 = vrot.lane.b32.xlu0 %v3499, 96
        %v3517 = vpop.permute.xlu0 %3516
        %v3520 = vmul.f32 %v3488, %v3515
        %v3521 = vmul.f32 %v3489, %v3517
        %3524 = vrot.lane.b32.xlu0 %v3520, 110
        %v3525 = vpop.permute.xlu0 %3524
        %3526 = vrot.lane.b32.xlu0 %v3521, 110
        %v3527 = vpop.permute.xlu0 %3526
        %v3530 = vadd.f32 %v3460, %v3525
        %v3531 = vadd.f32 %v3461, %v3527
        %3532 = vrot.lane.b32.xlu0 %v3498, 110
        %v3533 = vpop.permute.xlu0 %3532
        %3534 = vrot.lane.b32.xlu0 %v3499, 110
        %v3535 = vpop.permute.xlu0 %3534
        %v3538 = vadd.f32 %v3468, %v3533
        %v3539 = vadd.f32 %v3469, %v3535
        %v3540 = vmul.f32 %v3498, %v3498
        %v3541 = vmul.f32 %v3499, %v3499
        %3544 = vrot.lane.b32.xlu0 %v3540, 110
        %v3545 = vpop.permute.xlu0 %3544
        %3546 = vrot.lane.b32.xlu0 %v3541, 110
        %v3547 = vpop.permute.xlu0 %3546
        %v3550 = vadd.f32 %v3480, %v3545
        %v3551 = vadd.f32 %v3481, %v3547
        %3552 = vrot.lane.b32.xlu0 %v2242, 19
        %v3553 = vpop.permute.xlu0 %3552
        %3554 = vrot.lane.b32.xlu0 %v2243, 19
        %v3555 = vpop.permute.xlu0 %3554
        %v3558 = vsub.f32 %v1691, %v3553
        %v3559 = vsub.f32 %v1703, %v3555
        %3560 = vrot.lane.b32.xlu0 %v2226, 51
        %v3561 = vpop.permute.xlu0 %3560
        %3562 = vrot.lane.b32.xlu0 %v2241, 51
        %v3563 = vpop.permute.xlu0 %3562
        %v3566 = vmul.f32 %v1691, %v3561
        %v3567 = vmul.f32 %v1703, %v3563
        %v3568 = vmin.f32 %v3566, %v2261
        %v3569 = vmin.f32 %v3567, %v2263
        %v3570 = vmul.f32 %v3558, %v3558
        %v3571 = vmul.f32 %v3559, %v3559
        %3574 = vrot.lane.b32.xlu0 %v3570, 109
        %v3575 = vpop.permute.xlu0 %3574
        %3576 = vrot.lane.b32.xlu0 %v3571, 109
        %v3577 = vpop.permute.xlu0 %3576
        %v3580 = vadd.f32 %v3510, %v3575
        %v3581 = vadd.f32 %v3511, %v3577
        %3584 = vrot.lane.b32.xlu0 %v3568, 96
        %v3585 = vpop.permute.xlu0 %3584
        %3586 = vrot.lane.b32.xlu0 %v3569, 96
        %v3587 = vpop.permute.xlu0 %3586
        %v3590 = vmul.f32 %v3558, %v3585
        %v3591 = vmul.f32 %v3559, %v3587
        %3594 = vrot.lane.b32.xlu0 %v3590, 109
        %v3595 = vpop.permute.xlu0 %3594
        %3596 = vrot.lane.b32.xlu0 %v3591, 109
        %v3597 = vpop.permute.xlu0 %3596
        %v3600 = vadd.f32 %v3530, %v3595
        %v3601 = vadd.f32 %v3531, %v3597
        %3602 = vrot.lane.b32.xlu0 %v3568, 109
        %v3603 = vpop.permute.xlu0 %3602
        %3604 = vrot.lane.b32.xlu0 %v3569, 109
        %v3605 = vpop.permute.xlu0 %3604
        %v3608 = vadd.f32 %v3538, %v3603
        %v3609 = vadd.f32 %v3539, %v3605
        %v3610 = vmul.f32 %v3568, %v3568
        %v3611 = vmul.f32 %v3569, %v3569
        %3614 = vrot.lane.b32.xlu0 %v3610, 109
        %v3615 = vpop.permute.xlu0 %3614
        %3616 = vrot.lane.b32.xlu0 %v3611, 109
        %v3617 = vpop.permute.xlu0 %3616
        %v3620 = vadd.f32 %v3550, %v3615
        %v3621 = vadd.f32 %v3551, %v3617
        %3622 = vrot.lane.b32.xlu0 %v2242, 20
        %v3623 = vpop.permute.xlu0 %3622
        %3624 = vrot.lane.b32.xlu0 %v2243, 20
        %v3625 = vpop.permute.xlu0 %3624
        %v3628 = vsub.f32 %v1691, %v3623
        %v3629 = vsub.f32 %v1703, %v3625
        %3630 = vrot.lane.b32.xlu0 %v2226, 52
        %v3631 = vpop.permute.xlu0 %3630
        %3632 = vrot.lane.b32.xlu0 %v2241, 52
        %v3633 = vpop.permute.xlu0 %3632
        %v3636 = vmul.f32 %v1691, %v3631
        %v3637 = vmul.f32 %v1703, %v3633
        %v3638 = vmin.f32 %v3636, %v2261
        %v3639 = vmin.f32 %v3637, %v2263
        %v3640 = vmul.f32 %v3628, %v3628
        %v3641 = vmul.f32 %v3629, %v3629
        %3644 = vrot.lane.b32.xlu0 %v3640, 108
        %v3645 = vpop.permute.xlu0 %3644
        %3646 = vrot.lane.b32.xlu0 %v3641, 108
        %v3647 = vpop.permute.xlu0 %3646
        %v3650 = vadd.f32 %v3580, %v3645
        %v3651 = vadd.f32 %v3581, %v3647
        %3654 = vrot.lane.b32.xlu0 %v3638, 96
        %v3655 = vpop.permute.xlu0 %3654
        %3656 = vrot.lane.b32.xlu0 %v3639, 96
        %v3657 = vpop.permute.xlu0 %3656
        %v3660 = vmul.f32 %v3628, %v3655
        %v3661 = vmul.f32 %v3629, %v3657
        %3664 = vrot.lane.b32.xlu0 %v3660, 108
        %v3665 = vpop.permute.xlu0 %3664
        %3666 = vrot.lane.b32.xlu0 %v3661, 108
        %v3667 = vpop.permute.xlu0 %3666
        %v3670 = vadd.f32 %v3600, %v3665
        %v3671 = vadd.f32 %v3601, %v3667
        %3672 = vrot.lane.b32.xlu0 %v3638, 108
        %v3673 = vpop.permute.xlu0 %3672
        %3674 = vrot.lane.b32.xlu0 %v3639, 108
        %v3675 = vpop.permute.xlu0 %3674
        %v3678 = vadd.f32 %v3608, %v3673
        %v3679 = vadd.f32 %v3609, %v3675
        %v3680 = vmul.f32 %v3638, %v3638
        %v3681 = vmul.f32 %v3639, %v3639
        %3684 = vrot.lane.b32.xlu0 %v3680, 108
        %v3685 = vpop.permute.xlu0 %3684
        %3686 = vrot.lane.b32.xlu0 %v3681, 108
        %v3687 = vpop.permute.xlu0 %3686
        %v3690 = vadd.f32 %v3620, %v3685
        %v3691 = vadd.f32 %v3621, %v3687
        %3692 = vrot.lane.b32.xlu0 %v2242, 21
        %v3693 = vpop.permute.xlu0 %3692
        %3694 = vrot.lane.b32.xlu0 %v2243, 21
        %v3695 = vpop.permute.xlu0 %3694
        %v3698 = vsub.f32 %v1691, %v3693
        %v3699 = vsub.f32 %v1703, %v3695
        %3700 = vrot.lane.b32.xlu0 %v2226, 53
        %v3701 = vpop.permute.xlu0 %3700
        %3702 = vrot.lane.b32.xlu0 %v2241, 53
        %v3703 = vpop.permute.xlu0 %3702
        %v3706 = vmul.f32 %v1691, %v3701
        %v3707 = vmul.f32 %v1703, %v3703
        %v3708 = vmin.f32 %v3706, %v2261
        %v3709 = vmin.f32 %v3707, %v2263
        %v3710 = vmul.f32 %v3698, %v3698
        %v3711 = vmul.f32 %v3699, %v3699
        %3714 = vrot.lane.b32.xlu0 %v3710, 107
        %v3715 = vpop.permute.xlu0 %3714
        %3716 = vrot.lane.b32.xlu0 %v3711, 107
        %v3717 = vpop.permute.xlu0 %3716
        %v3720 = vadd.f32 %v3650, %v3715
        %v3721 = vadd.f32 %v3651, %v3717
        %3724 = vrot.lane.b32.xlu0 %v3708, 96
        %v3725 = vpop.permute.xlu0 %3724
        %3726 = vrot.lane.b32.xlu0 %v3709, 96
        %v3727 = vpop.permute.xlu0 %3726
        %v3730 = vmul.f32 %v3698, %v3725
        %v3731 = vmul.f32 %v3699, %v3727
        %3734 = vrot.lane.b32.xlu0 %v3730, 107
        %v3735 = vpop.permute.xlu0 %3734
        %3736 = vrot.lane.b32.xlu0 %v3731, 107
        %v3737 = vpop.permute.xlu0 %3736
        %v3740 = vadd.f32 %v3670, %v3735
        %v3741 = vadd.f32 %v3671, %v3737
        %3742 = vrot.lane.b32.xlu0 %v3708, 107
        %v3743 = vpop.permute.xlu0 %3742
        %3744 = vrot.lane.b32.xlu0 %v3709, 107
        %v3745 = vpop.permute.xlu0 %3744
        %v3748 = vadd.f32 %v3678, %v3743
        %v3749 = vadd.f32 %v3679, %v3745
        %v3750 = vmul.f32 %v3708, %v3708
        %v3751 = vmul.f32 %v3709, %v3709
        %3754 = vrot.lane.b32.xlu0 %v3750, 107
        %v3755 = vpop.permute.xlu0 %3754
        %3756 = vrot.lane.b32.xlu0 %v3751, 107
        %v3757 = vpop.permute.xlu0 %3756
        %v3760 = vadd.f32 %v3690, %v3755
        %v3761 = vadd.f32 %v3691, %v3757
        %3762 = vrot.lane.b32.xlu0 %v2242, 22
        %v3763 = vpop.permute.xlu0 %3762
        %3764 = vrot.lane.b32.xlu0 %v2243, 22
        %v3765 = vpop.permute.xlu0 %3764
        %v3768 = vsub.f32 %v1691, %v3763
        %v3769 = vsub.f32 %v1703, %v3765
        %3770 = vrot.lane.b32.xlu0 %v2226, 54
        %v3771 = vpop.permute.xlu0 %3770
        %3772 = vrot.lane.b32.xlu0 %v2241, 54
        %v3773 = vpop.permute.xlu0 %3772
        %v3776 = vmul.f32 %v1691, %v3771
        %v3777 = vmul.f32 %v1703, %v3773
        %v3778 = vmin.f32 %v3776, %v2261
        %v3779 = vmin.f32 %v3777, %v2263
        %v3780 = vmul.f32 %v3768, %v3768
        %v3781 = vmul.f32 %v3769, %v3769
        %3784 = vrot.lane.b32.xlu0 %v3780, 106
        %v3785 = vpop.permute.xlu0 %3784
        %3786 = vrot.lane.b32.xlu0 %v3781, 106
        %v3787 = vpop.permute.xlu0 %3786
        %v3790 = vadd.f32 %v3720, %v3785
        %v3791 = vadd.f32 %v3721, %v3787
        %3794 = vrot.lane.b32.xlu0 %v3778, 96
        %v3795 = vpop.permute.xlu0 %3794
        %3796 = vrot.lane.b32.xlu0 %v3779, 96
        %v3797 = vpop.permute.xlu0 %3796
        %v3800 = vmul.f32 %v3768, %v3795
        %v3801 = vmul.f32 %v3769, %v3797
        %3804 = vrot.lane.b32.xlu0 %v3800, 106
        %v3805 = vpop.permute.xlu0 %3804
        %3806 = vrot.lane.b32.xlu0 %v3801, 106
        %v3807 = vpop.permute.xlu0 %3806
        %v3810 = vadd.f32 %v3740, %v3805
        %v3811 = vadd.f32 %v3741, %v3807
        %3812 = vrot.lane.b32.xlu0 %v3778, 106
        %v3813 = vpop.permute.xlu0 %3812
        %3814 = vrot.lane.b32.xlu0 %v3779, 106
        %v3815 = vpop.permute.xlu0 %3814
        %v3818 = vadd.f32 %v3748, %v3813
        %v3819 = vadd.f32 %v3749, %v3815
        %v3820 = vmul.f32 %v3778, %v3778
        %v3821 = vmul.f32 %v3779, %v3779
        %3824 = vrot.lane.b32.xlu0 %v3820, 106
        %v3825 = vpop.permute.xlu0 %3824
        %3826 = vrot.lane.b32.xlu0 %v3821, 106
        %v3827 = vpop.permute.xlu0 %3826
        %v3830 = vadd.f32 %v3760, %v3825
        %v3831 = vadd.f32 %v3761, %v3827
        %3832 = vrot.lane.b32.xlu0 %v2242, 23
        %v3833 = vpop.permute.xlu0 %3832
        %3834 = vrot.lane.b32.xlu0 %v2243, 23
        %v3835 = vpop.permute.xlu0 %3834
        %v3838 = vsub.f32 %v1691, %v3833
        %v3839 = vsub.f32 %v1703, %v3835
        %3840 = vrot.lane.b32.xlu0 %v2226, 55
        %v3841 = vpop.permute.xlu0 %3840
        %3842 = vrot.lane.b32.xlu0 %v2241, 55
        %v3843 = vpop.permute.xlu0 %3842
        %v3846 = vmul.f32 %v1691, %v3841
        %v3847 = vmul.f32 %v1703, %v3843
        %v3848 = vmin.f32 %v3846, %v2261
        %v3849 = vmin.f32 %v3847, %v2263
        %v3850 = vmul.f32 %v3838, %v3838
        %v3851 = vmul.f32 %v3839, %v3839
        %3854 = vrot.lane.b32.xlu0 %v3850, 105
        %v3855 = vpop.permute.xlu0 %3854
        %3856 = vrot.lane.b32.xlu0 %v3851, 105
        %v3857 = vpop.permute.xlu0 %3856
        %v3860 = vadd.f32 %v3790, %v3855
        %v3861 = vadd.f32 %v3791, %v3857
        %3864 = vrot.lane.b32.xlu0 %v3848, 96
        %v3865 = vpop.permute.xlu0 %3864
        %3866 = vrot.lane.b32.xlu0 %v3849, 96
        %v3867 = vpop.permute.xlu0 %3866
        %v3870 = vmul.f32 %v3838, %v3865
        %v3871 = vmul.f32 %v3839, %v3867
        %3874 = vrot.lane.b32.xlu0 %v3870, 105
        %v3875 = vpop.permute.xlu0 %3874
        %3876 = vrot.lane.b32.xlu0 %v3871, 105
        %v3877 = vpop.permute.xlu0 %3876
        %v3880 = vadd.f32 %v3810, %v3875
        %v3881 = vadd.f32 %v3811, %v3877
        %3882 = vrot.lane.b32.xlu0 %v3848, 105
        %v3883 = vpop.permute.xlu0 %3882
        %3884 = vrot.lane.b32.xlu0 %v3849, 105
        %v3885 = vpop.permute.xlu0 %3884
        %v3888 = vadd.f32 %v3818, %v3883
        %v3889 = vadd.f32 %v3819, %v3885
        %v3890 = vmul.f32 %v3848, %v3848
        %v3891 = vmul.f32 %v3849, %v3849
        %3894 = vrot.lane.b32.xlu0 %v3890, 105
        %v3895 = vpop.permute.xlu0 %3894
        %3896 = vrot.lane.b32.xlu0 %v3891, 105
        %v3897 = vpop.permute.xlu0 %3896
        %v3900 = vadd.f32 %v3830, %v3895
        %v3901 = vadd.f32 %v3831, %v3897
        %3902 = vrot.lane.b32.xlu0 %v2242, 24
        %v3903 = vpop.permute.xlu0 %3902
        %3904 = vrot.lane.b32.xlu0 %v2243, 24
        %v3905 = vpop.permute.xlu0 %3904
        %v3908 = vsub.f32 %v1691, %v3903
        %v3909 = vsub.f32 %v1703, %v3905
        %3910 = vrot.lane.b32.xlu0 %v2226, 56
        %v3911 = vpop.permute.xlu0 %3910
        %3912 = vrot.lane.b32.xlu0 %v2241, 56
        %v3913 = vpop.permute.xlu0 %3912
        %v3916 = vmul.f32 %v1691, %v3911
        %v3917 = vmul.f32 %v1703, %v3913
        %v3918 = vmin.f32 %v3916, %v2261
        %v3919 = vmin.f32 %v3917, %v2263
        %v3920 = vmul.f32 %v3908, %v3908
        %v3921 = vmul.f32 %v3909, %v3909
        %3924 = vrot.lane.b32.xlu0 %v3920, 104
        %v3925 = vpop.permute.xlu0 %3924
        %3926 = vrot.lane.b32.xlu0 %v3921, 104
        %v3927 = vpop.permute.xlu0 %3926
        %v3930 = vadd.f32 %v3860, %v3925
        %v3931 = vadd.f32 %v3861, %v3927
        %3934 = vrot.lane.b32.xlu0 %v3918, 96
        %v3935 = vpop.permute.xlu0 %3934
        %3936 = vrot.lane.b32.xlu0 %v3919, 96
        %v3937 = vpop.permute.xlu0 %3936
        %v3940 = vmul.f32 %v3908, %v3935
        %v3941 = vmul.f32 %v3909, %v3937
        %3944 = vrot.lane.b32.xlu0 %v3940, 104
        %v3945 = vpop.permute.xlu0 %3944
        %3946 = vrot.lane.b32.xlu0 %v3941, 104
        %v3947 = vpop.permute.xlu0 %3946
        %v3950 = vadd.f32 %v3880, %v3945
        %v3951 = vadd.f32 %v3881, %v3947
        %3952 = vrot.lane.b32.xlu0 %v3918, 104
        %v3953 = vpop.permute.xlu0 %3952
        %3954 = vrot.lane.b32.xlu0 %v3919, 104
        %v3955 = vpop.permute.xlu0 %3954
        %v3958 = vadd.f32 %v3888, %v3953
        %v3959 = vadd.f32 %v3889, %v3955
        %v3960 = vmul.f32 %v3918, %v3918
        %v3961 = vmul.f32 %v3919, %v3919
        %3964 = vrot.lane.b32.xlu0 %v3960, 104
        %v3965 = vpop.permute.xlu0 %3964
        %3966 = vrot.lane.b32.xlu0 %v3961, 104
        %v3967 = vpop.permute.xlu0 %3966
        %v3970 = vadd.f32 %v3900, %v3965
        %v3971 = vadd.f32 %v3901, %v3967
        %3972 = vrot.lane.b32.xlu0 %v2242, 25
        %v3973 = vpop.permute.xlu0 %3972
        %3974 = vrot.lane.b32.xlu0 %v2243, 25
        %v3975 = vpop.permute.xlu0 %3974
        %v3978 = vsub.f32 %v1691, %v3973
        %v3979 = vsub.f32 %v1703, %v3975
        %3980 = vrot.lane.b32.xlu0 %v2226, 57
        %v3981 = vpop.permute.xlu0 %3980
        %3982 = vrot.lane.b32.xlu0 %v2241, 57
        %v3983 = vpop.permute.xlu0 %3982
        %v3986 = vmul.f32 %v1691, %v3981
        %v3987 = vmul.f32 %v1703, %v3983
        %v3988 = vmin.f32 %v3986, %v2261
        %v3989 = vmin.f32 %v3987, %v2263
        %v3990 = vmul.f32 %v3978, %v3978
        %v3991 = vmul.f32 %v3979, %v3979
        %3994 = vrot.lane.b32.xlu0 %v3990, 103
        %v3995 = vpop.permute.xlu0 %3994
        %3996 = vrot.lane.b32.xlu0 %v3991, 103
        %v3997 = vpop.permute.xlu0 %3996
        %v4000 = vadd.f32 %v3930, %v3995
        %v4001 = vadd.f32 %v3931, %v3997
        %4004 = vrot.lane.b32.xlu0 %v3988, 96
        %v4005 = vpop.permute.xlu0 %4004
        %4006 = vrot.lane.b32.xlu0 %v3989, 96
        %v4007 = vpop.permute.xlu0 %4006
        %v4010 = vmul.f32 %v3978, %v4005
        %v4011 = vmul.f32 %v3979, %v4007
        %4014 = vrot.lane.b32.xlu0 %v4010, 103
        %v4015 = vpop.permute.xlu0 %4014
        %4016 = vrot.lane.b32.xlu0 %v4011, 103
        %v4017 = vpop.permute.xlu0 %4016
        %v4020 = vadd.f32 %v3950, %v4015
        %v4021 = vadd.f32 %v3951, %v4017
        %4022 = vrot.lane.b32.xlu0 %v3988, 103
        %v4023 = vpop.permute.xlu0 %4022
        %4024 = vrot.lane.b32.xlu0 %v3989, 103
        %v4025 = vpop.permute.xlu0 %4024
        %v4028 = vadd.f32 %v3958, %v4023
        %v4029 = vadd.f32 %v3959, %v4025
        %v4030 = vmul.f32 %v3988, %v3988
        %v4031 = vmul.f32 %v3989, %v3989
        %4034 = vrot.lane.b32.xlu0 %v4030, 103
        %v4035 = vpop.permute.xlu0 %4034
        %4036 = vrot.lane.b32.xlu0 %v4031, 103
        %v4037 = vpop.permute.xlu0 %4036
        %v4040 = vadd.f32 %v3970, %v4035
        %v4041 = vadd.f32 %v3971, %v4037
        %4042 = vrot.lane.b32.xlu0 %v2242, 26
        %v4043 = vpop.permute.xlu0 %4042
        %4044 = vrot.lane.b32.xlu0 %v2243, 26
        %v4045 = vpop.permute.xlu0 %4044
        %v4048 = vsub.f32 %v1691, %v4043
        %v4049 = vsub.f32 %v1703, %v4045
        %4050 = vrot.lane.b32.xlu0 %v2226, 58
        %v4051 = vpop.permute.xlu0 %4050
        %4052 = vrot.lane.b32.xlu0 %v2241, 58
        %v4053 = vpop.permute.xlu0 %4052
        %v4056 = vmul.f32 %v1691, %v4051
        %v4057 = vmul.f32 %v1703, %v4053
        %v4058 = vmin.f32 %v4056, %v2261
        %v4059 = vmin.f32 %v4057, %v2263
        %v4060 = vmul.f32 %v4048, %v4048
        %v4061 = vmul.f32 %v4049, %v4049
        %4064 = vrot.lane.b32.xlu0 %v4060, 102
        %v4065 = vpop.permute.xlu0 %4064
        %4066 = vrot.lane.b32.xlu0 %v4061, 102
        %v4067 = vpop.permute.xlu0 %4066
        %v4070 = vadd.f32 %v4000, %v4065
        %v4071 = vadd.f32 %v4001, %v4067
        %4074 = vrot.lane.b32.xlu0 %v4058, 96
        %v4075 = vpop.permute.xlu0 %4074
        %4076 = vrot.lane.b32.xlu0 %v4059, 96
        %v4077 = vpop.permute.xlu0 %4076
        %v4080 = vmul.f32 %v4048, %v4075
        %v4081 = vmul.f32 %v4049, %v4077
        %4084 = vrot.lane.b32.xlu0 %v4080, 102
        %v4085 = vpop.permute.xlu0 %4084
        %4086 = vrot.lane.b32.xlu0 %v4081, 102
        %v4087 = vpop.permute.xlu0 %4086
        %v4090 = vadd.f32 %v4020, %v4085
        %v4091 = vadd.f32 %v4021, %v4087
        %4092 = vrot.lane.b32.xlu0 %v4058, 102
        %v4093 = vpop.permute.xlu0 %4092
        %4094 = vrot.lane.b32.xlu0 %v4059, 102
        %v4095 = vpop.permute.xlu0 %4094
        %v4098 = vadd.f32 %v4028, %v4093
        %v4099 = vadd.f32 %v4029, %v4095
        %v4100 = vmul.f32 %v4058, %v4058
        %v4101 = vmul.f32 %v4059, %v4059
        %4104 = vrot.lane.b32.xlu0 %v4100, 102
        %v4105 = vpop.permute.xlu0 %4104
        %4106 = vrot.lane.b32.xlu0 %v4101, 102
        %v4107 = vpop.permute.xlu0 %4106
        %v4110 = vadd.f32 %v4040, %v4105
        %v4111 = vadd.f32 %v4041, %v4107
        %4112 = vrot.lane.b32.xlu0 %v2242, 27
        %v4113 = vpop.permute.xlu0 %4112
        %4114 = vrot.lane.b32.xlu0 %v2243, 27
        %v4115 = vpop.permute.xlu0 %4114
        %v4118 = vsub.f32 %v1691, %v4113
        %v4119 = vsub.f32 %v1703, %v4115
        %4120 = vrot.lane.b32.xlu0 %v2226, 59
        %v4121 = vpop.permute.xlu0 %4120
        %4122 = vrot.lane.b32.xlu0 %v2241, 59
        %v4123 = vpop.permute.xlu0 %4122
        %v4126 = vmul.f32 %v1691, %v4121
        %v4127 = vmul.f32 %v1703, %v4123
        %v4128 = vmin.f32 %v4126, %v2261
        %v4129 = vmin.f32 %v4127, %v2263
        %v4130 = vmul.f32 %v4118, %v4118
        %v4131 = vmul.f32 %v4119, %v4119
        %4134 = vrot.lane.b32.xlu0 %v4130, 101
        %v4135 = vpop.permute.xlu0 %4134
        %4136 = vrot.lane.b32.xlu0 %v4131, 101
        %v4137 = vpop.permute.xlu0 %4136
        %v4140 = vadd.f32 %v4070, %v4135
        %v4141 = vadd.f32 %v4071, %v4137
        %4144 = vrot.lane.b32.xlu0 %v4128, 96
        %v4145 = vpop.permute.xlu0 %4144
        %4146 = vrot.lane.b32.xlu0 %v4129, 96
        %v4147 = vpop.permute.xlu0 %4146
        %v4150 = vmul.f32 %v4118, %v4145
        %v4151 = vmul.f32 %v4119, %v4147
        %4154 = vrot.lane.b32.xlu0 %v4150, 101
        %v4155 = vpop.permute.xlu0 %4154
        %4156 = vrot.lane.b32.xlu0 %v4151, 101
        %v4157 = vpop.permute.xlu0 %4156
        %v4160 = vadd.f32 %v4090, %v4155
        %v4161 = vadd.f32 %v4091, %v4157
        %4162 = vrot.lane.b32.xlu0 %v4128, 101
        %v4163 = vpop.permute.xlu0 %4162
        %4164 = vrot.lane.b32.xlu0 %v4129, 101
        %v4165 = vpop.permute.xlu0 %4164
        %v4168 = vadd.f32 %v4098, %v4163
        %v4169 = vadd.f32 %v4099, %v4165
        %v4170 = vmul.f32 %v4128, %v4128
        %v4171 = vmul.f32 %v4129, %v4129
        %4174 = vrot.lane.b32.xlu0 %v4170, 101
        %v4175 = vpop.permute.xlu0 %4174
        %4176 = vrot.lane.b32.xlu0 %v4171, 101
        %v4177 = vpop.permute.xlu0 %4176
        %v4180 = vadd.f32 %v4110, %v4175
        %v4181 = vadd.f32 %v4111, %v4177
        %4182 = vrot.lane.b32.xlu0 %v2242, 28
        %v4183 = vpop.permute.xlu0 %4182
        %4184 = vrot.lane.b32.xlu0 %v2243, 28
        %v4185 = vpop.permute.xlu0 %4184
        %v4188 = vsub.f32 %v1691, %v4183
        %v4189 = vsub.f32 %v1703, %v4185
        %4190 = vrot.lane.b32.xlu0 %v2226, 60
        %v4191 = vpop.permute.xlu0 %4190
        %4192 = vrot.lane.b32.xlu0 %v2241, 60
        %v4193 = vpop.permute.xlu0 %4192
        %v4196 = vmul.f32 %v1691, %v4191
        %v4197 = vmul.f32 %v1703, %v4193
        %v4198 = vmin.f32 %v4196, %v2261
        %v4199 = vmin.f32 %v4197, %v2263
        %v4200 = vmul.f32 %v4188, %v4188
        %v4201 = vmul.f32 %v4189, %v4189
        %4204 = vrot.lane.b32.xlu0 %v4200, 100
        %v4205 = vpop.permute.xlu0 %4204
        %4206 = vrot.lane.b32.xlu0 %v4201, 100
        %v4207 = vpop.permute.xlu0 %4206
        %v4210 = vadd.f32 %v4140, %v4205
        %v4211 = vadd.f32 %v4141, %v4207
        %4214 = vrot.lane.b32.xlu0 %v4198, 96
        %v4215 = vpop.permute.xlu0 %4214
        %4216 = vrot.lane.b32.xlu0 %v4199, 96
        %v4217 = vpop.permute.xlu0 %4216
        %v4220 = vmul.f32 %v4188, %v4215
        %v4221 = vmul.f32 %v4189, %v4217
        %4224 = vrot.lane.b32.xlu0 %v4220, 100
        %v4225 = vpop.permute.xlu0 %4224
        %4226 = vrot.lane.b32.xlu0 %v4221, 100
        %v4227 = vpop.permute.xlu0 %4226
        %v4230 = vadd.f32 %v4160, %v4225
        %v4231 = vadd.f32 %v4161, %v4227
        %4232 = vrot.lane.b32.xlu0 %v4198, 100
        %v4233 = vpop.permute.xlu0 %4232
        %4234 = vrot.lane.b32.xlu0 %v4199, 100
        %v4235 = vpop.permute.xlu0 %4234
        %v4238 = vadd.f32 %v4168, %v4233
        %v4239 = vadd.f32 %v4169, %v4235
        %v4240 = vmul.f32 %v4198, %v4198
        %v4241 = vmul.f32 %v4199, %v4199
        %4244 = vrot.lane.b32.xlu0 %v4240, 100
        %v4245 = vpop.permute.xlu0 %4244
        %4246 = vrot.lane.b32.xlu0 %v4241, 100
        %v4247 = vpop.permute.xlu0 %4246
        %v4250 = vadd.f32 %v4180, %v4245
        %v4251 = vadd.f32 %v4181, %v4247
        %4252 = vrot.lane.b32.xlu0 %v2242, 29
        %v4253 = vpop.permute.xlu0 %4252
        %4254 = vrot.lane.b32.xlu0 %v2243, 29
        %v4255 = vpop.permute.xlu0 %4254
        %v4258 = vsub.f32 %v1691, %v4253
        %v4259 = vsub.f32 %v1703, %v4255
        %4260 = vrot.lane.b32.xlu0 %v2226, 61
        %v4261 = vpop.permute.xlu0 %4260
        %4262 = vrot.lane.b32.xlu0 %v2241, 61
        %v4263 = vpop.permute.xlu0 %4262
        %v4266 = vmul.f32 %v1691, %v4261
        %v4267 = vmul.f32 %v1703, %v4263
        %v4268 = vmin.f32 %v4266, %v2261
        %v4269 = vmin.f32 %v4267, %v2263
        %v4270 = vmul.f32 %v4258, %v4258
        %v4271 = vmul.f32 %v4259, %v4259
        %4274 = vrot.lane.b32.xlu0 %v4270, 99
        %v4275 = vpop.permute.xlu0 %4274
        %4276 = vrot.lane.b32.xlu0 %v4271, 99
        %v4277 = vpop.permute.xlu0 %4276
        %v4280 = vadd.f32 %v4210, %v4275
        %v4281 = vadd.f32 %v4211, %v4277
        %4284 = vrot.lane.b32.xlu0 %v4268, 96
        %v4285 = vpop.permute.xlu0 %4284
        %4286 = vrot.lane.b32.xlu0 %v4269, 96
        %v4287 = vpop.permute.xlu0 %4286
        %v4290 = vmul.f32 %v4258, %v4285
        %v4291 = vmul.f32 %v4259, %v4287
        %4294 = vrot.lane.b32.xlu0 %v4290, 99
        %v4295 = vpop.permute.xlu0 %4294
        %4296 = vrot.lane.b32.xlu0 %v4291, 99
        %v4297 = vpop.permute.xlu0 %4296
        %v4300 = vadd.f32 %v4230, %v4295
        %v4301 = vadd.f32 %v4231, %v4297
        %4302 = vrot.lane.b32.xlu0 %v4268, 99
        %v4303 = vpop.permute.xlu0 %4302
        %4304 = vrot.lane.b32.xlu0 %v4269, 99
        %v4305 = vpop.permute.xlu0 %4304
        %v4308 = vadd.f32 %v4238, %v4303
        %v4309 = vadd.f32 %v4239, %v4305
        %v4310 = vmul.f32 %v4268, %v4268
        %v4311 = vmul.f32 %v4269, %v4269
        %4314 = vrot.lane.b32.xlu0 %v4310, 99
        %v4315 = vpop.permute.xlu0 %4314
        %4316 = vrot.lane.b32.xlu0 %v4311, 99
        %v4317 = vpop.permute.xlu0 %4316
        %v4320 = vadd.f32 %v4250, %v4315
        %v4321 = vadd.f32 %v4251, %v4317
        %v4322 = vmul.f32 %v4308, 0.033333335
        %v4323 = vmul.f32 %v4309, 0.033333335
        %v4324 = vmul.f32 %v4322, 30.0
        %v4325 = vmul.f32 %v4323, 30.0
        %v4326 = vmul.f32 %v4324, %v4322
        %v4327 = vmul.f32 %v4325, %v4323
        %v4328 = vsub.f32 %v4320, %v4326
        %v4329 = vsub.f32 %v4321, %v4327
        %v4330 = vmax.f32 %v4328, 0.0
        %v4331 = vmax.f32 %v4329, 0.0
        %v4332 = vrsqrt.pop %v4280
        %v4333 = vmul.f32 %v4332, %v4280
        %v4334 = vmul.f32 %v4333, %v4332
        %v4335 = vmul.f32 0.5, %v4334
        %v4336 = vsub.f32 1.5, %v4335
        %v4337 = vmul.f32 %v4332, %v4336
        %v4338 = vmul.f32 %v4280, %v4337
        %vm4339 = vcmp.eq.f32.partialorder %v4280, inf
        %v4340 = vsel %vm4339, %v4280, %v4338
        %vm4341 = vcmp.eq.f32.partialorder %v4280, 0.0
        %v4342 = vand.u32 %v4280, 2147483648
        %v4343 = vsel %vm4341, %v4342, %v4340
        %v4344 = vrsqrt.pop %v4281
        %v4345 = vmul.f32 %v4344, %v4281
        %v4346 = vmul.f32 %v4345, %v4344
        %v4347 = vmul.f32 0.5, %v4346
        %v4348 = vsub.f32 1.5, %v4347
        %v4349 = vmul.f32 %v4344, %v4348
        %v4350 = vmul.f32 %v4281, %v4349
        %vm4351 = vcmp.eq.f32.partialorder %v4281, inf
        %v4352 = vsel %vm4351, %v4281, %v4350
        %vm4353 = vcmp.eq.f32.partialorder %v4281, 0.0
        %v4354 = vand.u32 %v4281, 2147483648
        %v4355 = vsel %vm4353, %v4354, %v4352
        %v4356 = vadd.f32 %v4343, 1e-08
        %v4357 = vadd.f32 %v4355, 1e-08
        %v4358 = vrsqrt.pop %v4330
        %v4359 = vmul.f32 %v4358, %v4330
        %v4360 = vmul.f32 %v4359, %v4358
        %v4361 = vmul.f32 0.5, %v4360
        %v4362 = vsub.f32 1.5, %v4361
        %v4363 = vmul.f32 %v4358, %v4362
        %v4364 = vmul.f32 %v4330, %v4363
        %vm4365 = vcmp.eq.f32.partialorder %v4330, inf
        %v4366 = vsel %vm4365, %v4330, %v4364
        %vm4367 = vcmp.eq.f32.partialorder %v4330, 0.0
        %v4368 = vand.u32 %v4330, 2147483648
        %v4369 = vsel %vm4367, %v4368, %v4366
        %v4370 = vrsqrt.pop %v4331
        %v4371 = vmul.f32 %v4370, %v4331
        %v4372 = vmul.f32 %v4371, %v4370
        %v4373 = vmul.f32 0.5, %v4372
        %v4374 = vsub.f32 1.5, %v4373
        %v4375 = vmul.f32 %v4370, %v4374
        %v4376 = vmul.f32 %v4331, %v4375
        %vm4377 = vcmp.eq.f32.partialorder %v4331, inf
        %v4378 = vsel %vm4377, %v4331, %v4376
        %vm4379 = vcmp.eq.f32.partialorder %v4331, 0.0
        %v4380 = vand.u32 %v4331, 2147483648
        %v4381 = vsel %vm4379, %v4380, %v4378
        %v4382 = vadd.f32 %v4369, 1e-08
        %v4383 = vadd.f32 %v4381, 1e-08
        %4386 = vrot.lane.b32.xlu0 %v4382, 96
        %v4387 = vpop.permute.xlu0 %4386
        %4388 = vrot.lane.b32.xlu0 %v4383, 96
        %v4389 = vpop.permute.xlu0 %4388
        %v4392 = vmul.f32 %v4356, %v4387
        %v4393 = vmul.f32 %v4357, %v4389
        %v4394 = vrcp.pop %v4392
        %v4395 = vmul.f32 %v4392, %v4394
        %v4396 = vsub.f32 1.0, %v4395
        %v4397 = vmul.f32 %v4394, %v4396
        %v4398 = vadd.f32 %v4394, %v4397
        %vm4399 = vweird.f32 %v4392
        %vm4400 = vweird.f32 %v4394
        %vm4401 = vmor %vm4399, %vm4400
        %v4402 = vsel %vm4401, %v4394, %v4398
        %v4403 = vand.u32 2147483647, %v4392
        %vm4404 = vcmp.eq.f32.partialorder %v4403, 8.507059e+37
        %v4405 = vand.u32 %v4392, 2147483648
        %v4406 = vor.u32 1.1754944e-38, %v4405
        %v4407 = vsel %vm4404, %v4406, %v4402
        %v4408 = vmul.f32 %v4300, %v4407
        %v4409 = vrcp.pop %v4393
        %v4410 = vmul.f32 %v4393, %v4409
        %v4411 = vsub.f32 1.0, %v4410
        %v4412 = vmul.f32 %v4409, %v4411
        %v4413 = vadd.f32 %v4409, %v4412
        %vm4414 = vweird.f32 %v4393
        %vm4415 = vweird.f32 %v4409
        %vm4416 = vmor %vm4414, %vm4415
        %v4417 = vsel %vm4416, %v4409, %v4413
        %v4418 = vand.u32 2147483647, %v4393
        %vm4419 = vcmp.eq.f32.partialorder %v4418, 8.507059e+37
        %v4420 = vand.u32 %v4393, 2147483648
        %v4421 = vor.u32 1.1754944e-38, %v4420
        %v4422 = vsel %vm4419, %v4421, %v4417
        %v4423 = vmul.f32 %v4301, %v4422
        %v4424 = vlaneseq
        %v4425 = vshrl.u32 %v4424, 7
        %v4426 = vadd.s32 %v4425, 8
        %vm4427 = vcmp.lt.s32.totalorder %v4425, 15
        %vm4428 = vcmp.lt.s32.totalorder %v4426, 15
        %v4429 = vsel %vm4427, %v4408, 0.0
        %v4430 = vsel %vm4428, %v4423, 0.0
        %vm4431 = vcmask 23552
        %v4432 = vsel %vm4431, %v4429, 0.0
        %v4433 = vsel %vm4431, %v4430, 0.0
        %v4434 = vadd.f32 %v4432, %v4433
        %4435 = vadd.xlane.f32.xlu0 %v4434
        %v4436 = vpop.xlane.xlu0 %4435
        %v4437 = vrot.slane %v4436, 4
        %v4438 = vadd.f32 %v4436, %v4437
        %v4439 = vrot.slane %v4438, 2
        %v4440 = vadd.f32 %v4438, %v4439
        %v4441 = vrot.slane %v4440, 1
        %v4442 = vadd.f32 %v4440, %v4441
        %s4443 = vtos %v4442
        %s4444 = sadd.f32 %s4443, 0.0
        %s4445 = smul.f32 %s4444, 0.022222223
        %s4446 = ssub.f32 0.0, %s4445
        %v4447 = vstv %s4446
        %4448 = vst [vmem:[%s222] sm:$0xff] %v4447
        %s4449 = sand.u32 %s121, 1
        %s4450 = scalar_lea.sflag [#allocation4], %s4449
        %s4451 = sand.u32 %s121, 1
        %s4452 = smul.addr %s4451, 8
        %s4453 = scalar_lea.vmem [#allocation5], %s4452
        // Predicated region
        $region41: #{tpu_custom_call.1} parent=35 // pred_check
          %p4454 = pneg %p131
        $region42: #{tpu_custom_call.1} parent=35 // pred_check_branch
          %4456 = sbr.rel (%p4454) target = $region44
        $region43: #{tpu_custom_call.1} parent=35 // pred_region
          %4458 = vsyncadd %s4450, 0
          %s4459 = smul.addr %s19, 8
          %s4460 = scalar_lea.hbm %s4, %s4459
          %s4462 = sshll.u32 %s4453, 4
          %s4463 = int_to_ptr.vmem [resolvable:$true] %s4462
          %s4464 = sshll.u32 %s4460, 4
          %s4465 = int_to_ptr.hbm [resolvable:$true] %s4464
          %4467 = dma.vmem_to_hbm [thread:$0]  %s4463, 128, %s4465, %s4450
        $region44: #{tpu_custom_call.1} parent=35 // pred_fallthru
          _
      $region36: #{tpu_custom_call.1} parent=5 // pred_fallthru
        _
      %p4468 = scmp.le.s32.totalorder 2, %s14
      // Predicated region
      $region45: #{tpu_custom_call.1} parent=5 // pred_check
        %p4469 = pneg %p4468
      $region46: #{tpu_custom_call.1} parent=5 // pred_check_branch
        %4471 = sbr.rel (%p4469) target = $region48
      $region47: #{tpu_custom_call.1} parent=5 // pred_region
        %s4472 = ssub.s32 %s14, 2
        // Predicated region
        $region49: #{tpu_custom_call.1} parent=47 // pred_check
          %p4473 = pneg %p137
        $region50: #{tpu_custom_call.1} parent=47 // pred_check_branch
          %4475 = sbr.rel (%p4473) target = $region52
        $region51: #{tpu_custom_call.1} parent=47 // pred_region
          %s4476 = sand.u32 %s122, 1
          %s4477 = scalar_lea.sflag [#allocation4], %s4476
          %s4478 = sand.u32 %s122, 1
          %s4479 = smul.addr %s4478, 8
          %s4480 = scalar_lea.vmem [#allocation5], %s4479
          %4482 = dma.done %s4477, 128
        $region52: #{tpu_custom_call.1} parent=47 // pred_fallthru
          _
      $region48: #{tpu_custom_call.1} parent=5 // pred_fallthru
        _
    $region6: #{tpu_custom_call.1} parent=1 // loop_footer
      %s18 = sadd.s32 1, %s14
    $region7: #{tpu_custom_call.1} parent=1 // loop_footer_branch
      %13 = sbr.rel target = $region3
    $region8: #{tpu_custom_call.1} parent=1 // loop_exit
      _
    %4483 = vsyncpa [#allocation3], 1
    %s4484 = scalar_lea.sflag [#allocation3], 1
    %4485 = vsyncpa %s4484, 1
    %4486 = vsyncpa [#allocation4], 1
    %s4487 = scalar_lea.sflag [#allocation4], 1
    %4488 = vsyncpa %s4487, 1

</llo_original>
